<compile_context>
chip_gen: v7x
topology: tpu7x:2x2x1
jax: 0.10.0
libtpu: 0.0.40
codegen_flags: <defaults>
</compile_context>

<pallas_src>
import jax
import jax.numpy as jnp
from jax import lax
from jax.experimental import pallas as pl
from jax.experimental.pallas import tpu as pltpu


def _round_up(a, m):
    return ((a + m - 1) // m) * m


# ----------------------------------------------------------------------------
# Pallas kernel: one batch tile (TB lanes) per grid step.  Everything after
# the first (transposed-RHS) matmul is a (feature_rows, TB) matrix; weights
# are the LHS of each matmul.
# ----------------------------------------------------------------------------
def sno_kernel(x_ref, w1f_ref, w2b_ref, wp1f_ref, wp2b_ref, wsm_ref, ws2_ref,
               bias_ref, o_ref):
    f32 = jnp.float32
    bf = w1f_ref.dtype                     # matmul operand dtype (bf16)

    # Static row counts and packed-bias offsets, derived from block shapes.
    n_h = w1f_ref.shape[0]                 # C * Hp
    n_c2 = w2b_ref.shape[0]                # C * M
    n_ph = wp1f_ref.shape[0]               # D * L
    n_pr = wp2b_ref.shape[0]               # Tp * L
    n_sh = wsm_ref.shape[0]                # D
    n_sc = ws2_ref.shape[0]                # Ts
    o_h = 0
    o_c2 = o_h + n_h
    o_ph = o_c2 + n_c2
    o_pr = o_ph + n_ph
    o_sh = o_pr + n_pr
    o_sc = o_sh + n_sh

    xb = x_ref[...].astype(bf)                                       # (TB, C*L)

    # FFTLayer fused with first spectral-MLP layer.  The batch transpose is
    # folded into the matmul (contract both operands on their last dim), so no
    # wrapper-side HBM transpose and no separate in-kernel relayout pass.
    h = jnp.maximum(
        lax.dot_general(w1f_ref[...], xb, (((1,), (1,)), ((), ())),
                        preferred_element_type=f32)
        + bias_ref[pl.ds(o_h, n_h), :], 0.0)                         # (C*Hp, TB)

    # Second spectral-MLP layer -> spectral coefficients.
    c2 = (jnp.dot(w2b_ref[...], h.astype(bf), preferred_element_type=f32)
          + bias_ref[pl.ds(o_c2, n_c2), :])                          # (C*M, TB)
    c2b = c2.astype(bf)

    # InverseFFTLayer fused into the per-level profile head.
    ph = jnp.maximum(
        jnp.dot(wp1f_ref[...], c2b, preferred_element_type=f32)
        + bias_ref[pl.ds(o_ph, n_ph), :], 0.0)                       # (D*L, TB)
    prof = (jnp.dot(wp2b_ref[...], ph.astype(bf), preferred_element_type=f32)
            + bias_ref[pl.ds(o_pr, n_pr), :])                        # (Tp*L, TB)

    # Scalar head: level-mean + first linear pre-folded into Wsm = Ws1 @ Ms.
    sh = jnp.maximum(
        jnp.dot(wsm_ref[...], c2b, preferred_element_type=f32)
        + bias_ref[pl.ds(o_sh, n_sh), :], 0.0)                       # (D, TB)
    sc = (jnp.dot(ws2_ref[...], sh.astype(bf), preferred_element_type=f32)
          + bias_ref[pl.ds(o_sc, n_sc), :])                          # (Ts, TB)

    # Fused, lane-dense output slab: rows = [profiles (t*L+l) ; scalars].
    o_ref[pl.ds(0, n_pr), :] = prof.astype(o_ref.dtype)
    o_ref[pl.ds(n_pr, n_sc), :] = sc.astype(o_ref.dtype)


def sno_forward_pallas(x_feat, weights, bias, *, tb=None):
    """x_feat: (B, C, L) f32.  Returns (B, Tp*L + Ts) f32."""
    B, C, L = x_feat.shape
    CL = C * L
    out_rows = weights[3].shape[0] + weights[5].shape[0]   # Tp*L + Ts

    if tb is None:
        # Fill MXU lanes (>=256 helps v6e/v7x), amortize per-step overhead,
        # but keep >= 2 grid steps whenever B > 128 so both v7x TCs get work.
        tb = max(128, min(512, _round_up(pl.cdiv(B, 2), 128)))
    n_tiles = pl.cdiv(B, tb)
    B_pad = n_tiles * tb

    # No wrapper-side transpose/cast of x: the kernel reads the natural layout.
    x2 = x_feat.reshape(B, CL)
    if B_pad != B:
        x2 = jnp.pad(x2, ((0, B_pad - B), (0, 0)))

    def const2d(a):
        return pl.BlockSpec(a.shape, lambda i: (0, 0))

    in_specs = ([pl.BlockSpec((tb, CL), lambda i: (i, 0))]
                + [const2d(w) for w in weights]
                + [const2d(bias)])

    cp_kwargs = dict(dimension_semantics=("parallel",))
    if tb >= 1024:
        # Large tiles: raise scoped VMEM explicitly (keep headroom under v7x's
        # 64 MiB physical VMEM).
        cp_kwargs["vmem_limit_bytes"] = 48 * 1024 * 1024

    out = pl.pallas_call(
        sno_kernel,
        grid=(n_tiles,),
        in_specs=in_specs,
        out_specs=pl.BlockSpec((out_rows, tb), lambda i: (0, i)),
        out_shape=jax.ShapeDtypeStruct((out_rows, B_pad), jnp.float32),
        compiler_params=pltpu.CompilerParams(**cp_kwargs),
    )(x2, *weights, bias)

    # Final transpose of the small (out_rows, B) slab; cheap compared with the
    # removed input transpose (35 rows vs 112 rows).
    return out[:, :B].T                                    # (B, Tp*L + Ts)


# ----------------------------------------------------------------------------
# Glue (plain JAX): InputLayer, DCT basis, parameter init, weight packing and
# pure-JAX references.
# ----------------------------------------------------------------------------
def input_layer(x, P, S, L):
    B = x.shape[0]
    prof = x[:, :P * L].reshape(B, P, L)
    scal = x[:, P * L:]                                    # (B, S)
    scal_b = jnp.broadcast_to(scal[:, :, None], (B, S, L))
    return jnp.concatenate([prof, scal_b], axis=1)         # (B, P+S, L)


def make_dct_basis(L, M):
    l = jnp.arange(L, dtype=jnp.float32)
    m = jnp.arange(M, dtype=jnp.float32)
    F = jnp.cos(jnp.pi * (l[:, None] + 0.5) * m[None, :] / L)   # (L, M) DCT-II
    scale = jnp.where(m == 0, 1.0 / L, 2.0 / L)                 # (M,)
    Finv = (F * scale[None, :]).T                               # (M, L) DCT-III
    return F, Finv


def init_params(key, C, L, M, H, D, Tp, Ts):
    ks = jax.random.split(key, 12)

    def lin(k, fan_in, shape):
        return jax.random.normal(k, shape, jnp.float32) / jnp.sqrt(fan_in)

    F, Finv = make_dct_basis(L, M)
    W1 = lin(ks[0], M, (M, H));    b1 = 0.01 * lin(ks[1], 1.0, (H,))
    W2 = lin(ks[2], H, (H, M));    b2 = 0.01 * lin(ks[3], 1.0, (M,))
    Wp1 = lin(ks[4], C, (D, C));   bp1 = 0.01 * lin(ks[5], 1.0, (D,))
    Wp2 = lin(ks[6], D, (Tp, D));  bp2 = 0.01 * lin(ks[7], 1.0, (Tp,))
    Ws1 = lin(ks[8], C, (D, C));   bs1 = 0.01 * lin(ks[9], 1.0, (D,))
    Ws2 = lin(ks[10], D, (Ts, D)); bs2 = 0.01 * lin(ks[11], 1.0, (Ts,))
    return (F, Finv, W1, b1, W2, b2, Wp1, bp1, Wp2, bp2, Ws1, bs1, Ws2, bs2)


def pack_params(params, C, L, M, H, Hp, D, Tp, Ts, matmul_dtype):
    """Build block-diagonal fused weights (batch-in-lanes layout) + packed bias."""
    (F, Finv, W1, b1, W2, b2, Wp1, bp1, Wp2, bp2, Ws1, bs1, Ws2, bs2) = params
    f32 = jnp.float32
    # Pad hidden dim H -> Hp (128) with zeros (exact: zero weights and bias).
    W1p = jnp.zeros((M, Hp), f32).at[:, :H].set(W1)
    b1p = jnp.zeros((Hp,), f32).at[:H].set(b1)
    W2p = jnp.zeros((Hp, M), f32).at[:H, :].set(W2)

    eyeC = jnp.eye(C, dtype=f32)
    eyeL = jnp.eye(L, dtype=f32)
    W1F = jnp.kron(eyeC, (F @ W1p).T)                       # (C*Hp, C*L)
    W2B = jnp.kron(eyeC, W2p.T)                             # (C*M , C*Hp)
    Wp1F = jnp.kron(Wp1, eyeL) @ jnp.kron(eyeC, Finv.T)     # (D*L , C*M)
    Wp2B = jnp.kron(Wp2, eyeL)                              # (Tp*L, D*L)
    Ms = jnp.kron(eyeC, jnp.mean(Finv, axis=1)[None, :])    # (C   , C*M)
    Wsm = Ws1 @ Ms                                          # (D   , C*M) exact fold

    weights = tuple(w.astype(matmul_dtype)
                    for w in (W1F, W2B, Wp1F, Wp2B, Wsm, Ws2))
    bias = jnp.concatenate(
        [jnp.tile(b1p, C), jnp.tile(b2, C), jnp.repeat(bp1, L),
         jnp.repeat(bp2, L), bs1, bs2]).astype(f32)[:, None]        # (R, 1)
    return weights, bias


def sno_forward_packed_ref(xT, weights, bias):
    """Plain-JAX replay of the kernel math (same packing / same dtypes)."""
    W1F, W2B, Wp1F, Wp2B, Wsm, Ws2 = weights
    bf = W1F.dtype
    f32 = jnp.float32
    sizes = [W1F.shape[0], W2B.shape[0], Wp1F.shape[0], Wp2B.shape[0],
             Wsm.shape[0], Ws2.shape[0]]
    offs, o = [], 0
    for s in sizes:
        offs.append(o)
        o += s
    b1t, b2t, bp1t, bp2t, bs1c, bs2c = [
        bias[off:off + n] for off, n in zip(offs, sizes)]

    def mm(a, b):
        return jnp.dot(a, b.astype(bf), preferred_element_type=f32)

    h = jax.nn.relu(mm(W1F, xT) + b1t)
    c2 = mm(W2B, h) + b2t
    ph = jax.nn.relu(mm(Wp1F, c2) + bp1t)
    prof = mm(Wp2B, ph) + bp2t
    sh = jax.nn.relu(mm(Wsm, c2) + bs1c)
    sc = mm(Ws2, sh) + bs2c
    return jnp.concatenate([prof, sc], axis=0)              # (Tp*L + Ts, B)


def sno_forward_ref(x_feat, params):
    """Structural f32 reference following the original module layer-by-layer."""
    (F, Finv, W1, b1, W2, b2, Wp1, bp1, Wp2, bp2, Ws1, bs1, Ws2, bs2) = params
    coeff = jnp.einsum('bcl,lm->bcm', x_feat, F)
    h = jax.nn.relu(jnp.einsum('bcm,mh->bch', coeff, W1) + b1)
    c2 = jnp.einsum('bch,hm->bcm', h, W2) + b2
    recon = jnp.einsum('bcm,ml->bcl', c2, Finv)
    ph = jax.nn.relu(jnp.einsum('dc,bcl->bdl', Wp1, recon) + bp1[None, :, None])
    prof = jnp.einsum('td,bdl->btl', Wp2, ph) + bp2[None, :, None]
    mean = recon.mean(axis=-1)                               # (B, C)
    sh = jax.nn.relu(mean @ Ws1.T + bs1)
    sc = sh @ Ws2.T + bs2
    B = x_feat.shape[0]
    return jnp.concatenate([prof.reshape(B, -1), sc], axis=-1)


if __name__ == "__main__":
    # Module hyper-parameters (small, consistent with the forward pass).
    input_profile_num, input_scalar_num = 4, 3
    vertical_level_num = 16
    target_profile_num, target_scalar_num = 2, 3
    num_modes, out_network_dim = 8, 32
    spectral_hidden = 100        # MLP(num_modes, num_modes, [100])
    hidden_padded = 128          # H padded to the 128-lane width
    B = 200                      # exercises 2 parallel grid steps + tail padding
    C = input_profile_num + input_scalar_num
    L = vertical_level_num

    key = jax.random.PRNGKey(0)
    kx, kp = jax.random.split(key)
    x = jax.random.normal(
        kx, (B, input_profile_num * L + input_scalar_num), jnp.float32)
    params = init_params(kp, C, L, num_modes, spectral_hidden,
                         out_network_dim, target_profile_num, target_scalar_num)

    x_feat = input_layer(x, input_profile_num, input_scalar_num, L)
    xT = x_feat.reshape(B, C * L).T                          # reference only

    # Structural f32 reference (original module math, unfused, H=100).
    out_ref = sno_forward_ref(x_feat, params)

    # Check 1: the fused / padded block-weight packing (incl. Wsm = Ws1 @ Ms
    # fold) is numerically exact in f32.
    w32, b32 = pack_params(params, C, L, num_modes, spectral_hidden,
                           hidden_padded, out_network_dim,
                           target_profile_num, target_scalar_num, jnp.float32)
    out_pack32 = sno_forward_packed_ref(xT, w32, b32).T
    assert out_pack32.shape == out_ref.shape
    assert jnp.allclose(out_pack32, out_ref, atol=1e-3, rtol=1e-3), \
        float(jnp.max(jnp.abs(out_pack32 - out_ref)))

    # Check 2: the Pallas kernel (bf16 matmul operands, f32 accumulation)
    # matches the same math replayed in plain JAX at the same precision.
    wbf, bbf = pack_params(params, C, L, num_modes, spectral_hidden,
                           hidden_padded, out_network_dim,
                           target_profile_num, target_scalar_num, jnp.bfloat16)
    out_pallas = sno_forward_pallas(x_feat, wbf, bbf)        # auto tb (>=2 tiles)
    out_pallas = jax.block_until_ready(out_pallas)
    out_match = sno_forward_packed_ref(xT, wbf, bbf).T
    assert out_pallas.shape == (B, target_profile_num * L + target_scalar_num)
    assert jnp.allclose(out_pallas, out_match, atol=1e-3, rtol=1e-3), \
        float(jnp.max(jnp.abs(out_pallas - out_match)))

    print("KERNEL_OK")
</pallas_src>

<mosaic_0001>
module attributes {stable_mosaic.version = 11 : i64} {
  func.func @sno_kernel(%arg0: i32, %arg1: memref<128x112xf32, #tpu.memory_space<vmem>>, %arg2: memref<896x112xbf16, #tpu.memory_space<vmem>>, %arg3: memref<56x896xbf16, #tpu.memory_space<vmem>>, %arg4: memref<512x56xbf16, #tpu.memory_space<vmem>>, %arg5: memref<32x512xbf16, #tpu.memory_space<vmem>>, %arg6: memref<32x56xbf16, #tpu.memory_space<vmem>>, %arg7: memref<3x32xbf16, #tpu.memory_space<vmem>>, %arg8: memref<1531x1xf32, #tpu.memory_space<vmem>>, %arg9: memref<35x128xf32, #tpu.memory_space<vmem>>) attributes {dimension_semantics = [#tpu.dimension_semantics<parallel>], iteration_bounds = array<i64: 2>, scalar_prefetch = 0 : i64, scratch_operands = 0 : i64, tpu.core_type = #tpu.core_type<tc>, window_params = [{transform_indices = @transform_0, window_bounds = array<i64: 128, 112>}, {pipeline_mode = #tpu.pipeline_mode<synchronous>, transform_indices = @transform_1, window_bounds = array<i64: 896, 112>}, {pipeline_mode = #tpu.pipeline_mode<synchronous>, transform_indices = @transform_2, window_bounds = array<i64: 56, 896>}, {pipeline_mode = #tpu.pipeline_mode<synchronous>, transform_indices = @transform_3, window_bounds = array<i64: 512, 56>}, {pipeline_mode = #tpu.pipeline_mode<synchronous>, transform_indices = @transform_4, window_bounds = array<i64: 32, 512>}, {pipeline_mode = #tpu.pipeline_mode<synchronous>, transform_indices = @transform_5, window_bounds = array<i64: 32, 56>}, {pipeline_mode = #tpu.pipeline_mode<synchronous>, transform_indices = @transform_6, window_bounds = array<i64: 3, 32>}, {pipeline_mode = #tpu.pipeline_mode<synchronous>, transform_indices = @transform_7, window_bounds = array<i64: 1531, 1>}, {transform_indices = @transform_8, window_bounds = array<i64: 35, 128>}]} {
    %c0 = arith.constant 0 : index
    %c0_0 = arith.constant 0 : index
    %0 = vector.load %arg1[%c0, %c0_0] : memref<128x112xf32, #tpu.memory_space<vmem>>, vector<128x112xf32>
    %1 = arith.truncf %0 : vector<128x112xf32> to vector<128x112xbf16>
    %c0_1 = arith.constant 0 : index
    %c0_2 = arith.constant 0 : index
    %2 = vector.load %arg2[%c0_1, %c0_2] : memref<896x112xbf16, #tpu.memory_space<vmem>>, vector<896x112xbf16>
    %cst = arith.constant dense<0.000000e+00> : vector<896x128xf32>
    %3 = tpu.matmul %2, %1, %cst {dimension_numbers = #tpu.dot_dimension_numbers<[1], [1], [0], [0], [0, 0, 1, 0], [], []>} : vector<896x112xbf16>, vector<128x112xbf16>, vector<896x128xf32> -> vector<896x128xf32>
    %c0_3 = arith.constant 0 : index
    %c0_4 = arith.constant 0 : index
    %4 = vector.load %arg8[%c0_3, %c0_4] : memref<1531x1xf32, #tpu.memory_space<vmem>>, vector<896x1xf32>
    %5 = vector.broadcast %4 : vector<896x1xf32> to vector<896x128xf32>
    %6 = arith.addf %3, %5 : vector<896x128xf32>
    %cst_5 = arith.constant 0.000000e+00 : f32
    %7 = vector.broadcast %cst_5 : f32 to vector<896x128xf32>
    %8 = arith.maximumf %6, %7 : vector<896x128xf32>
    %c0_6 = arith.constant 0 : index
    %c0_7 = arith.constant 0 : index
    %9 = vector.load %arg3[%c0_6, %c0_7] : memref<56x896xbf16, #tpu.memory_space<vmem>>, vector<56x896xbf16>
    %10 = arith.truncf %8 : vector<896x128xf32> to vector<896x128xbf16>
    %cst_8 = arith.constant dense<0.000000e+00> : vector<56x128xf32>
    %11 = tpu.matmul %9, %10, %cst_8 {dimension_numbers = #tpu.dot_dimension_numbers<[1], [0], [0], [1], [0, 0, 1, 1], [], []>} : vector<56x896xbf16>, vector<896x128xbf16>, vector<56x128xf32> -> vector<56x128xf32>
    %c896 = arith.constant 896 : index
    %c0_9 = arith.constant 0 : index
    %12 = vector.load %arg8[%c896, %c0_9] : memref<1531x1xf32, #tpu.memory_space<vmem>>, vector<56x1xf32>
    %13 = vector.broadcast %12 : vector<56x1xf32> to vector<56x128xf32>
    %14 = arith.addf %11, %13 : vector<56x128xf32>
    %15 = arith.truncf %14 : vector<56x128xf32> to vector<56x128xbf16>
    %c0_10 = arith.constant 0 : index
    %c0_11 = arith.constant 0 : index
    %16 = vector.load %arg4[%c0_10, %c0_11] : memref<512x56xbf16, #tpu.memory_space<vmem>>, vector<512x56xbf16>
    %cst_12 = arith.constant dense<0.000000e+00> : vector<512x128xf32>
    %17 = tpu.matmul %16, %15, %cst_12 {dimension_numbers = #tpu.dot_dimension_numbers<[1], [0], [0], [1], [0, 0, 1, 1], [], []>} : vector<512x56xbf16>, vector<56x128xbf16>, vector<512x128xf32> -> vector<512x128xf32>
    %c952 = arith.constant 952 : index
    %c0_13 = arith.constant 0 : index
    %18 = vector.load %arg8[%c952, %c0_13] : memref<1531x1xf32, #tpu.memory_space<vmem>>, vector<512x1xf32>
    %19 = vector.broadcast %18 : vector<512x1xf32> to vector<512x128xf32>
    %20 = arith.addf %17, %19 : vector<512x128xf32>
    %cst_14 = arith.constant 0.000000e+00 : f32
    %21 = vector.broadcast %cst_14 : f32 to vector<512x128xf32>
    %22 = arith.maximumf %20, %21 : vector<512x128xf32>
    %c0_15 = arith.constant 0 : index
    %c0_16 = arith.constant 0 : index
    %23 = vector.load %arg5[%c0_15, %c0_16] : memref<32x512xbf16, #tpu.memory_space<vmem>>, vector<32x512xbf16>
    %24 = arith.truncf %22 : vector<512x128xf32> to vector<512x128xbf16>
    %cst_17 = arith.constant dense<0.000000e+00> : vector<32x128xf32>
    %25 = tpu.matmul %23, %24, %cst_17 {dimension_numbers = #tpu.dot_dimension_numbers<[1], [0], [0], [1], [0, 0, 1, 1], [], []>} : vector<32x512xbf16>, vector<512x128xbf16>, vector<32x128xf32> -> vector<32x128xf32>
    %c1464 = arith.constant 1464 : index
    %c0_18 = arith.constant 0 : index
    %26 = vector.load %arg8[%c1464, %c0_18] : memref<1531x1xf32, #tpu.memory_space<vmem>>, vector<32x1xf32>
    %27 = vector.broadcast %26 : vector<32x1xf32> to vector<32x128xf32>
    %28 = arith.addf %25, %27 : vector<32x128xf32>
    %c0_19 = arith.constant 0 : index
    %c0_20 = arith.constant 0 : index
    %29 = vector.load %arg6[%c0_19, %c0_20] : memref<32x56xbf16, #tpu.memory_space<vmem>>, vector<32x56xbf16>
    %cst_21 = arith.constant dense<0.000000e+00> : vector<32x128xf32>
    %30 = tpu.matmul %29, %15, %cst_21 {dimension_numbers = #tpu.dot_dimension_numbers<[1], [0], [0], [1], [0, 0, 1, 1], [], []>} : vector<32x56xbf16>, vector<56x128xbf16>, vector<32x128xf32> -> vector<32x128xf32>
    %c1496 = arith.constant 1496 : index
    %c0_22 = arith.constant 0 : index
    %31 = vector.load %arg8[%c1496, %c0_22] : memref<1531x1xf32, #tpu.memory_space<vmem>>, vector<32x1xf32>
    %32 = vector.broadcast %31 : vector<32x1xf32> to vector<32x128xf32>
    %33 = arith.addf %30, %32 : vector<32x128xf32>
    %cst_23 = arith.constant 0.000000e+00 : f32
    %34 = vector.broadcast %cst_23 : f32 to vector<32x128xf32>
    %35 = arith.maximumf %33, %34 : vector<32x128xf32>
    %c0_24 = arith.constant 0 : index
    %c0_25 = arith.constant 0 : index
    %36 = vector.load %arg7[%c0_24, %c0_25] : memref<3x32xbf16, #tpu.memory_space<vmem>>, vector<3x32xbf16>
    %37 = arith.truncf %35 : vector<32x128xf32> to vector<32x128xbf16>
    %cst_26 = arith.constant dense<0.000000e+00> : vector<3x128xf32>
    %38 = tpu.matmul %36, %37, %cst_26 {dimension_numbers = #tpu.dot_dimension_numbers<[1], [0], [0], [1], [0, 0, 1, 1], [], []>} : vector<3x32xbf16>, vector<32x128xbf16>, vector<3x128xf32> -> vector<3x128xf32>
    %c1528 = arith.constant 1528 : index
    %c0_27 = arith.constant 0 : index
    %39 = vector.load %arg8[%c1528, %c0_27] : memref<1531x1xf32, #tpu.memory_space<vmem>>, vector<3x1xf32>
    %40 = vector.broadcast %39 : vector<3x1xf32> to vector<3x128xf32>
    %41 = arith.addf %38, %40 : vector<3x128xf32>
    %c0_28 = arith.constant 0 : index
    %c0_29 = arith.constant 0 : index
    %42 = vector.load %arg9[%c0_28, %c0_29] : memref<35x128xf32, #tpu.memory_space<vmem>>, vector<32x128xf32>
    tpu.vector_store %arg9[%c0_28, %c0_29], %28 {strides = array<i32>} : memref<35x128xf32, #tpu.memory_space<vmem>>, vector<32x128xf32>,
    %c32 = arith.constant 32 : index
    %c0_30 = arith.constant 0 : index
    %43 = vector.load %arg9[%c32, %c0_30] : memref<35x128xf32, #tpu.memory_space<vmem>>, vector<3x128xf32>
    tpu.vector_store %arg9[%c32, %c0_30], %41 {strides = array<i32>} : memref<35x128xf32, #tpu.memory_space<vmem>>, vector<3x128xf32>,
    return
  }
  func.func @transform_0(%arg0: i32) -> (i32, i32) {
    %c0_i32 = arith.constant 0 : i32
    %c0_i32_0 = arith.constant 0 : i32
    return %arg0, %c0_i32 : i32, i32
  }
  func.func @transform_1(%arg0: i32) -> (i32, i32) {
    %c0_i32 = arith.constant 0 : i32
    %c0_i32_0 = arith.constant 0 : i32
    %c0_i32_1 = arith.constant 0 : i32
    return %c0_i32, %c0_i32_0 : i32, i32
  }
  func.func @transform_2(%arg0: i32) -> (i32, i32) {
    %c0_i32 = arith.constant 0 : i32
    %c0_i32_0 = arith.constant 0 : i32
    %c0_i32_1 = arith.constant 0 : i32
    return %c0_i32, %c0_i32_0 : i32, i32
  }
  func.func @transform_3(%arg0: i32) -> (i32, i32) {
    %c0_i32 = arith.constant 0 : i32
    %c0_i32_0 = arith.constant 0 : i32
    %c0_i32_1 = arith.constant 0 : i32
    return %c0_i32, %c0_i32_0 : i32, i32
  }
  func.func @transform_4(%arg0: i32) -> (i32, i32) {
    %c0_i32 = arith.constant 0 : i32
    %c0_i32_0 = arith.constant 0 : i32
    %c0_i32_1 = arith.constant 0 : i32
    return %c0_i32, %c0_i32_0 : i32, i32
  }
  func.func @transform_5(%arg0: i32) -> (i32, i32) {
    %c0_i32 = arith.constant 0 : i32
    %c0_i32_0 = arith.constant 0 : i32
    %c0_i32_1 = arith.constant 0 : i32
    return %c0_i32, %c0_i32_0 : i32, i32
  }
  func.func @transform_6(%arg0: i32) -> (i32, i32) {
    %c0_i32 = arith.constant 0 : i32
    %c0_i32_0 = arith.constant 0 : i32
    %c0_i32_1 = arith.constant 0 : i32
    return %c0_i32, %c0_i32_0 : i32, i32
  }
  func.func @transform_7(%arg0: i32) -> (i32, i32) {
    %c0_i32 = arith.constant 0 : i32
    %c0_i32_0 = arith.constant 0 : i32
    %c0_i32_1 = arith.constant 0 : i32
    return %c0_i32, %c0_i32_0 : i32, i32
  }
  func.func @transform_8(%arg0: i32) -> (i32, i32) {
    %c0_i32 = arith.constant 0 : i32
    %c0_i32_0 = arith.constant 0 : i32
    return %c0_i32, %arg0 : i32, i32
  }
}

</mosaic_0001>

<llo_original>
// kernel: tpu_custom_call.1
$region0: #{tpu_custom_call.1}
  #allocation0 [shape = 'u32[]', space=smem, size = 0x4, offset = 0x4, fixed_abs, tag = 'smem constant byte address 0x4 - core index']
  #allocation1 [shape = 'u32[144,128]{1,0:T(1,128)}', space=vmem, size = 0x12000, scoped, tag = 'internal scratch']
  %s0 = inlined_call_operand.vmem [shape: f32[256,112], index: 0, kind: input, shape index: {}]
  %s1 = inlined_call_operand.vmem [shape: bf16[896,112], index: 1, kind: input, shape index: {}]
  %s2 = inlined_call_operand.vmem [shape: bf16[56,896], index: 2, kind: input, shape index: {}]
  %s3 = inlined_call_operand.vmem [shape: bf16[512,56], index: 3, kind: input, shape index: {}]
  %s4 = inlined_call_operand.vmem [shape: bf16[32,512], index: 4, kind: input, shape index: {}]
  %s5 = inlined_call_operand.vmem [shape: bf16[32,56], index: 5, kind: input, shape index: {}]
  %s6 = inlined_call_operand.vmem [shape: bf16[3,32], index: 6, kind: input, shape index: {}]
  %s7 = inlined_call_operand.vmem [shape: f32[1531,1], index: 7, kind: input, shape index: {}]
  %s8 = inlined_call_operand.hbm [shape: f32[35,256], index: 8, kind: output, shape index: {}]
  %s9 = sld [smem:[#allocation0]]
  $region65: #{tpu_custom_call.1} parent=0
    _
  %s11 = ssub.s32 1, %s9
  %s12 = scalar_select 0, %s11, %s9
  $region1: #{tpu_custom_call.1} parent=0
    #allocation2 [shape = 'u8[40960]{0}', space=vmem, size = 0xa000, scoped, tag = 'output window, operand 0']
    #allocation3 [shape = 's32[2]{0}', space=sflag, size = 0x8, scoped, tag = 'scoped memory for tpu_custom_call.1']
    %13 = vsyncpa [#allocation3], 0
    %s14 = scalar_lea.sflag [#allocation3], 1
    %15 = vsyncpa %s14, 0
    loop: start=0, step=1, limit=4
    $region2: #{tpu_custom_call.1} parent=1 // loop_pre_header
      _
    $region3: #{tpu_custom_call.1} parent=1 // loop_header
      %s17 = sphi 0, %s21
      %p18 = scmp.ge.s32.totalorder %s17, 4
      %s27 = sphi 0, %s29
      %s30 = sphi 0, %s27
      %s31 = sphi 0, %s30
      %s47 = sphi 0, %s31
      %s51 = sphi 0, %s51
      %s53 = sphi 0, %s51
      %s54 = sphi 0, %s53
      %s68 = sphi 0, %s54
      %s72 = sphi 0, %s72
      %s74 = sphi 0, %s72
      %s75 = sphi 0, %s74
      %s89 = sphi 0, %s75
      %s93 = sphi 0, %s93
      %s95 = sphi 0, %s93
      %s96 = sphi 0, %s95
      %s110 = sphi 0, %s96
      %s114 = sphi 0, %s114
      %s116 = sphi 0, %s114
      %s117 = sphi 0, %s116
      %s131 = sphi 0, %s117
      %s135 = sphi 0, %s135
      %s137 = sphi 0, %s135
      %s138 = sphi 0, %s137
      %s152 = sphi 0, %s138
      %s156 = sphi 0, %s156
      %s158 = sphi 0, %s156
      %s159 = sphi 0, %s158
      %s173 = sphi 0, %s159
      %s177 = sphi 0, %s177
      %s179 = sphi 0, %s177
      %s180 = sphi 0, %s179
      %s194 = sphi 0, %s180
      %s200 = sphi 0, %s202
      %s203 = sphi 0, %s200
      %s204 = sphi 0, %s203
      %s220 = sphi 0, %s204
    $region4: #{tpu_custom_call.1} parent=1 // loop_header_branch
      %20 = sbr.rel (%p18) target = $region8
    $region5: #{tpu_custom_call.1} parent=1 // loop_body
      %s22 = ssub.s32 %s17, 1
      %s23 = ssub.s32 %s17, 2
      %s24 = sadd.s32 %s17, 1
      %s25 = ssub.s32 %s17, %s24
      %p26 = scmp.eq.s32.totalorder %s25, 0
      %s28 = sadd.s32 %s27, 1
      %s29 = scalar_select %p26, %s27, %s28
      %p32 = pneg %p26
      %p33 = scmp.eq.s32.totalorder %s17, 1
      %p34 = por %p32, %p33
      %p35 = scmp.ne.s32.totalorder %s27, %s30
      %p36 = scmp.eq.s32.totalorder %s17, 0
      %p37 = por %p35, %p36
      %p38 = scmp.ne.s32.totalorder %s27, %s30
      %p39 = scmp.eq.s32.totalorder %s22, 1
      %p40 = por %p38, %p39
      %p41 = scmp.ne.s32.totalorder %s30, %s31
      %p42 = scmp.eq.s32.totalorder %s22, 0
      %p43 = por %p41, %p42
      %p44 = scmp.ne.s32.totalorder %s30, %s31
      %p45 = scmp.eq.s32.totalorder %s23, 1
      %p46 = por %p44, %p45
      %p48 = scmp.ne.s32.totalorder %s31, %s47
      %p49 = scmp.eq.s32.totalorder %s23, 0
      %p50 = por %p48, %p49
      %s52 = sadd.s32 %s51, 1
      %p55 = scmp.eq.s32.totalorder %s17, 1
      %p56 = scmp.ne.s32.totalorder %s51, %s53
      %p57 = scmp.eq.s32.totalorder %s17, 0
      %p58 = por %p56, %p57
      %p59 = scmp.ne.s32.totalorder %s51, %s53
      %p60 = scmp.eq.s32.totalorder %s22, 1
      %p61 = por %p59, %p60
      %p62 = scmp.ne.s32.totalorder %s53, %s54
      %p63 = scmp.eq.s32.totalorder %s22, 0
      %p64 = por %p62, %p63
      %p65 = scmp.ne.s32.totalorder %s53, %s54
      %p66 = scmp.eq.s32.totalorder %s23, 1
      %p67 = por %p65, %p66
      %p69 = scmp.ne.s32.totalorder %s54, %s68
      %p70 = scmp.eq.s32.totalorder %s23, 0
      %p71 = por %p69, %p70
      %s73 = sadd.s32 %s72, 1
      %p76 = scmp.eq.s32.totalorder %s17, 1
      %p77 = scmp.ne.s32.totalorder %s72, %s74
      %p78 = scmp.eq.s32.totalorder %s17, 0
      %p79 = por %p77, %p78
      %p80 = scmp.ne.s32.totalorder %s72, %s74
      %p81 = scmp.eq.s32.totalorder %s22, 1
      %p82 = por %p80, %p81
      %p83 = scmp.ne.s32.totalorder %s74, %s75
      %p84 = scmp.eq.s32.totalorder %s22, 0
      %p85 = por %p83, %p84
      %p86 = scmp.ne.s32.totalorder %s74, %s75
      %p87 = scmp.eq.s32.totalorder %s23, 1
      %p88 = por %p86, %p87
      %p90 = scmp.ne.s32.totalorder %s75, %s89
      %p91 = scmp.eq.s32.totalorder %s23, 0
      %p92 = por %p90, %p91
      %s94 = sadd.s32 %s93, 1
      %p97 = scmp.eq.s32.totalorder %s17, 1
      %p98 = scmp.ne.s32.totalorder %s93, %s95
      %p99 = scmp.eq.s32.totalorder %s17, 0
      %p100 = por %p98, %p99
      %p101 = scmp.ne.s32.totalorder %s93, %s95
      %p102 = scmp.eq.s32.totalorder %s22, 1
      %p103 = por %p101, %p102
      %p104 = scmp.ne.s32.totalorder %s95, %s96
      %p105 = scmp.eq.s32.totalorder %s22, 0
      %p106 = por %p104, %p105
      %p107 = scmp.ne.s32.totalorder %s95, %s96
      %p108 = scmp.eq.s32.totalorder %s23, 1
      %p109 = por %p107, %p108
      %p111 = scmp.ne.s32.totalorder %s96, %s110
      %p112 = scmp.eq.s32.totalorder %s23, 0
      %p113 = por %p111, %p112
      %s115 = sadd.s32 %s114, 1
      %p118 = scmp.eq.s32.totalorder %s17, 1
      %p119 = scmp.ne.s32.totalorder %s114, %s116
      %p120 = scmp.eq.s32.totalorder %s17, 0
      %p121 = por %p119, %p120
      %p122 = scmp.ne.s32.totalorder %s114, %s116
      %p123 = scmp.eq.s32.totalorder %s22, 1
      %p124 = por %p122, %p123
      %p125 = scmp.ne.s32.totalorder %s116, %s117
      %p126 = scmp.eq.s32.totalorder %s22, 0
      %p127 = por %p125, %p126
      %p128 = scmp.ne.s32.totalorder %s116, %s117
      %p129 = scmp.eq.s32.totalorder %s23, 1
      %p130 = por %p128, %p129
      %p132 = scmp.ne.s32.totalorder %s117, %s131
      %p133 = scmp.eq.s32.totalorder %s23, 0
      %p134 = por %p132, %p133
      %s136 = sadd.s32 %s135, 1
      %p139 = scmp.eq.s32.totalorder %s17, 1
      %p140 = scmp.ne.s32.totalorder %s135, %s137
      %p141 = scmp.eq.s32.totalorder %s17, 0
      %p142 = por %p140, %p141
      %p143 = scmp.ne.s32.totalorder %s135, %s137
      %p144 = scmp.eq.s32.totalorder %s22, 1
      %p145 = por %p143, %p144
      %p146 = scmp.ne.s32.totalorder %s137, %s138
      %p147 = scmp.eq.s32.totalorder %s22, 0
      %p148 = por %p146, %p147
      %p149 = scmp.ne.s32.totalorder %s137, %s138
      %p150 = scmp.eq.s32.totalorder %s23, 1
      %p151 = por %p149, %p150
      %p153 = scmp.ne.s32.totalorder %s138, %s152
      %p154 = scmp.eq.s32.totalorder %s23, 0
      %p155 = por %p153, %p154
      %s157 = sadd.s32 %s156, 1
      %p160 = scmp.eq.s32.totalorder %s17, 1
      %p161 = scmp.ne.s32.totalorder %s156, %s158
      %p162 = scmp.eq.s32.totalorder %s17, 0
      %p163 = por %p161, %p162
      %p164 = scmp.ne.s32.totalorder %s156, %s158
      %p165 = scmp.eq.s32.totalorder %s22, 1
      %p166 = por %p164, %p165
      %p167 = scmp.ne.s32.totalorder %s158, %s159
      %p168 = scmp.eq.s32.totalorder %s22, 0
      %p169 = por %p167, %p168
      %p170 = scmp.ne.s32.totalorder %s158, %s159
      %p171 = scmp.eq.s32.totalorder %s23, 1
      %p172 = por %p170, %p171
      %p174 = scmp.ne.s32.totalorder %s159, %s173
      %p175 = scmp.eq.s32.totalorder %s23, 0
      %p176 = por %p174, %p175
      %s178 = sadd.s32 %s177, 1
      %p181 = scmp.eq.s32.totalorder %s17, 1
      %p182 = scmp.ne.s32.totalorder %s177, %s179
      %p183 = scmp.eq.s32.totalorder %s17, 0
      %p184 = por %p182, %p183
      %p185 = scmp.ne.s32.totalorder %s177, %s179
      %p186 = scmp.eq.s32.totalorder %s22, 1
      %p187 = por %p185, %p186
      %p188 = scmp.ne.s32.totalorder %s179, %s180
      %p189 = scmp.eq.s32.totalorder %s22, 0
      %p190 = por %p188, %p189
      %p191 = scmp.ne.s32.totalorder %s179, %s180
      %p192 = scmp.eq.s32.totalorder %s23, 1
      %p193 = por %p191, %p192
      %p195 = scmp.ne.s32.totalorder %s180, %s194
      %p196 = scmp.eq.s32.totalorder %s23, 0
      %p197 = por %p195, %p196
      %s198 = ssub.s32 %s17, %s24
      %p199 = scmp.eq.s32.totalorder %s198, 0
      %s201 = sadd.s32 %s200, 1
      %s202 = scalar_select %p199, %s200, %s201
      %p205 = pneg %p199
      %p206 = scmp.eq.s32.totalorder %s17, 1
      %p207 = por %p205, %p206
      %p208 = scmp.ne.s32.totalorder %s200, %s203
      %p209 = scmp.eq.s32.totalorder %s17, 0
      %p210 = por %p208, %p209
      %p211 = scmp.ne.s32.totalorder %s200, %s203
      %p212 = scmp.eq.s32.totalorder %s22, 1
      %p213 = por %p211, %p212
      %p214 = scmp.ne.s32.totalorder %s203, %s204
      %p215 = scmp.eq.s32.totalorder %s22, 0
      %p216 = por %p214, %p215
      %p217 = scmp.ne.s32.totalorder %s203, %s204
      %p218 = scmp.eq.s32.totalorder %s23, 1
      %p219 = por %p217, %p218
      %p221 = scmp.ne.s32.totalorder %s204, %s220
      %p222 = scmp.eq.s32.totalorder %s23, 0
      %p223 = por %p221, %p222
      %p224 = scmp.le.s32.totalorder 1, %s17
      %p225 = scmp.lt.s32.totalorder %s17, 3
      %p226 = pnand %p224, %p225
      %p227 = pneg %p226
      // Predicated region
      $region9: #{tpu_custom_call.1} parent=5 // pred_check
        _
      $region10: #{tpu_custom_call.1} parent=5 // pred_check_branch
        %229 = sbr.rel (%p226) target = $region12
      $region11: #{tpu_custom_call.1} parent=5 // pred_region
        %s230 = ssub.s32 %s17, 1
        // Predicated region
        $region13: #{tpu_custom_call.1} parent=11 // pred_check
          %p231 = pneg %p64
        $region14: #{tpu_custom_call.1} parent=11 // pred_check_branch
          %233 = sbr.rel (%p231) target = $region16
        $region15: #{tpu_custom_call.1} parent=11 // pred_region
          _
        $region16: #{tpu_custom_call.1} parent=11 // pred_fallthru
          _
        // Predicated region
        $region17: #{tpu_custom_call.1} parent=11 // pred_check
          %p234 = pneg %p85
        $region18: #{tpu_custom_call.1} parent=11 // pred_check_branch
          %236 = sbr.rel (%p234) target = $region20
        $region19: #{tpu_custom_call.1} parent=11 // pred_region
          _
        $region20: #{tpu_custom_call.1} parent=11 // pred_fallthru
          _
        // Predicated region
        $region21: #{tpu_custom_call.1} parent=11 // pred_check
          %p237 = pneg %p106
        $region22: #{tpu_custom_call.1} parent=11 // pred_check_branch
          %239 = sbr.rel (%p237) target = $region24
        $region23: #{tpu_custom_call.1} parent=11 // pred_region
          _
        $region24: #{tpu_custom_call.1} parent=11 // pred_fallthru
          _
        // Predicated region
        $region25: #{tpu_custom_call.1} parent=11 // pred_check
          %p240 = pneg %p127
        $region26: #{tpu_custom_call.1} parent=11 // pred_check_branch
          %242 = sbr.rel (%p240) target = $region28
        $region27: #{tpu_custom_call.1} parent=11 // pred_region
          _
        $region28: #{tpu_custom_call.1} parent=11 // pred_fallthru
          _
        // Predicated region
        $region29: #{tpu_custom_call.1} parent=11 // pred_check
          %p243 = pneg %p148
        $region30: #{tpu_custom_call.1} parent=11 // pred_check_branch
          %245 = sbr.rel (%p243) target = $region32
        $region31: #{tpu_custom_call.1} parent=11 // pred_region
          _
        $region32: #{tpu_custom_call.1} parent=11 // pred_fallthru
          _
        // Predicated region
        $region33: #{tpu_custom_call.1} parent=11 // pred_check
          %p246 = pneg %p169
        $region34: #{tpu_custom_call.1} parent=11 // pred_check_branch
          %248 = sbr.rel (%p246) target = $region36
        $region35: #{tpu_custom_call.1} parent=11 // pred_region
          _
        $region36: #{tpu_custom_call.1} parent=11 // pred_fallthru
          _
        // Predicated region
        $region37: #{tpu_custom_call.1} parent=11 // pred_check
          %p249 = pneg %p190
        $region38: #{tpu_custom_call.1} parent=11 // pred_check_branch
          %251 = sbr.rel (%p249) target = $region40
        $region39: #{tpu_custom_call.1} parent=11 // pred_region
          _
        $region40: #{tpu_custom_call.1} parent=11 // pred_fallthru
          _
      $region12: #{tpu_custom_call.1} parent=5 // pred_fallthru
        _
      %p252 = scmp.lt.s32.totalorder %s17, 2
      // Predicated region
      $region41: #{tpu_custom_call.1} parent=5 // pred_check
        %p253 = pneg %p252
      $region42: #{tpu_custom_call.1} parent=5 // pred_check_branch
        %255 = sbr.rel (%p253) target = $region44
      $region43: #{tpu_custom_call.1} parent=5 // pred_region
        // Predicated region
        $region45: #{tpu_custom_call.1} parent=43 // pred_check
          %p256 = pneg %p37
        $region46: #{tpu_custom_call.1} parent=43 // pred_check_branch
          %258 = sbr.rel (%p256) target = $region48
        $region47: #{tpu_custom_call.1} parent=43 // pred_region
          %s259 = smul.u32 16, %s17
          %p260 = scmp.lt.s32.totalorder %s259, 31
          %s261 = scalar_select %p260, %s259, 31
          %s262 = smul.addr %s261, 8
          %s263 = scalar_lea.vmem %s0, %s262
          %s264 = smul.u32 16, %s17
        $region48: #{tpu_custom_call.1} parent=43 // pred_fallthru
          _
      $region44: #{tpu_custom_call.1} parent=5 // pred_fallthru
        _
      %p265 = scmp.le.s32.totalorder 1, %s17
      %p266 = scmp.lt.s32.totalorder %s17, 3
      %p267 = pnand %p265, %p266
      %p268 = pneg %p267
      // Predicated region
      $region49: #{tpu_custom_call.1} parent=5 // pred_check
        _
      $region50: #{tpu_custom_call.1} parent=5 // pred_check_branch
        %270 = sbr.rel (%p267) target = $region52
      $region51: #{tpu_custom_call.1} parent=5 // pred_region
        %s271 = ssub.s32 %s17, 1
        %s272 = smul.u32 16, %s22
        %p273 = scmp.lt.s32.totalorder %s272, 31
        %s274 = scalar_select %p273, %s272, 31
        %s275 = smul.addr %s274, 8
        %s276 = scalar_lea.vmem %s0, %s275
        %p277 = pneg %p43
        %p278 = pneg %p40
        %p279 = pneg %p64
        %p280 = pneg %p61
        %p281 = pneg %p85
        %p282 = pneg %p82
        %p283 = pneg %p106
        %p284 = pneg %p103
        %p285 = pneg %p127
        %p286 = pneg %p124
        %p287 = pneg %p148
        %p288 = pneg %p145
        %p289 = pneg %p169
        %p290 = pneg %p166
        %p291 = pneg %p190
        %p292 = pneg %p187
        %p293 = pneg %p216
        %p294 = pneg %p213
        %s295 = sand.u32 %s203, 1
        %s296 = scalar_lea.sflag [#allocation3], %s295
        %s297 = sand.u32 %s203, 1
        %s298 = smul.addr %s297, 40
        %s299 = scalar_lea.vmem [#allocation2], %s298
        %s300 = smul.u32 16, %s22
        %p301 = scmp.lt.s32.totalorder %s300, 31
        %s302 = scalar_select %p301, %s300, 31
        %s303 = smul.addr %s302, 8
        %s304 = scalar_lea.vmem %s0, %s303
        %s305 = smul.u32 16, %s22
        %v307 = vld [vmem:[%s304] sm:$0xff]
        %v308 = vld [vmem:[%s304 + $0x8] sm:$0xff]
        %v309 = vld [vmem:[%s304 + $0x10] sm:$0xff]
        %v310 = vld [vmem:[%s304 + $0x18] sm:$0xff]
        %v311 = vld [vmem:[%s304 + $0x20] sm:$0xff]
        %v312 = vld [vmem:[%s304 + $0x28] sm:$0xff]
        %v313 = vld [vmem:[%s304 + $0x30] sm:$0xff]
        %v314 = vld [vmem:[%s304 + $0x38] sm:$0xff]
        %v315 = vld [vmem:[%s304 + $0x40] sm:$0xff]
        %v316 = vld [vmem:[%s304 + $0x48] sm:$0xff]
        %v317 = vld [vmem:[%s304 + $0x50] sm:$0xff]
        %v318 = vld [vmem:[%s304 + $0x58] sm:$0xff]
        %v319 = vld [vmem:[%s304 + $0x60] sm:$0xff]
        %v320 = vld [vmem:[%s304 + $0x68] sm:$0xff]
        %v321 = vld [vmem:[%s304 + $0x70] sm:$0xff]
        %v322 = vld [vmem:[%s304 + $0x78] sm:$0xff]
        %v323 = vpack.c.bf16 %v308, %v307
        %v324 = vpack.c.bf16 %v310, %v309
        %v325 = vpack.c.bf16 %v312, %v311
        %v326 = vpack.c.bf16 %v314, %v313
        %v327 = vpack.c.bf16 %v316, %v315
        %v328 = vpack.c.bf16 %v318, %v317
        %v329 = vpack.c.bf16 %v320, %v319
        %v330 = vpack.c.bf16 %v322, %v321
        %v331 = vld [vmem:[%s1] sm:$0xf]
        %v332 = vld [vmem:[%s1 + $0x4] sm:$0xf]
        %v333 = vld [vmem:[%s1 + $0x8] sm:$0xf]
        %v334 = vld [vmem:[%s1 + $0xc] sm:$0xf]
        %v335 = vld [vmem:[%s1 + $0x10] sm:$0xf]
        %v336 = vld [vmem:[%s1 + $0x14] sm:$0xf]
        %v337 = vld [vmem:[%s1 + $0x18] sm:$0xf]
        %v338 = vld [vmem:[%s1 + $0x1c] sm:$0xf]
        %v339 = vld [vmem:[%s1 + $0x20] sm:$0xf]
        %v340 = vld [vmem:[%s1 + $0x24] sm:$0xf]
        %v341 = vld [vmem:[%s1 + $0x28] sm:$0xf]
        %v342 = vld [vmem:[%s1 + $0x2c] sm:$0xf]
        %v343 = vld [vmem:[%s1 + $0x30] sm:$0xf]
        %v344 = vld [vmem:[%s1 + $0x34] sm:$0xf]
        %v345 = vld [vmem:[%s1 + $0x38] sm:$0xf]
        %v346 = vld [vmem:[%s1 + $0x3c] sm:$0xf]
        %v347 = vld [vmem:[%s1 + $0x40] sm:$0xf]
        %v348 = vld [vmem:[%s1 + $0x44] sm:$0xf]
        %v349 = vld [vmem:[%s1 + $0x48] sm:$0xf]
        %v350 = vld [vmem:[%s1 + $0x4c] sm:$0xf]
        %v351 = vld [vmem:[%s1 + $0x50] sm:$0xf]
        %v352 = vld [vmem:[%s1 + $0x54] sm:$0xf]
        %v353 = vld [vmem:[%s1 + $0x58] sm:$0xf]
        %v354 = vld [vmem:[%s1 + $0x5c] sm:$0xf]
        %v355 = vld [vmem:[%s1 + $0x60] sm:$0xf]
        %v356 = vld [vmem:[%s1 + $0x64] sm:$0xf]
        %v357 = vld [vmem:[%s1 + $0x68] sm:$0xf]
        %v358 = vld [vmem:[%s1 + $0x6c] sm:$0xf]
        %v359 = vld [vmem:[%s1 + $0x70] sm:$0xf]
        %v360 = vld [vmem:[%s1 + $0x74] sm:$0xf]
        %v361 = vld [vmem:[%s1 + $0x78] sm:$0xf]
        %v362 = vld [vmem:[%s1 + $0x7c] sm:$0xf]
        %v363 = vld [vmem:[%s1 + $0x80] sm:$0xf]
        %v364 = vld [vmem:[%s1 + $0x84] sm:$0xf]
        %v365 = vld [vmem:[%s1 + $0x88] sm:$0xf]
        %v366 = vld [vmem:[%s1 + $0x8c] sm:$0xf]
        %v367 = vld [vmem:[%s1 + $0x90] sm:$0xf]
        %v368 = vld [vmem:[%s1 + $0x94] sm:$0xf]
        %v369 = vld [vmem:[%s1 + $0x98] sm:$0xf]
        %v370 = vld [vmem:[%s1 + $0x9c] sm:$0xf]
        %v371 = vld [vmem:[%s1 + $0xa0] sm:$0xf]
        %v372 = vld [vmem:[%s1 + $0xa4] sm:$0xf]
        %v373 = vld [vmem:[%s1 + $0xa8] sm:$0xf]
        %v374 = vld [vmem:[%s1 + $0xac] sm:$0xf]
        %v375 = vld [vmem:[%s1 + $0xb0] sm:$0xf]
        %v376 = vld [vmem:[%s1 + $0xb4] sm:$0xf]
        %v377 = vld [vmem:[%s1 + $0xb8] sm:$0xf]
        %v378 = vld [vmem:[%s1 + $0xbc] sm:$0xf]
        %v379 = vld [vmem:[%s1 + $0xc0] sm:$0xf]
        %v380 = vld [vmem:[%s1 + $0xc4] sm:$0xf]
        %v381 = vld [vmem:[%s1 + $0xc8] sm:$0xf]
        %v382 = vld [vmem:[%s1 + $0xcc] sm:$0xf]
        %v383 = vld [vmem:[%s1 + $0xd0] sm:$0xf]
        %v384 = vld [vmem:[%s1 + $0xd4] sm:$0xf]
        %v385 = vld [vmem:[%s1 + $0xd8] sm:$0xf]
        %v386 = vld [vmem:[%s1 + $0xdc] sm:$0xf]
        %v387 = vld [vmem:[%s1 + $0xe0] sm:$0xf]
        %v388 = vld [vmem:[%s1 + $0xe4] sm:$0xf]
        %v389 = vld [vmem:[%s1 + $0xe8] sm:$0xf]
        %v390 = vld [vmem:[%s1 + $0xec] sm:$0xf]
        %v391 = vld [vmem:[%s1 + $0xf0] sm:$0xf]
        %v392 = vld [vmem:[%s1 + $0xf4] sm:$0xf]
        %v393 = vld [vmem:[%s1 + $0xf8] sm:$0xf]
        %v394 = vld [vmem:[%s1 + $0xfc] sm:$0xf]
        %v395 = vld [vmem:[%s1 + $0x100] sm:$0xf]
        %v396 = vld [vmem:[%s1 + $0x104] sm:$0xf]
        %v397 = vld [vmem:[%s1 + $0x108] sm:$0xf]
        %v398 = vld [vmem:[%s1 + $0x10c] sm:$0xf]
        %v399 = vld [vmem:[%s1 + $0x110] sm:$0xf]
        %v400 = vld [vmem:[%s1 + $0x114] sm:$0xf]
        %v401 = vld [vmem:[%s1 + $0x118] sm:$0xf]
        %v402 = vld [vmem:[%s1 + $0x11c] sm:$0xf]
        %v403 = vld [vmem:[%s1 + $0x120] sm:$0xf]
        %v404 = vld [vmem:[%s1 + $0x124] sm:$0xf]
        %v405 = vld [vmem:[%s1 + $0x128] sm:$0xf]
        %v406 = vld [vmem:[%s1 + $0x12c] sm:$0xf]
        %v407 = vld [vmem:[%s1 + $0x130] sm:$0xf]
        %v408 = vld [vmem:[%s1 + $0x134] sm:$0xf]
        %v409 = vld [vmem:[%s1 + $0x138] sm:$0xf]
        %v410 = vld [vmem:[%s1 + $0x13c] sm:$0xf]
        %v411 = vld [vmem:[%s1 + $0x140] sm:$0xf]
        %v412 = vld [vmem:[%s1 + $0x144] sm:$0xf]
        %v413 = vld [vmem:[%s1 + $0x148] sm:$0xf]
        %v414 = vld [vmem:[%s1 + $0x14c] sm:$0xf]
        %v415 = vld [vmem:[%s1 + $0x150] sm:$0xf]
        %v416 = vld [vmem:[%s1 + $0x154] sm:$0xf]
        %v417 = vld [vmem:[%s1 + $0x158] sm:$0xf]
        %v418 = vld [vmem:[%s1 + $0x15c] sm:$0xf]
        %v419 = vld [vmem:[%s1 + $0x160] sm:$0xf]
        %v420 = vld [vmem:[%s1 + $0x164] sm:$0xf]
        %v421 = vld [vmem:[%s1 + $0x168] sm:$0xf]
        %v422 = vld [vmem:[%s1 + $0x16c] sm:$0xf]
        %v423 = vld [vmem:[%s1 + $0x170] sm:$0xf]
        %v424 = vld [vmem:[%s1 + $0x174] sm:$0xf]
        %v425 = vld [vmem:[%s1 + $0x178] sm:$0xf]
        %v426 = vld [vmem:[%s1 + $0x17c] sm:$0xf]
        %v427 = vld [vmem:[%s1 + $0x180] sm:$0xf]
        %v428 = vld [vmem:[%s1 + $0x184] sm:$0xf]
        %v429 = vld [vmem:[%s1 + $0x188] sm:$0xf]
        %v430 = vld [vmem:[%s1 + $0x18c] sm:$0xf]
        %v431 = vld [vmem:[%s1 + $0x190] sm:$0xf]
        %v432 = vld [vmem:[%s1 + $0x194] sm:$0xf]
        %v433 = vld [vmem:[%s1 + $0x198] sm:$0xf]
        %v434 = vld [vmem:[%s1 + $0x19c] sm:$0xf]
        %v435 = vld [vmem:[%s1 + $0x1a0] sm:$0xf]
        %v436 = vld [vmem:[%s1 + $0x1a4] sm:$0xf]
        %v437 = vld [vmem:[%s1 + $0x1a8] sm:$0xf]
        %v438 = vld [vmem:[%s1 + $0x1ac] sm:$0xf]
        %v439 = vld [vmem:[%s1 + $0x1b0] sm:$0xf]
        %v440 = vld [vmem:[%s1 + $0x1b4] sm:$0xf]
        %v441 = vld [vmem:[%s1 + $0x1b8] sm:$0xf]
        %v442 = vld [vmem:[%s1 + $0x1bc] sm:$0xf]
        %v443 = vld [vmem:[%s7] sm:$0xff]
        %v444 = vld [vmem:[%s7 + $0x8] sm:$0xff]
        %v445 = vld [vmem:[%s7 + $0x10] sm:$0xff]
        %v446 = vld [vmem:[%s7 + $0x18] sm:$0xff]
        %v447 = vld [vmem:[%s7 + $0x20] sm:$0xff]
        %v448 = vld [vmem:[%s7 + $0x28] sm:$0xff]
        %v449 = vld [vmem:[%s7 + $0x30] sm:$0xff]
        %v450 = vld [vmem:[%s7 + $0x38] sm:$0xff]
        %v451 = vld [vmem:[%s7 + $0x40] sm:$0xff]
        %v452 = vld [vmem:[%s7 + $0x48] sm:$0xff]
        %v453 = vld [vmem:[%s7 + $0x50] sm:$0xff]
        %v454 = vld [vmem:[%s7 + $0x58] sm:$0xff]
        %v455 = vld [vmem:[%s7 + $0x60] sm:$0xff]
        %v456 = vld [vmem:[%s7 + $0x68] sm:$0xff]
        %v457 = vld [vmem:[%s7 + $0x70] sm:$0xff]
        %v458 = vld [vmem:[%s7 + $0x78] sm:$0xff]
        %v459 = vld [vmem:[%s7 + $0x80] sm:$0xff]
        %v460 = vld [vmem:[%s7 + $0x88] sm:$0xff]
        %v461 = vld [vmem:[%s7 + $0x90] sm:$0xff]
        %v462 = vld [vmem:[%s7 + $0x98] sm:$0xff]
        %v463 = vld [vmem:[%s7 + $0xa0] sm:$0xff]
        %v464 = vld [vmem:[%s7 + $0xa8] sm:$0xff]
        %v465 = vld [vmem:[%s7 + $0xb0] sm:$0xff]
        %v466 = vld [vmem:[%s7 + $0xb8] sm:$0xff]
        %v467 = vld [vmem:[%s7 + $0xc0] sm:$0xff]
        %v468 = vld [vmem:[%s7 + $0xc8] sm:$0xff]
        %v469 = vld [vmem:[%s7 + $0xd0] sm:$0xff]
        %v470 = vld [vmem:[%s7 + $0xd8] sm:$0xff]
        %v471 = vld [vmem:[%s7 + $0xe0] sm:$0xff]
        %v472 = vld [vmem:[%s7 + $0xe8] sm:$0xff]
        %v473 = vld [vmem:[%s7 + $0xf0] sm:$0xff]
        %v474 = vld [vmem:[%s7 + $0xf8] sm:$0xff]
        %v475 = vld [vmem:[%s7 + $0x100] sm:$0xff]
        %v476 = vld [vmem:[%s7 + $0x108] sm:$0xff]
        %v477 = vld [vmem:[%s7 + $0x110] sm:$0xff]
        %v478 = vld [vmem:[%s7 + $0x118] sm:$0xff]
        %v479 = vld [vmem:[%s7 + $0x120] sm:$0xff]
        %v480 = vld [vmem:[%s7 + $0x128] sm:$0xff]
        %v481 = vld [vmem:[%s7 + $0x130] sm:$0xff]
        %v482 = vld [vmem:[%s7 + $0x138] sm:$0xff]
        %v483 = vld [vmem:[%s7 + $0x140] sm:$0xff]
        %v484 = vld [vmem:[%s7 + $0x148] sm:$0xff]
        %v485 = vld [vmem:[%s7 + $0x150] sm:$0xff]
        %v486 = vld [vmem:[%s7 + $0x158] sm:$0xff]
        %v487 = vld [vmem:[%s7 + $0x160] sm:$0xff]
        %v488 = vld [vmem:[%s7 + $0x168] sm:$0xff]
        %v489 = vld [vmem:[%s7 + $0x170] sm:$0xff]
        %v490 = vld [vmem:[%s7 + $0x178] sm:$0xff]
        %v491 = vld [vmem:[%s7 + $0x180] sm:$0xff]
        %v492 = vld [vmem:[%s7 + $0x188] sm:$0xff]
        %v493 = vld [vmem:[%s7 + $0x190] sm:$0xff]
        %v494 = vld [vmem:[%s7 + $0x198] sm:$0xff]
        %v495 = vld [vmem:[%s7 + $0x1a0] sm:$0xff]
        %v496 = vld [vmem:[%s7 + $0x1a8] sm:$0xff]
        %v497 = vld [vmem:[%s7 + $0x1b0] sm:$0xff]
        %v498 = vld [vmem:[%s7 + $0x1b8] sm:$0xff]
        %v499 = vld [vmem:[%s7 + $0x1c0] sm:$0xff]
        %v500 = vld [vmem:[%s7 + $0x1c8] sm:$0xff]
        %v501 = vld [vmem:[%s7 + $0x1d0] sm:$0xff]
        %v502 = vld [vmem:[%s7 + $0x1d8] sm:$0xff]
        %v503 = vld [vmem:[%s7 + $0x1e0] sm:$0xff]
        %v504 = vld [vmem:[%s7 + $0x1e8] sm:$0xff]
        %v505 = vld [vmem:[%s7 + $0x1f0] sm:$0xff]
        %v506 = vld [vmem:[%s7 + $0x1f8] sm:$0xff]
        %v507 = vld [vmem:[%s7 + $0x200] sm:$0xff]
        %v508 = vld [vmem:[%s7 + $0x208] sm:$0xff]
        %v509 = vld [vmem:[%s7 + $0x210] sm:$0xff]
        %v510 = vld [vmem:[%s7 + $0x218] sm:$0xff]
        %v511 = vld [vmem:[%s7 + $0x220] sm:$0xff]
        %v512 = vld [vmem:[%s7 + $0x228] sm:$0xff]
        %v513 = vld [vmem:[%s7 + $0x230] sm:$0xff]
        %v514 = vld [vmem:[%s7 + $0x238] sm:$0xff]
        %v515 = vld [vmem:[%s7 + $0x240] sm:$0xff]
        %v516 = vld [vmem:[%s7 + $0x248] sm:$0xff]
        %v517 = vld [vmem:[%s7 + $0x250] sm:$0xff]
        %v518 = vld [vmem:[%s7 + $0x258] sm:$0xff]
        %v519 = vld [vmem:[%s7 + $0x260] sm:$0xff]
        %v520 = vld [vmem:[%s7 + $0x268] sm:$0xff]
        %v521 = vld [vmem:[%s7 + $0x270] sm:$0xff]
        %v522 = vld [vmem:[%s7 + $0x278] sm:$0xff]
        %v523 = vld [vmem:[%s7 + $0x280] sm:$0xff]
        %v524 = vld [vmem:[%s7 + $0x288] sm:$0xff]
        %v525 = vld [vmem:[%s7 + $0x290] sm:$0xff]
        %v526 = vld [vmem:[%s7 + $0x298] sm:$0xff]
        %v527 = vld [vmem:[%s7 + $0x2a0] sm:$0xff]
        %v528 = vld [vmem:[%s7 + $0x2a8] sm:$0xff]
        %v529 = vld [vmem:[%s7 + $0x2b0] sm:$0xff]
        %v530 = vld [vmem:[%s7 + $0x2b8] sm:$0xff]
        %v531 = vld [vmem:[%s7 + $0x2c0] sm:$0xff]
        %v532 = vld [vmem:[%s7 + $0x2c8] sm:$0xff]
        %v533 = vld [vmem:[%s7 + $0x2d0] sm:$0xff]
        %v534 = vld [vmem:[%s7 + $0x2d8] sm:$0xff]
        %v535 = vld [vmem:[%s7 + $0x2e0] sm:$0xff]
        %v536 = vld [vmem:[%s7 + $0x2e8] sm:$0xff]
        %v537 = vld [vmem:[%s7 + $0x2f0] sm:$0xff]
        %v538 = vld [vmem:[%s7 + $0x2f8] sm:$0xff]
        %v539 = vld [vmem:[%s7 + $0x300] sm:$0xff]
        %v540 = vld [vmem:[%s7 + $0x308] sm:$0xff]
        %v541 = vld [vmem:[%s7 + $0x310] sm:$0xff]
        %v542 = vld [vmem:[%s7 + $0x318] sm:$0xff]
        %v543 = vld [vmem:[%s7 + $0x320] sm:$0xff]
        %v544 = vld [vmem:[%s7 + $0x328] sm:$0xff]
        %v545 = vld [vmem:[%s7 + $0x330] sm:$0xff]
        %v546 = vld [vmem:[%s7 + $0x338] sm:$0xff]
        %v547 = vld [vmem:[%s7 + $0x340] sm:$0xff]
        %v548 = vld [vmem:[%s7 + $0x348] sm:$0xff]
        %v549 = vld [vmem:[%s7 + $0x350] sm:$0xff]
        %v550 = vld [vmem:[%s7 + $0x358] sm:$0xff]
        %v551 = vld [vmem:[%s7 + $0x360] sm:$0xff]
        %v552 = vld [vmem:[%s7 + $0x368] sm:$0xff]
        %v553 = vld [vmem:[%s7 + $0x370] sm:$0xff]
        %v554 = vld [vmem:[%s7 + $0x378] sm:$0xff]
        %556 = vset.pattern.permute.xlu0 0
        %557 = vperm.xlu0 %556, %v443
        %v558 = vpop.permute.xlu0 %557
        %561 = vset.pattern.permute.xlu0 0
        %562 = vperm.xlu0 %561, %v444
        %v563 = vpop.permute.xlu0 %562
        %566 = vset.pattern.permute.xlu0 0
        %567 = vperm.xlu0 %566, %v445
        %v568 = vpop.permute.xlu0 %567
        %571 = vset.pattern.permute.xlu0 0
        %572 = vperm.xlu0 %571, %v446
        %v573 = vpop.permute.xlu0 %572
        %576 = vset.pattern.permute.xlu0 0
        %577 = vperm.xlu0 %576, %v447
        %v578 = vpop.permute.xlu0 %577
        %581 = vset.pattern.permute.xlu0 0
        %582 = vperm.xlu0 %581, %v448
        %v583 = vpop.permute.xlu0 %582
        %586 = vset.pattern.permute.xlu0 0
        %587 = vperm.xlu0 %586, %v449
        %v588 = vpop.permute.xlu0 %587
        %591 = vset.pattern.permute.xlu0 0
        %592 = vperm.xlu0 %591, %v450
        %v593 = vpop.permute.xlu0 %592
        %596 = vset.pattern.permute.xlu0 0
        %597 = vperm.xlu0 %596, %v451
        %v598 = vpop.permute.xlu0 %597
        %601 = vset.pattern.permute.xlu0 0
        %602 = vperm.xlu0 %601, %v452
        %v603 = vpop.permute.xlu0 %602
        %606 = vset.pattern.permute.xlu0 0
        %607 = vperm.xlu0 %606, %v453
        %v608 = vpop.permute.xlu0 %607
        %611 = vset.pattern.permute.xlu0 0
        %612 = vperm.xlu0 %611, %v454
        %v613 = vpop.permute.xlu0 %612
        %616 = vset.pattern.permute.xlu0 0
        %617 = vperm.xlu0 %616, %v455
        %v618 = vpop.permute.xlu0 %617
        %621 = vset.pattern.permute.xlu0 0
        %622 = vperm.xlu0 %621, %v456
        %v623 = vpop.permute.xlu0 %622
        %626 = vset.pattern.permute.xlu0 0
        %627 = vperm.xlu0 %626, %v457
        %v628 = vpop.permute.xlu0 %627
        %631 = vset.pattern.permute.xlu0 0
        %632 = vperm.xlu0 %631, %v458
        %v633 = vpop.permute.xlu0 %632
        %636 = vset.pattern.permute.xlu0 0
        %637 = vperm.xlu0 %636, %v459
        %v638 = vpop.permute.xlu0 %637
        %641 = vset.pattern.permute.xlu0 0
        %642 = vperm.xlu0 %641, %v460
        %v643 = vpop.permute.xlu0 %642
        %646 = vset.pattern.permute.xlu0 0
        %647 = vperm.xlu0 %646, %v461
        %v648 = vpop.permute.xlu0 %647
        %651 = vset.pattern.permute.xlu0 0
        %652 = vperm.xlu0 %651, %v462
        %v653 = vpop.permute.xlu0 %652
        %656 = vset.pattern.permute.xlu0 0
        %657 = vperm.xlu0 %656, %v463
        %v658 = vpop.permute.xlu0 %657
        %661 = vset.pattern.permute.xlu0 0
        %662 = vperm.xlu0 %661, %v464
        %v663 = vpop.permute.xlu0 %662
        %666 = vset.pattern.permute.xlu0 0
        %667 = vperm.xlu0 %666, %v465
        %v668 = vpop.permute.xlu0 %667
        %671 = vset.pattern.permute.xlu0 0
        %672 = vperm.xlu0 %671, %v466
        %v673 = vpop.permute.xlu0 %672
        %676 = vset.pattern.permute.xlu0 0
        %677 = vperm.xlu0 %676, %v467
        %v678 = vpop.permute.xlu0 %677
        %681 = vset.pattern.permute.xlu0 0
        %682 = vperm.xlu0 %681, %v468
        %v683 = vpop.permute.xlu0 %682
        %686 = vset.pattern.permute.xlu0 0
        %687 = vperm.xlu0 %686, %v469
        %v688 = vpop.permute.xlu0 %687
        %691 = vset.pattern.permute.xlu0 0
        %692 = vperm.xlu0 %691, %v470
        %v693 = vpop.permute.xlu0 %692
        %696 = vset.pattern.permute.xlu0 0
        %697 = vperm.xlu0 %696, %v471
        %v698 = vpop.permute.xlu0 %697
        %701 = vset.pattern.permute.xlu0 0
        %702 = vperm.xlu0 %701, %v472
        %v703 = vpop.permute.xlu0 %702
        %706 = vset.pattern.permute.xlu0 0
        %707 = vperm.xlu0 %706, %v473
        %v708 = vpop.permute.xlu0 %707
        %711 = vset.pattern.permute.xlu0 0
        %712 = vperm.xlu0 %711, %v474
        %v713 = vpop.permute.xlu0 %712
        %716 = vset.pattern.permute.xlu0 0
        %717 = vperm.xlu0 %716, %v475
        %v718 = vpop.permute.xlu0 %717
        %721 = vset.pattern.permute.xlu0 0
        %722 = vperm.xlu0 %721, %v476
        %v723 = vpop.permute.xlu0 %722
        %726 = vset.pattern.permute.xlu0 0
        %727 = vperm.xlu0 %726, %v477
        %v728 = vpop.permute.xlu0 %727
        %731 = vset.pattern.permute.xlu0 0
        %732 = vperm.xlu0 %731, %v478
        %v733 = vpop.permute.xlu0 %732
        %736 = vset.pattern.permute.xlu0 0
        %737 = vperm.xlu0 %736, %v479
        %v738 = vpop.permute.xlu0 %737
        %741 = vset.pattern.permute.xlu0 0
        %742 = vperm.xlu0 %741, %v480
        %v743 = vpop.permute.xlu0 %742
        %746 = vset.pattern.permute.xlu0 0
        %747 = vperm.xlu0 %746, %v481
        %v748 = vpop.permute.xlu0 %747
        %751 = vset.pattern.permute.xlu0 0
        %752 = vperm.xlu0 %751, %v482
        %v753 = vpop.permute.xlu0 %752
        %756 = vset.pattern.permute.xlu0 0
        %757 = vperm.xlu0 %756, %v483
        %v758 = vpop.permute.xlu0 %757
        %761 = vset.pattern.permute.xlu0 0
        %762 = vperm.xlu0 %761, %v484
        %v763 = vpop.permute.xlu0 %762
        %766 = vset.pattern.permute.xlu0 0
        %767 = vperm.xlu0 %766, %v485
        %v768 = vpop.permute.xlu0 %767
        %771 = vset.pattern.permute.xlu0 0
        %772 = vperm.xlu0 %771, %v486
        %v773 = vpop.permute.xlu0 %772
        %776 = vset.pattern.permute.xlu0 0
        %777 = vperm.xlu0 %776, %v487
        %v778 = vpop.permute.xlu0 %777
        %781 = vset.pattern.permute.xlu0 0
        %782 = vperm.xlu0 %781, %v488
        %v783 = vpop.permute.xlu0 %782
        %786 = vset.pattern.permute.xlu0 0
        %787 = vperm.xlu0 %786, %v489
        %v788 = vpop.permute.xlu0 %787
        %791 = vset.pattern.permute.xlu0 0
        %792 = vperm.xlu0 %791, %v490
        %v793 = vpop.permute.xlu0 %792
        %796 = vset.pattern.permute.xlu0 0
        %797 = vperm.xlu0 %796, %v491
        %v798 = vpop.permute.xlu0 %797
        %801 = vset.pattern.permute.xlu0 0
        %802 = vperm.xlu0 %801, %v492
        %v803 = vpop.permute.xlu0 %802
        %806 = vset.pattern.permute.xlu0 0
        %807 = vperm.xlu0 %806, %v493
        %v808 = vpop.permute.xlu0 %807
        %811 = vset.pattern.permute.xlu0 0
        %812 = vperm.xlu0 %811, %v494
        %v813 = vpop.permute.xlu0 %812
        %816 = vset.pattern.permute.xlu0 0
        %817 = vperm.xlu0 %816, %v495
        %v818 = vpop.permute.xlu0 %817
        %821 = vset.pattern.permute.xlu0 0
        %822 = vperm.xlu0 %821, %v496
        %v823 = vpop.permute.xlu0 %822
        %826 = vset.pattern.permute.xlu0 0
        %827 = vperm.xlu0 %826, %v497
        %v828 = vpop.permute.xlu0 %827
        %831 = vset.pattern.permute.xlu0 0
        %832 = vperm.xlu0 %831, %v498
        %v833 = vpop.permute.xlu0 %832
        %836 = vset.pattern.permute.xlu0 0
        %837 = vperm.xlu0 %836, %v499
        %v838 = vpop.permute.xlu0 %837
        %841 = vset.pattern.permute.xlu0 0
        %842 = vperm.xlu0 %841, %v500
        %v843 = vpop.permute.xlu0 %842
        %846 = vset.pattern.permute.xlu0 0
        %847 = vperm.xlu0 %846, %v501
        %v848 = vpop.permute.xlu0 %847
        %851 = vset.pattern.permute.xlu0 0
        %852 = vperm.xlu0 %851, %v502
        %v853 = vpop.permute.xlu0 %852
        %856 = vset.pattern.permute.xlu0 0
        %857 = vperm.xlu0 %856, %v503
        %v858 = vpop.permute.xlu0 %857
        %861 = vset.pattern.permute.xlu0 0
        %862 = vperm.xlu0 %861, %v504
        %v863 = vpop.permute.xlu0 %862
        %866 = vset.pattern.permute.xlu0 0
        %867 = vperm.xlu0 %866, %v505
        %v868 = vpop.permute.xlu0 %867
        %871 = vset.pattern.permute.xlu0 0
        %872 = vperm.xlu0 %871, %v506
        %v873 = vpop.permute.xlu0 %872
        %876 = vset.pattern.permute.xlu0 0
        %877 = vperm.xlu0 %876, %v507
        %v878 = vpop.permute.xlu0 %877
        %881 = vset.pattern.permute.xlu0 0
        %882 = vperm.xlu0 %881, %v508
        %v883 = vpop.permute.xlu0 %882
        %886 = vset.pattern.permute.xlu0 0
        %887 = vperm.xlu0 %886, %v509
        %v888 = vpop.permute.xlu0 %887
        %891 = vset.pattern.permute.xlu0 0
        %892 = vperm.xlu0 %891, %v510
        %v893 = vpop.permute.xlu0 %892
        %896 = vset.pattern.permute.xlu0 0
        %897 = vperm.xlu0 %896, %v511
        %v898 = vpop.permute.xlu0 %897
        %901 = vset.pattern.permute.xlu0 0
        %902 = vperm.xlu0 %901, %v512
        %v903 = vpop.permute.xlu0 %902
        %906 = vset.pattern.permute.xlu0 0
        %907 = vperm.xlu0 %906, %v513
        %v908 = vpop.permute.xlu0 %907
        %911 = vset.pattern.permute.xlu0 0
        %912 = vperm.xlu0 %911, %v514
        %v913 = vpop.permute.xlu0 %912
        %916 = vset.pattern.permute.xlu0 0
        %917 = vperm.xlu0 %916, %v515
        %v918 = vpop.permute.xlu0 %917
        %921 = vset.pattern.permute.xlu0 0
        %922 = vperm.xlu0 %921, %v516
        %v923 = vpop.permute.xlu0 %922
        %926 = vset.pattern.permute.xlu0 0
        %927 = vperm.xlu0 %926, %v517
        %v928 = vpop.permute.xlu0 %927
        %931 = vset.pattern.permute.xlu0 0
        %932 = vperm.xlu0 %931, %v518
        %v933 = vpop.permute.xlu0 %932
        %936 = vset.pattern.permute.xlu0 0
        %937 = vperm.xlu0 %936, %v519
        %v938 = vpop.permute.xlu0 %937
        %941 = vset.pattern.permute.xlu0 0
        %942 = vperm.xlu0 %941, %v520
        %v943 = vpop.permute.xlu0 %942
        %946 = vset.pattern.permute.xlu0 0
        %947 = vperm.xlu0 %946, %v521
        %v948 = vpop.permute.xlu0 %947
        %951 = vset.pattern.permute.xlu0 0
        %952 = vperm.xlu0 %951, %v522
        %v953 = vpop.permute.xlu0 %952
        %956 = vset.pattern.permute.xlu0 0
        %957 = vperm.xlu0 %956, %v523
        %v958 = vpop.permute.xlu0 %957
        %961 = vset.pattern.permute.xlu0 0
        %962 = vperm.xlu0 %961, %v524
        %v963 = vpop.permute.xlu0 %962
        %966 = vset.pattern.permute.xlu0 0
        %967 = vperm.xlu0 %966, %v525
        %v968 = vpop.permute.xlu0 %967
        %971 = vset.pattern.permute.xlu0 0
        %972 = vperm.xlu0 %971, %v526
        %v973 = vpop.permute.xlu0 %972
        %976 = vset.pattern.permute.xlu0 0
        %977 = vperm.xlu0 %976, %v527
        %v978 = vpop.permute.xlu0 %977
        %981 = vset.pattern.permute.xlu0 0
        %982 = vperm.xlu0 %981, %v528
        %v983 = vpop.permute.xlu0 %982
        %986 = vset.pattern.permute.xlu0 0
        %987 = vperm.xlu0 %986, %v529
        %v988 = vpop.permute.xlu0 %987
        %991 = vset.pattern.permute.xlu0 0
        %992 = vperm.xlu0 %991, %v530
        %v993 = vpop.permute.xlu0 %992
        %996 = vset.pattern.permute.xlu0 0
        %997 = vperm.xlu0 %996, %v531
        %v998 = vpop.permute.xlu0 %997
        %1001 = vset.pattern.permute.xlu0 0
        %1002 = vperm.xlu0 %1001, %v532
        %v1003 = vpop.permute.xlu0 %1002
        %1006 = vset.pattern.permute.xlu0 0
        %1007 = vperm.xlu0 %1006, %v533
        %v1008 = vpop.permute.xlu0 %1007
        %1011 = vset.pattern.permute.xlu0 0
        %1012 = vperm.xlu0 %1011, %v534
        %v1013 = vpop.permute.xlu0 %1012
        %1016 = vset.pattern.permute.xlu0 0
        %1017 = vperm.xlu0 %1016, %v535
        %v1018 = vpop.permute.xlu0 %1017
        %1021 = vset.pattern.permute.xlu0 0
        %1022 = vperm.xlu0 %1021, %v536
        %v1023 = vpop.permute.xlu0 %1022
        %1026 = vset.pattern.permute.xlu0 0
        %1027 = vperm.xlu0 %1026, %v537
        %v1028 = vpop.permute.xlu0 %1027
        %1031 = vset.pattern.permute.xlu0 0
        %1032 = vperm.xlu0 %1031, %v538
        %v1033 = vpop.permute.xlu0 %1032
        %1036 = vset.pattern.permute.xlu0 0
        %1037 = vperm.xlu0 %1036, %v539
        %v1038 = vpop.permute.xlu0 %1037
        %1041 = vset.pattern.permute.xlu0 0
        %1042 = vperm.xlu0 %1041, %v540
        %v1043 = vpop.permute.xlu0 %1042
        %1046 = vset.pattern.permute.xlu0 0
        %1047 = vperm.xlu0 %1046, %v541
        %v1048 = vpop.permute.xlu0 %1047
        %1051 = vset.pattern.permute.xlu0 0
        %1052 = vperm.xlu0 %1051, %v542
        %v1053 = vpop.permute.xlu0 %1052
        %1056 = vset.pattern.permute.xlu0 0
        %1057 = vperm.xlu0 %1056, %v543
        %v1058 = vpop.permute.xlu0 %1057
        %1061 = vset.pattern.permute.xlu0 0
        %1062 = vperm.xlu0 %1061, %v544
        %v1063 = vpop.permute.xlu0 %1062
        %1066 = vset.pattern.permute.xlu0 0
        %1067 = vperm.xlu0 %1066, %v545
        %v1068 = vpop.permute.xlu0 %1067
        %1071 = vset.pattern.permute.xlu0 0
        %1072 = vperm.xlu0 %1071, %v546
        %v1073 = vpop.permute.xlu0 %1072
        %1076 = vset.pattern.permute.xlu0 0
        %1077 = vperm.xlu0 %1076, %v547
        %v1078 = vpop.permute.xlu0 %1077
        %1081 = vset.pattern.permute.xlu0 0
        %1082 = vperm.xlu0 %1081, %v548
        %v1083 = vpop.permute.xlu0 %1082
        %1086 = vset.pattern.permute.xlu0 0
        %1087 = vperm.xlu0 %1086, %v549
        %v1088 = vpop.permute.xlu0 %1087
        %1091 = vset.pattern.permute.xlu0 0
        %1092 = vperm.xlu0 %1091, %v550
        %v1093 = vpop.permute.xlu0 %1092
        %1096 = vset.pattern.permute.xlu0 0
        %1097 = vperm.xlu0 %1096, %v551
        %v1098 = vpop.permute.xlu0 %1097
        %1101 = vset.pattern.permute.xlu0 0
        %1102 = vperm.xlu0 %1101, %v552
        %v1103 = vpop.permute.xlu0 %1102
        %1106 = vset.pattern.permute.xlu0 0
        %1107 = vperm.xlu0 %1106, %v553
        %v1108 = vpop.permute.xlu0 %1107
        %1111 = vset.pattern.permute.xlu0 0
        %1112 = vperm.xlu0 %1111, %v554
        %v1113 = vpop.permute.xlu0 %1112
        %v1227 = vunpack.c.l.b16 %v331
        %v1228 = vunpack.c.l.b16 %v332
        %v1229 = vunpack.c.l.b16 %v333
        %v1230 = vunpack.c.l.b16 %v334
        %v1231 = vunpack.c.l.b16 %v335
        %v1232 = vunpack.c.l.b16 %v336
        %v1233 = vunpack.c.l.b16 %v337
        %v1234 = vunpack.c.l.b16 %v338
        %v1235 = vunpack.c.l.b16 %v339
        %v1236 = vunpack.c.l.b16 %v340
        %v1237 = vunpack.c.l.b16 %v341
        %v1238 = vunpack.c.l.b16 %v342
        %v1239 = vunpack.c.l.b16 %v343
        %v1240 = vunpack.c.l.b16 %v344
        %v1241 = vunpack.c.l.b16 %v345
        %v1242 = vunpack.c.l.b16 %v346
        %v1243 = vunpack.c.l.b16 %v347
        %v1244 = vunpack.c.l.b16 %v348
        %v1245 = vunpack.c.l.b16 %v349
        %v1246 = vunpack.c.l.b16 %v350
        %v1247 = vunpack.c.l.b16 %v351
        %v1248 = vunpack.c.l.b16 %v352
        %v1249 = vunpack.c.l.b16 %v353
        %v1250 = vunpack.c.l.b16 %v354
        %v1251 = vunpack.c.l.b16 %v355
        %v1252 = vunpack.c.l.b16 %v356
        %v1253 = vunpack.c.l.b16 %v357
        %v1254 = vunpack.c.l.b16 %v358
        %v1255 = vunpack.c.l.b16 %v359
        %v1256 = vunpack.c.l.b16 %v360
        %v1257 = vunpack.c.l.b16 %v361
        %v1258 = vunpack.c.l.b16 %v362
        %v1259 = vunpack.c.l.b16 %v363
        %v1260 = vunpack.c.l.b16 %v364
        %v1261 = vunpack.c.l.b16 %v365
        %v1262 = vunpack.c.l.b16 %v366
        %v1263 = vunpack.c.l.b16 %v367
        %v1264 = vunpack.c.l.b16 %v368
        %v1265 = vunpack.c.l.b16 %v369
        %v1266 = vunpack.c.l.b16 %v370
        %v1267 = vunpack.c.l.b16 %v371
        %v1268 = vunpack.c.l.b16 %v372
        %v1269 = vunpack.c.l.b16 %v373
        %v1270 = vunpack.c.l.b16 %v374
        %v1271 = vunpack.c.l.b16 %v375
        %v1272 = vunpack.c.l.b16 %v376
        %v1273 = vunpack.c.l.b16 %v377
        %v1274 = vunpack.c.l.b16 %v378
        %v1275 = vunpack.c.l.b16 %v379
        %v1276 = vunpack.c.l.b16 %v380
        %v1277 = vunpack.c.l.b16 %v381
        %v1278 = vunpack.c.l.b16 %v382
        %v1279 = vunpack.c.l.b16 %v383
        %v1280 = vunpack.c.l.b16 %v384
        %v1281 = vunpack.c.l.b16 %v385
        %v1282 = vunpack.c.l.b16 %v386
        %v1283 = vunpack.c.l.b16 %v387
        %v1284 = vunpack.c.l.b16 %v388
        %v1285 = vunpack.c.l.b16 %v389
        %v1286 = vunpack.c.l.b16 %v390
        %v1287 = vunpack.c.l.b16 %v391
        %v1288 = vunpack.c.l.b16 %v392
        %v1289 = vunpack.c.l.b16 %v393
        %v1290 = vunpack.c.l.b16 %v394
        %v1291 = vunpack.c.l.b16 %v395
        %v1292 = vunpack.c.l.b16 %v396
        %v1293 = vunpack.c.l.b16 %v397
        %v1294 = vunpack.c.l.b16 %v398
        %v1295 = vunpack.c.l.b16 %v399
        %v1296 = vunpack.c.l.b16 %v400
        %v1297 = vunpack.c.l.b16 %v401
        %v1298 = vunpack.c.l.b16 %v402
        %v1299 = vunpack.c.l.b16 %v403
        %v1300 = vunpack.c.l.b16 %v404
        %v1301 = vunpack.c.l.b16 %v405
        %v1302 = vunpack.c.l.b16 %v406
        %v1303 = vunpack.c.l.b16 %v407
        %v1304 = vunpack.c.l.b16 %v408
        %v1305 = vunpack.c.l.b16 %v409
        %v1306 = vunpack.c.l.b16 %v410
        %v1307 = vunpack.c.l.b16 %v411
        %v1308 = vunpack.c.l.b16 %v412
        %v1309 = vunpack.c.l.b16 %v413
        %v1310 = vunpack.c.l.b16 %v414
        %v1311 = vunpack.c.l.b16 %v415
        %v1312 = vunpack.c.l.b16 %v416
        %v1313 = vunpack.c.l.b16 %v417
        %v1314 = vunpack.c.l.b16 %v418
        %v1315 = vunpack.c.l.b16 %v419
        %v1316 = vunpack.c.l.b16 %v420
        %v1317 = vunpack.c.l.b16 %v421
        %v1318 = vunpack.c.l.b16 %v422
        %v1319 = vunpack.c.l.b16 %v423
        %v1320 = vunpack.c.l.b16 %v424
        %v1321 = vunpack.c.l.b16 %v425
        %v1322 = vunpack.c.l.b16 %v426
        %v1323 = vunpack.c.l.b16 %v427
        %v1324 = vunpack.c.l.b16 %v428
        %v1325 = vunpack.c.l.b16 %v429
        %v1326 = vunpack.c.l.b16 %v430
        %v1327 = vunpack.c.l.b16 %v431
        %v1328 = vunpack.c.l.b16 %v432
        %v1329 = vunpack.c.l.b16 %v433
        %v1330 = vunpack.c.l.b16 %v434
        %v1331 = vunpack.c.l.b16 %v435
        %v1332 = vunpack.c.l.b16 %v436
        %v1333 = vunpack.c.l.b16 %v437
        %v1334 = vunpack.c.l.b16 %v438
        %v1335 = vunpack.c.l.b16 %v439
        %v1336 = vunpack.c.l.b16 %v440
        %v1337 = vunpack.c.l.b16 %v441
        %v1338 = vunpack.c.l.b16 %v442
        %v1339 = vpack.c.b16 %v1228, %v1227
        %v1340 = vpack.c.b16 %v1230, %v1229
        %v1341 = vpack.c.b16 %v1232, %v1231
        %v1342 = vpack.c.b16 %v1234, %v1233
        %v1343 = vpack.c.b16 %v1236, %v1235
        %v1344 = vpack.c.b16 %v1238, %v1237
        %v1345 = vpack.c.b16 %v1240, %v1239
        %v1346 = vpack.c.b16 %v1242, %v1241
        %v1347 = vpack.c.b16 %v1244, %v1243
        %v1348 = vpack.c.b16 %v1246, %v1245
        %v1349 = vpack.c.b16 %v1248, %v1247
        %v1350 = vpack.c.b16 %v1250, %v1249
        %v1351 = vpack.c.b16 %v1252, %v1251
        %v1352 = vpack.c.b16 %v1254, %v1253
        %v1353 = vpack.c.b16 %v1256, %v1255
        %v1354 = vpack.c.b16 %v1258, %v1257
        %v1355 = vpack.c.b16 %v1260, %v1259
        %v1356 = vpack.c.b16 %v1262, %v1261
        %v1357 = vpack.c.b16 %v1264, %v1263
        %v1358 = vpack.c.b16 %v1266, %v1265
        %v1359 = vpack.c.b16 %v1268, %v1267
        %v1360 = vpack.c.b16 %v1270, %v1269
        %v1361 = vpack.c.b16 %v1272, %v1271
        %v1362 = vpack.c.b16 %v1274, %v1273
        %v1363 = vpack.c.b16 %v1276, %v1275
        %v1364 = vpack.c.b16 %v1278, %v1277
        %v1365 = vpack.c.b16 %v1280, %v1279
        %v1366 = vpack.c.b16 %v1282, %v1281
        %v1367 = vpack.c.b16 %v1284, %v1283
        %v1368 = vpack.c.b16 %v1286, %v1285
        %v1369 = vpack.c.b16 %v1288, %v1287
        %v1370 = vpack.c.b16 %v1290, %v1289
        %v1371 = vpack.c.b16 %v1292, %v1291
        %v1372 = vpack.c.b16 %v1294, %v1293
        %v1373 = vpack.c.b16 %v1296, %v1295
        %v1374 = vpack.c.b16 %v1298, %v1297
        %v1375 = vpack.c.b16 %v1300, %v1299
        %v1376 = vpack.c.b16 %v1302, %v1301
        %v1377 = vpack.c.b16 %v1304, %v1303
        %v1378 = vpack.c.b16 %v1306, %v1305
        %v1379 = vpack.c.b16 %v1308, %v1307
        %v1380 = vpack.c.b16 %v1310, %v1309
        %v1381 = vpack.c.b16 %v1312, %v1311
        %v1382 = vpack.c.b16 %v1314, %v1313
        %v1383 = vpack.c.b16 %v1316, %v1315
        %v1384 = vpack.c.b16 %v1318, %v1317
        %v1385 = vpack.c.b16 %v1320, %v1319
        %v1386 = vpack.c.b16 %v1322, %v1321
        %v1387 = vpack.c.b16 %v1324, %v1323
        %v1388 = vpack.c.b16 %v1326, %v1325
        %v1389 = vpack.c.b16 %v1328, %v1327
        %v1390 = vpack.c.b16 %v1330, %v1329
        %v1391 = vpack.c.b16 %v1332, %v1331
        %v1392 = vpack.c.b16 %v1334, %v1333
        %v1393 = vpack.c.b16 %v1336, %v1335
        %v1394 = vpack.c.b16 %v1338, %v1337
        %vm1395 = vcmask 916480
        %v1397 = vsel %vm1395, %v1339, 0
        %v1400 = vsel %vm1395, %v1340, 0
        %v1403 = vsel %vm1395, %v1341, 0
        %v1406 = vsel %vm1395, %v1342, 0
        %v1409 = vsel %vm1395, %v1343, 0
        %v1412 = vsel %vm1395, %v1344, 0
        %v1415 = vsel %vm1395, %v1345, 0
        %v1418 = vsel %vm1395, %v1346, 0
        %v1421 = vsel %vm1395, %v1347, 0
        %v1424 = vsel %vm1395, %v1348, 0
        %v1427 = vsel %vm1395, %v1349, 0
        %v1430 = vsel %vm1395, %v1350, 0
        %v1433 = vsel %vm1395, %v1351, 0
        %v1436 = vsel %vm1395, %v1352, 0
        %v1439 = vsel %vm1395, %v1353, 0
        %v1442 = vsel %vm1395, %v1354, 0
        %v1445 = vsel %vm1395, %v1355, 0
        %v1448 = vsel %vm1395, %v1356, 0
        %v1451 = vsel %vm1395, %v1357, 0
        %v1454 = vsel %vm1395, %v1358, 0
        %v1457 = vsel %vm1395, %v1359, 0
        %v1460 = vsel %vm1395, %v1360, 0
        %v1463 = vsel %vm1395, %v1361, 0
        %v1466 = vsel %vm1395, %v1362, 0
        %v1469 = vsel %vm1395, %v1363, 0
        %v1472 = vsel %vm1395, %v1364, 0
        %v1475 = vsel %vm1395, %v1365, 0
        %v1478 = vsel %vm1395, %v1366, 0
        %v1481 = vsel %vm1395, %v1367, 0
        %v1484 = vsel %vm1395, %v1368, 0
        %v1487 = vsel %vm1395, %v1369, 0
        %v1490 = vsel %vm1395, %v1370, 0
        %v1493 = vsel %vm1395, %v1371, 0
        %v1496 = vsel %vm1395, %v1372, 0
        %v1499 = vsel %vm1395, %v1373, 0
        %v1502 = vsel %vm1395, %v1374, 0
        %v1505 = vsel %vm1395, %v1375, 0
        %v1508 = vsel %vm1395, %v1376, 0
        %v1511 = vsel %vm1395, %v1377, 0
        %v1514 = vsel %vm1395, %v1378, 0
        %v1517 = vsel %vm1395, %v1379, 0
        %v1520 = vsel %vm1395, %v1380, 0
        %v1523 = vsel %vm1395, %v1381, 0
        %v1526 = vsel %vm1395, %v1382, 0
        %v1529 = vsel %vm1395, %v1383, 0
        %v1532 = vsel %vm1395, %v1384, 0
        %v1535 = vsel %vm1395, %v1385, 0
        %v1538 = vsel %vm1395, %v1386, 0
        %v1541 = vsel %vm1395, %v1387, 0
        %v1544 = vsel %vm1395, %v1388, 0
        %v1547 = vsel %vm1395, %v1389, 0
        %v1550 = vsel %vm1395, %v1390, 0
        %v1553 = vsel %vm1395, %v1391, 0
        %v1556 = vsel %vm1395, %v1392, 0
        %v1559 = vsel %vm1395, %v1393, 0
        %v1562 = vsel %vm1395, %v1394, 0
        %v1565 = vsel %vm1395, %v323, 0
        %v1568 = vsel %vm1395, %v324, 0
        %v1571 = vsel %vm1395, %v325, 0
        %v1574 = vsel %vm1395, %v326, 0
        %v1577 = vsel %vm1395, %v327, 0
        %v1580 = vsel %vm1395, %v328, 0
        %v1583 = vsel %vm1395, %v329, 0
        %v1586 = vsel %vm1395, %v330, 0
        %1588 = vmatprep.subr.bf16.mxu0 0
        %1589 = vmatpush1.bf16.xpose.msra.mxu0 %v1565
        %1590 = vmatprep.subr.bf16.mxu0 0
        %1591 = vmatpush1.bf16.xpose.msra.mxu0 %v1568
        %1592 = vmatprep.subr.bf16.mxu0 0
        %1593 = vmatpush1.bf16.xpose.msra.mxu0 %v1571
        %1594 = vmatprep.subr.bf16.mxu0 0
        %1595 = vmatpush1.bf16.xpose.msra.mxu0 %v1574
        %1596 = vmatprep.subr.bf16.mxu0 0
        %1597 = vmatpush1.bf16.xpose.msra.mxu0 %v1577
        %1598 = vmatprep.subr.bf16.mxu0 0
        %1599 = vmatpush1.bf16.xpose.msra.mxu0 %v1580
        %1600 = vmatprep.subr.bf16.mxu0 0
        %1601 = vmatpush1.bf16.xpose.msra.mxu0 %v1583
        %1602 = vmatprep.subr.bf16.mxu0 0
        %1603 = vmatpush1.bf16.xpose.msra.mxu0 %v1586
        %1604 = vmatprep.subr.bf16.mxu0 0
        %1605 = vmatpush1.bf16.xpose.msra.mxu0 0
        %1606 = vmatprep.subr.bf16.mxu0 0
        %1607 = vmatpush1.bf16.xpose.msra.mxu0 0
        %1608 = vmatprep.subr.bf16.mxu0 0
        %1609 = vmatpush1.bf16.xpose.msra.mxu0 0
        %1610 = vmatprep.subr.bf16.mxu0 0
        %1611 = vmatpush1.bf16.xpose.msra.mxu0 0
        %1612 = vmatprep.subr.bf16.mxu0 0
        %1613 = vmatpush1.bf16.xpose.msra.mxu0 0
        %1614 = vmatprep.subr.bf16.mxu0 0
        %1615 = vmatpush1.bf16.xpose.msra.mxu0 0
        %1616 = vmatprep.subr.bf16.mxu0 0
        %1617 = vmatpush1.bf16.xpose.msra.mxu0 0
        %1618 = vmatprep.subr.bf16.mxu0 0
        %1619 = vmatpush1.bf16.xpose.msra.mxu0 0
        %1620 = vmatprep.mubr.bf16.mxu0 0
        %1621 = vmatmul.mubr.bf16.gmra.mrb[0].mxu0 %v1397
        %v1622 = vpop.f32.mrb[0].mxu0
        %v1623 = vadd.f32 %v558, %v1622
        %v1624 = vpop.f32.mrb[0].mxu0
        %v1625 = vpop.f32.mrb[0].mxu0
        %v1626 = vadd.f32 %v563, %v1625
        %v1627 = vpop.f32.mrb[0].mxu0
        %1628 = vmatprep.mubr.bf16.mxu0 0
        %1629 = vmatmul.mubr.bf16.gmra.mrb[0].mxu0 %v1400
        %v1630 = vpop.f32.mrb[0].mxu0
        %v1631 = vadd.f32 %v568, %v1630
        %v1632 = vpop.f32.mrb[0].mxu0
        %v1633 = vpop.f32.mrb[0].mxu0
        %v1634 = vadd.f32 %v573, %v1633
        %v1635 = vpop.f32.mrb[0].mxu0
        %1636 = vmatprep.mubr.bf16.mxu0 0
        %1637 = vmatmul.mubr.bf16.gmra.mrb[0].mxu0 %v1403
        %v1638 = vpop.f32.mrb[0].mxu0
        %v1639 = vadd.f32 %v578, %v1638
        %v1640 = vpop.f32.mrb[0].mxu0
        %v1641 = vpop.f32.mrb[0].mxu0
        %v1642 = vadd.f32 %v583, %v1641
        %v1643 = vpop.f32.mrb[0].mxu0
        %1644 = vmatprep.mubr.bf16.mxu0 0
        %1645 = vmatmul.mubr.bf16.gmra.mrb[0].mxu0 %v1406
        %v1646 = vpop.f32.mrb[0].mxu0
        %v1647 = vadd.f32 %v588, %v1646
        %v1648 = vpop.f32.mrb[0].mxu0
        %v1649 = vpop.f32.mrb[0].mxu0
        %v1650 = vadd.f32 %v593, %v1649
        %v1651 = vpop.f32.mrb[0].mxu0
        %1652 = vmatprep.mubr.bf16.mxu0 0
        %1653 = vmatmul.mubr.bf16.gmra.mrb[0].mxu0 %v1409
        %v1654 = vpop.f32.mrb[0].mxu0
        %v1655 = vadd.f32 %v598, %v1654
        %v1656 = vpop.f32.mrb[0].mxu0
        %v1657 = vpop.f32.mrb[0].mxu0
        %v1658 = vadd.f32 %v603, %v1657
        %v1659 = vpop.f32.mrb[0].mxu0
        %1660 = vmatprep.mubr.bf16.mxu0 0
        %1661 = vmatmul.mubr.bf16.gmra.mrb[0].mxu0 %v1412
        %v1662 = vpop.f32.mrb[0].mxu0
        %v1663 = vadd.f32 %v608, %v1662
        %v1664 = vpop.f32.mrb[0].mxu0
        %v1665 = vpop.f32.mrb[0].mxu0
        %v1666 = vadd.f32 %v613, %v1665
        %v1667 = vpop.f32.mrb[0].mxu0
        %1668 = vmatprep.mubr.bf16.mxu0 0
        %1669 = vmatmul.mubr.bf16.gmra.mrb[0].mxu0 %v1415
        %v1670 = vpop.f32.mrb[0].mxu0
        %v1671 = vadd.f32 %v618, %v1670
        %v1672 = vpop.f32.mrb[0].mxu0
        %v1673 = vpop.f32.mrb[0].mxu0
        %v1674 = vadd.f32 %v623, %v1673
        %v1675 = vpop.f32.mrb[0].mxu0
        %1676 = vmatprep.mubr.bf16.mxu0 0
        %1677 = vmatmul.mubr.bf16.gmra.mrb[0].mxu0 %v1418
        %v1678 = vpop.f32.mrb[0].mxu0
        %v1679 = vadd.f32 %v628, %v1678
        %v1680 = vpop.f32.mrb[0].mxu0
        %v1681 = vpop.f32.mrb[0].mxu0
        %v1682 = vadd.f32 %v633, %v1681
        %v1683 = vpop.f32.mrb[0].mxu0
        %1684 = vmatprep.mubr.bf16.mxu0 0
        %1685 = vmatmul.mubr.bf16.gmra.mrb[0].mxu0 %v1421
        %v1686 = vpop.f32.mrb[0].mxu0
        %v1687 = vadd.f32 %v638, %v1686
        %v1688 = vpop.f32.mrb[0].mxu0
        %v1689 = vpop.f32.mrb[0].mxu0
        %v1690 = vadd.f32 %v643, %v1689
        %v1691 = vpop.f32.mrb[0].mxu0
        %1692 = vmatprep.mubr.bf16.mxu0 0
        %1693 = vmatmul.mubr.bf16.gmra.mrb[0].mxu0 %v1424
        %v1694 = vpop.f32.mrb[0].mxu0
        %v1695 = vadd.f32 %v648, %v1694
        %v1696 = vpop.f32.mrb[0].mxu0
        %v1697 = vpop.f32.mrb[0].mxu0
        %v1698 = vadd.f32 %v653, %v1697
        %v1699 = vpop.f32.mrb[0].mxu0
        %1700 = vmatprep.mubr.bf16.mxu0 0
        %1701 = vmatmul.mubr.bf16.gmra.mrb[0].mxu0 %v1427
        %v1702 = vpop.f32.mrb[0].mxu0
        %v1703 = vadd.f32 %v658, %v1702
        %v1704 = vpop.f32.mrb[0].mxu0
        %v1705 = vpop.f32.mrb[0].mxu0
        %v1706 = vadd.f32 %v663, %v1705
        %v1707 = vpop.f32.mrb[0].mxu0
        %1708 = vmatprep.mubr.bf16.mxu0 0
        %1709 = vmatmul.mubr.bf16.gmra.mrb[0].mxu0 %v1430
        %v1710 = vpop.f32.mrb[0].mxu0
        %v1711 = vadd.f32 %v668, %v1710
        %v1712 = vpop.f32.mrb[0].mxu0
        %v1713 = vpop.f32.mrb[0].mxu0
        %v1714 = vadd.f32 %v673, %v1713
        %v1715 = vpop.f32.mrb[0].mxu0
        %1716 = vmatprep.mubr.bf16.mxu0 0
        %1717 = vmatmul.mubr.bf16.gmra.mrb[0].mxu0 %v1433
        %v1718 = vpop.f32.mrb[0].mxu0
        %v1719 = vadd.f32 %v678, %v1718
        %v1720 = vpop.f32.mrb[0].mxu0
        %v1721 = vpop.f32.mrb[0].mxu0
        %v1722 = vadd.f32 %v683, %v1721
        %v1723 = vpop.f32.mrb[0].mxu0
        %1724 = vmatprep.mubr.bf16.mxu0 0
        %1725 = vmatmul.mubr.bf16.gmra.mrb[0].mxu0 %v1436
        %v1726 = vpop.f32.mrb[0].mxu0
        %v1727 = vadd.f32 %v688, %v1726
        %v1728 = vpop.f32.mrb[0].mxu0
        %v1729 = vpop.f32.mrb[0].mxu0
        %v1730 = vadd.f32 %v693, %v1729
        %v1731 = vpop.f32.mrb[0].mxu0
        %1732 = vmatprep.mubr.bf16.mxu0 0
        %1733 = vmatmul.mubr.bf16.gmra.mrb[0].mxu0 %v1439
        %v1734 = vpop.f32.mrb[0].mxu0
        %v1735 = vadd.f32 %v698, %v1734
        %v1736 = vpop.f32.mrb[0].mxu0
        %v1737 = vpop.f32.mrb[0].mxu0
        %v1738 = vadd.f32 %v703, %v1737
        %v1739 = vpop.f32.mrb[0].mxu0
        %1740 = vmatprep.mubr.bf16.mxu0 0
        %1741 = vmatmul.mubr.bf16.gmra.mrb[0].mxu0 %v1442
        %v1742 = vpop.f32.mrb[0].mxu0
        %v1743 = vadd.f32 %v708, %v1742
        %v1744 = vpop.f32.mrb[0].mxu0
        %v1745 = vpop.f32.mrb[0].mxu0
        %v1746 = vadd.f32 %v713, %v1745
        %v1747 = vpop.f32.mrb[0].mxu0
        %1748 = vmatprep.mubr.bf16.mxu0 0
        %1749 = vmatmul.mubr.bf16.gmra.mrb[0].mxu0 %v1445
        %v1750 = vpop.f32.mrb[0].mxu0
        %v1751 = vadd.f32 %v718, %v1750
        %v1752 = vpop.f32.mrb[0].mxu0
        %v1753 = vpop.f32.mrb[0].mxu0
        %v1754 = vadd.f32 %v723, %v1753
        %v1755 = vpop.f32.mrb[0].mxu0
        %1756 = vmatprep.mubr.bf16.mxu0 0
        %1757 = vmatmul.mubr.bf16.gmra.mrb[0].mxu0 %v1448
        %v1758 = vpop.f32.mrb[0].mxu0
        %v1759 = vadd.f32 %v728, %v1758
        %v1760 = vpop.f32.mrb[0].mxu0
        %v1761 = vpop.f32.mrb[0].mxu0
        %v1762 = vadd.f32 %v733, %v1761
        %v1763 = vpop.f32.mrb[0].mxu0
        %1764 = vmatprep.mubr.bf16.mxu0 0
        %1765 = vmatmul.mubr.bf16.gmra.mrb[0].mxu0 %v1451
        %v1766 = vpop.f32.mrb[0].mxu0
        %v1767 = vadd.f32 %v738, %v1766
        %v1768 = vpop.f32.mrb[0].mxu0
        %v1769 = vpop.f32.mrb[0].mxu0
        %v1770 = vadd.f32 %v743, %v1769
        %v1771 = vpop.f32.mrb[0].mxu0
        %1772 = vmatprep.mubr.bf16.mxu0 0
        %1773 = vmatmul.mubr.bf16.gmra.mrb[0].mxu0 %v1454
        %v1774 = vpop.f32.mrb[0].mxu0
        %v1775 = vadd.f32 %v748, %v1774
        %v1776 = vpop.f32.mrb[0].mxu0
        %v1777 = vpop.f32.mrb[0].mxu0
        %v1778 = vadd.f32 %v753, %v1777
        %v1779 = vpop.f32.mrb[0].mxu0
        %1780 = vmatprep.mubr.bf16.mxu0 0
        %1781 = vmatmul.mubr.bf16.gmra.mrb[0].mxu0 %v1457
        %v1782 = vpop.f32.mrb[0].mxu0
        %v1783 = vadd.f32 %v758, %v1782
        %v1784 = vpop.f32.mrb[0].mxu0
        %v1785 = vpop.f32.mrb[0].mxu0
        %v1786 = vadd.f32 %v763, %v1785
        %v1787 = vpop.f32.mrb[0].mxu0
        %1788 = vmatprep.mubr.bf16.mxu0 0
        %1789 = vmatmul.mubr.bf16.gmra.mrb[0].mxu0 %v1460
        %v1790 = vpop.f32.mrb[0].mxu0
        %v1791 = vadd.f32 %v768, %v1790
        %v1792 = vpop.f32.mrb[0].mxu0
        %v1793 = vpop.f32.mrb[0].mxu0
        %v1794 = vadd.f32 %v773, %v1793
        %v1795 = vpop.f32.mrb[0].mxu0
        %1796 = vmatprep.mubr.bf16.mxu0 0
        %1797 = vmatmul.mubr.bf16.gmra.mrb[0].mxu0 %v1463
        %v1798 = vpop.f32.mrb[0].mxu0
        %v1799 = vadd.f32 %v778, %v1798
        %v1800 = vpop.f32.mrb[0].mxu0
        %v1801 = vpop.f32.mrb[0].mxu0
        %v1802 = vadd.f32 %v783, %v1801
        %v1803 = vpop.f32.mrb[0].mxu0
        %1804 = vmatprep.mubr.bf16.mxu0 0
        %1805 = vmatmul.mubr.bf16.gmra.mrb[0].mxu0 %v1466
        %v1806 = vpop.f32.mrb[0].mxu0
        %v1807 = vadd.f32 %v788, %v1806
        %v1808 = vpop.f32.mrb[0].mxu0
        %v1809 = vpop.f32.mrb[0].mxu0
        %v1810 = vadd.f32 %v793, %v1809
        %v1811 = vpop.f32.mrb[0].mxu0
        %1812 = vmatprep.mubr.bf16.mxu0 0
        %1813 = vmatmul.mubr.bf16.gmra.mrb[0].mxu0 %v1469
        %v1814 = vpop.f32.mrb[0].mxu0
        %v1815 = vadd.f32 %v798, %v1814
        %v1816 = vpop.f32.mrb[0].mxu0
        %v1817 = vpop.f32.mrb[0].mxu0
        %v1818 = vadd.f32 %v803, %v1817
        %v1819 = vpop.f32.mrb[0].mxu0
        %1820 = vmatprep.mubr.bf16.mxu0 0
        %1821 = vmatmul.mubr.bf16.gmra.mrb[0].mxu0 %v1472
        %v1822 = vpop.f32.mrb[0].mxu0
        %v1823 = vadd.f32 %v808, %v1822
        %v1824 = vpop.f32.mrb[0].mxu0
        %v1825 = vpop.f32.mrb[0].mxu0
        %v1826 = vadd.f32 %v813, %v1825
        %v1827 = vpop.f32.mrb[0].mxu0
        %1828 = vmatprep.mubr.bf16.mxu0 0
        %1829 = vmatmul.mubr.bf16.gmra.mrb[0].mxu0 %v1475
        %v1830 = vpop.f32.mrb[0].mxu0
        %v1831 = vadd.f32 %v818, %v1830
        %v1832 = vpop.f32.mrb[0].mxu0
        %v1833 = vpop.f32.mrb[0].mxu0
        %v1834 = vadd.f32 %v823, %v1833
        %v1835 = vpop.f32.mrb[0].mxu0
        %1836 = vmatprep.mubr.bf16.mxu0 0
        %1837 = vmatmul.mubr.bf16.gmra.mrb[0].mxu0 %v1478
        %v1838 = vpop.f32.mrb[0].mxu0
        %v1839 = vadd.f32 %v828, %v1838
        %v1840 = vpop.f32.mrb[0].mxu0
        %v1841 = vpop.f32.mrb[0].mxu0
        %v1842 = vadd.f32 %v833, %v1841
        %v1843 = vpop.f32.mrb[0].mxu0
        %1844 = vmatprep.mubr.bf16.mxu0 0
        %1845 = vmatmul.mubr.bf16.gmra.mrb[0].mxu0 %v1481
        %v1846 = vpop.f32.mrb[0].mxu0
        %v1847 = vadd.f32 %v838, %v1846
        %v1848 = vpop.f32.mrb[0].mxu0
        %v1849 = vpop.f32.mrb[0].mxu0
        %v1850 = vadd.f32 %v843, %v1849
        %v1851 = vpop.f32.mrb[0].mxu0
        %1852 = vmatprep.mubr.bf16.mxu0 0
        %1853 = vmatmul.mubr.bf16.gmra.mrb[0].mxu0 %v1484
        %v1854 = vpop.f32.mrb[0].mxu0
        %v1855 = vadd.f32 %v848, %v1854
        %v1856 = vpop.f32.mrb[0].mxu0
        %v1857 = vpop.f32.mrb[0].mxu0
        %v1858 = vadd.f32 %v853, %v1857
        %v1859 = vpop.f32.mrb[0].mxu0
        %1860 = vmatprep.mubr.bf16.mxu0 0
        %1861 = vmatmul.mubr.bf16.gmra.mrb[0].mxu0 %v1487
        %v1862 = vpop.f32.mrb[0].mxu0
        %v1863 = vadd.f32 %v858, %v1862
        %v1864 = vpop.f32.mrb[0].mxu0
        %v1865 = vpop.f32.mrb[0].mxu0
        %v1866 = vadd.f32 %v863, %v1865
        %v1867 = vpop.f32.mrb[0].mxu0
        %1868 = vmatprep.mubr.bf16.mxu0 0
        %1869 = vmatmul.mubr.bf16.gmra.mrb[0].mxu0 %v1490
        %v1870 = vpop.f32.mrb[0].mxu0
        %v1871 = vadd.f32 %v868, %v1870
        %v1872 = vpop.f32.mrb[0].mxu0
        %v1873 = vpop.f32.mrb[0].mxu0
        %v1874 = vadd.f32 %v873, %v1873
        %v1875 = vpop.f32.mrb[0].mxu0
        %1876 = vmatprep.mubr.bf16.mxu0 0
        %1877 = vmatmul.mubr.bf16.gmra.mrb[0].mxu0 %v1493
        %v1878 = vpop.f32.mrb[0].mxu0
        %v1879 = vadd.f32 %v878, %v1878
        %v1880 = vpop.f32.mrb[0].mxu0
        %v1881 = vpop.f32.mrb[0].mxu0
        %v1882 = vadd.f32 %v883, %v1881
        %v1883 = vpop.f32.mrb[0].mxu0
        %1884 = vmatprep.mubr.bf16.mxu0 0
        %1885 = vmatmul.mubr.bf16.gmra.mrb[0].mxu0 %v1496
        %v1886 = vpop.f32.mrb[0].mxu0
        %v1887 = vadd.f32 %v888, %v1886
        %v1888 = vpop.f32.mrb[0].mxu0
        %v1889 = vpop.f32.mrb[0].mxu0
        %v1890 = vadd.f32 %v893, %v1889
        %v1891 = vpop.f32.mrb[0].mxu0
        %1892 = vmatprep.mubr.bf16.mxu0 0
        %1893 = vmatmul.mubr.bf16.gmra.mrb[0].mxu0 %v1499
        %v1894 = vpop.f32.mrb[0].mxu0
        %v1895 = vadd.f32 %v898, %v1894
        %v1896 = vpop.f32.mrb[0].mxu0
        %v1897 = vpop.f32.mrb[0].mxu0
        %v1898 = vadd.f32 %v903, %v1897
        %v1899 = vpop.f32.mrb[0].mxu0
        %1900 = vmatprep.mubr.bf16.mxu0 0
        %1901 = vmatmul.mubr.bf16.gmra.mrb[0].mxu0 %v1502
        %v1902 = vpop.f32.mrb[0].mxu0
        %v1903 = vadd.f32 %v908, %v1902
        %v1904 = vpop.f32.mrb[0].mxu0
        %v1905 = vpop.f32.mrb[0].mxu0
        %v1906 = vadd.f32 %v913, %v1905
        %v1907 = vpop.f32.mrb[0].mxu0
        %1908 = vmatprep.mubr.bf16.mxu0 0
        %1909 = vmatmul.mubr.bf16.gmra.mrb[0].mxu0 %v1505
        %v1910 = vpop.f32.mrb[0].mxu0
        %v1911 = vadd.f32 %v918, %v1910
        %v1912 = vpop.f32.mrb[0].mxu0
        %v1913 = vpop.f32.mrb[0].mxu0
        %v1914 = vadd.f32 %v923, %v1913
        %v1915 = vpop.f32.mrb[0].mxu0
        %1916 = vmatprep.mubr.bf16.mxu0 0
        %1917 = vmatmul.mubr.bf16.gmra.mrb[0].mxu0 %v1508
        %v1918 = vpop.f32.mrb[0].mxu0
        %v1919 = vadd.f32 %v928, %v1918
        %v1920 = vpop.f32.mrb[0].mxu0
        %v1921 = vpop.f32.mrb[0].mxu0
        %v1922 = vadd.f32 %v933, %v1921
        %v1923 = vpop.f32.mrb[0].mxu0
        %1924 = vmatprep.mubr.bf16.mxu0 0
        %1925 = vmatmul.mubr.bf16.gmra.mrb[0].mxu0 %v1511
        %v1926 = vpop.f32.mrb[0].mxu0
        %v1927 = vadd.f32 %v938, %v1926
        %v1928 = vpop.f32.mrb[0].mxu0
        %v1929 = vpop.f32.mrb[0].mxu0
        %v1930 = vadd.f32 %v943, %v1929
        %v1931 = vpop.f32.mrb[0].mxu0
        %1932 = vmatprep.mubr.bf16.mxu0 0
        %1933 = vmatmul.mubr.bf16.gmra.mrb[0].mxu0 %v1514
        %v1934 = vpop.f32.mrb[0].mxu0
        %v1935 = vadd.f32 %v948, %v1934
        %v1936 = vpop.f32.mrb[0].mxu0
        %v1937 = vpop.f32.mrb[0].mxu0
        %v1938 = vadd.f32 %v953, %v1937
        %v1939 = vpop.f32.mrb[0].mxu0
        %1940 = vmatprep.mubr.bf16.mxu0 0
        %1941 = vmatmul.mubr.bf16.gmra.mrb[0].mxu0 %v1517
        %v1942 = vpop.f32.mrb[0].mxu0
        %v1943 = vadd.f32 %v958, %v1942
        %v1944 = vpop.f32.mrb[0].mxu0
        %v1945 = vpop.f32.mrb[0].mxu0
        %v1946 = vadd.f32 %v963, %v1945
        %v1947 = vpop.f32.mrb[0].mxu0
        %1948 = vmatprep.mubr.bf16.mxu0 0
        %1949 = vmatmul.mubr.bf16.gmra.mrb[0].mxu0 %v1520
        %v1950 = vpop.f32.mrb[0].mxu0
        %v1951 = vadd.f32 %v968, %v1950
        %v1952 = vpop.f32.mrb[0].mxu0
        %v1953 = vpop.f32.mrb[0].mxu0
        %v1954 = vadd.f32 %v973, %v1953
        %v1955 = vpop.f32.mrb[0].mxu0
        %1956 = vmatprep.mubr.bf16.mxu0 0
        %1957 = vmatmul.mubr.bf16.gmra.mrb[0].mxu0 %v1523
        %v1958 = vpop.f32.mrb[0].mxu0
        %v1959 = vadd.f32 %v978, %v1958
        %v1960 = vpop.f32.mrb[0].mxu0
        %v1961 = vpop.f32.mrb[0].mxu0
        %v1962 = vadd.f32 %v983, %v1961
        %v1963 = vpop.f32.mrb[0].mxu0
        %1964 = vmatprep.mubr.bf16.mxu0 0
        %1965 = vmatmul.mubr.bf16.gmra.mrb[0].mxu0 %v1526
        %v1966 = vpop.f32.mrb[0].mxu0
        %v1967 = vadd.f32 %v988, %v1966
        %v1968 = vpop.f32.mrb[0].mxu0
        %v1969 = vpop.f32.mrb[0].mxu0
        %v1970 = vadd.f32 %v993, %v1969
        %v1971 = vpop.f32.mrb[0].mxu0
        %1972 = vmatprep.mubr.bf16.mxu0 0
        %1973 = vmatmul.mubr.bf16.gmra.mrb[0].mxu0 %v1529
        %v1974 = vpop.f32.mrb[0].mxu0
        %v1975 = vadd.f32 %v998, %v1974
        %v1976 = vpop.f32.mrb[0].mxu0
        %v1977 = vpop.f32.mrb[0].mxu0
        %v1978 = vadd.f32 %v1003, %v1977
        %v1979 = vpop.f32.mrb[0].mxu0
        %1980 = vmatprep.mubr.bf16.mxu0 0
        %1981 = vmatmul.mubr.bf16.gmra.mrb[0].mxu0 %v1532
        %v1982 = vpop.f32.mrb[0].mxu0
        %v1983 = vadd.f32 %v1008, %v1982
        %v1984 = vpop.f32.mrb[0].mxu0
        %v1985 = vpop.f32.mrb[0].mxu0
        %v1986 = vadd.f32 %v1013, %v1985
        %v1987 = vpop.f32.mrb[0].mxu0
        %1988 = vmatprep.mubr.bf16.mxu0 0
        %1989 = vmatmul.mubr.bf16.gmra.mrb[0].mxu0 %v1535
        %v1990 = vpop.f32.mrb[0].mxu0
        %v1991 = vadd.f32 %v1018, %v1990
        %v1992 = vpop.f32.mrb[0].mxu0
        %v1993 = vpop.f32.mrb[0].mxu0
        %v1994 = vadd.f32 %v1023, %v1993
        %v1995 = vpop.f32.mrb[0].mxu0
        %1996 = vmatprep.mubr.bf16.mxu0 0
        %1997 = vmatmul.mubr.bf16.gmra.mrb[0].mxu0 %v1538
        %v1998 = vpop.f32.mrb[0].mxu0
        %v1999 = vadd.f32 %v1028, %v1998
        %v2000 = vpop.f32.mrb[0].mxu0
        %v2001 = vpop.f32.mrb[0].mxu0
        %v2002 = vadd.f32 %v1033, %v2001
        %v2003 = vpop.f32.mrb[0].mxu0
        %2004 = vmatprep.mubr.bf16.mxu0 0
        %2005 = vmatmul.mubr.bf16.gmra.mrb[0].mxu0 %v1541
        %v2006 = vpop.f32.mrb[0].mxu0
        %v2007 = vadd.f32 %v1038, %v2006
        %v2008 = vpop.f32.mrb[0].mxu0
        %v2009 = vpop.f32.mrb[0].mxu0
        %v2010 = vadd.f32 %v1043, %v2009
        %v2011 = vpop.f32.mrb[0].mxu0
        %2012 = vmatprep.mubr.bf16.mxu0 0
        %2013 = vmatmul.mubr.bf16.gmra.mrb[0].mxu0 %v1544
        %v2014 = vpop.f32.mrb[0].mxu0
        %v2015 = vadd.f32 %v1048, %v2014
        %v2016 = vpop.f32.mrb[0].mxu0
        %v2017 = vpop.f32.mrb[0].mxu0
        %v2018 = vadd.f32 %v1053, %v2017
        %v2019 = vpop.f32.mrb[0].mxu0
        %2020 = vmatprep.mubr.bf16.mxu0 0
        %2021 = vmatmul.mubr.bf16.gmra.mrb[0].mxu0 %v1547
        %v2022 = vpop.f32.mrb[0].mxu0
        %v2023 = vadd.f32 %v1058, %v2022
        %v2024 = vpop.f32.mrb[0].mxu0
        %v2025 = vpop.f32.mrb[0].mxu0
        %v2026 = vadd.f32 %v1063, %v2025
        %v2027 = vpop.f32.mrb[0].mxu0
        %2028 = vmatprep.mubr.bf16.mxu0 0
        %2029 = vmatmul.mubr.bf16.gmra.mrb[0].mxu0 %v1550
        %v2030 = vpop.f32.mrb[0].mxu0
        %v2031 = vadd.f32 %v1068, %v2030
        %v2032 = vpop.f32.mrb[0].mxu0
        %v2033 = vpop.f32.mrb[0].mxu0
        %v2034 = vadd.f32 %v1073, %v2033
        %v2035 = vpop.f32.mrb[0].mxu0
        %2036 = vmatprep.mubr.bf16.mxu0 0
        %2037 = vmatmul.mubr.bf16.gmra.mrb[0].mxu0 %v1553
        %v2038 = vpop.f32.mrb[0].mxu0
        %v2039 = vadd.f32 %v1078, %v2038
        %v2040 = vpop.f32.mrb[0].mxu0
        %v2041 = vpop.f32.mrb[0].mxu0
        %v2042 = vadd.f32 %v1083, %v2041
        %v2043 = vpop.f32.mrb[0].mxu0
        %2044 = vmatprep.mubr.bf16.mxu0 0
        %2045 = vmatmul.mubr.bf16.gmra.mrb[0].mxu0 %v1556
        %v2046 = vpop.f32.mrb[0].mxu0
        %v2047 = vadd.f32 %v1088, %v2046
        %v2048 = vpop.f32.mrb[0].mxu0
        %v2049 = vpop.f32.mrb[0].mxu0
        %v2050 = vadd.f32 %v1093, %v2049
        %v2051 = vpop.f32.mrb[0].mxu0
        %2052 = vmatprep.mubr.bf16.mxu0 0
        %2053 = vmatmul.mubr.bf16.gmra.mrb[0].mxu0 %v1559
        %v2054 = vpop.f32.mrb[0].mxu0
        %v2055 = vadd.f32 %v1098, %v2054
        %v2056 = vpop.f32.mrb[0].mxu0
        %v2057 = vpop.f32.mrb[0].mxu0
        %v2058 = vadd.f32 %v1103, %v2057
        %v2059 = vpop.f32.mrb[0].mxu0
        %2060 = vmatprep.mubr.bf16.mxu0 0
        %2061 = vmatmul.mubr.bf16.gmra.mrb[0].mxu0 %v1562
        %v2062 = vpop.f32.mrb[0].mxu0
        %v2063 = vadd.f32 %v1108, %v2062
        %v2064 = vpop.f32.mrb[0].mxu0
        %v2065 = vpop.f32.mrb[0].mxu0
        %v2066 = vadd.f32 %v1113, %v2065
        %v2067 = vpop.f32.mrb[0].mxu0
        %2068 = vdwg.mxu0
        %v2069 = vmax.f32 %v1623, 0.0
        %v2070 = vmax.f32 %v1626, 0.0
        %v2071 = vmax.f32 %v1631, 0.0
        %v2072 = vmax.f32 %v1634, 0.0
        %v2073 = vmax.f32 %v1639, 0.0
        %v2074 = vmax.f32 %v1642, 0.0
        %v2075 = vmax.f32 %v1647, 0.0
        %v2076 = vmax.f32 %v1650, 0.0
        %v2077 = vmax.f32 %v1655, 0.0
        %v2078 = vmax.f32 %v1658, 0.0
        %v2079 = vmax.f32 %v1663, 0.0
        %v2080 = vmax.f32 %v1666, 0.0
        %v2081 = vmax.f32 %v1671, 0.0
        %v2082 = vmax.f32 %v1674, 0.0
        %v2083 = vmax.f32 %v1679, 0.0
        %v2084 = vmax.f32 %v1682, 0.0
        %v2085 = vmax.f32 %v1687, 0.0
        %v2086 = vmax.f32 %v1690, 0.0
        %v2087 = vmax.f32 %v1695, 0.0
        %v2088 = vmax.f32 %v1698, 0.0
        %v2089 = vmax.f32 %v1703, 0.0
        %v2090 = vmax.f32 %v1706, 0.0
        %v2091 = vmax.f32 %v1711, 0.0
        %v2092 = vmax.f32 %v1714, 0.0
        %v2093 = vmax.f32 %v1719, 0.0
        %v2094 = vmax.f32 %v1722, 0.0
        %v2095 = vmax.f32 %v1727, 0.0
        %v2096 = vmax.f32 %v1730, 0.0
        %v2097 = vmax.f32 %v1735, 0.0
        %v2098 = vmax.f32 %v1738, 0.0
        %v2099 = vmax.f32 %v1743, 0.0
        %v2100 = vmax.f32 %v1746, 0.0
        %v2101 = vmax.f32 %v1751, 0.0
        %v2102 = vmax.f32 %v1754, 0.0
        %v2103 = vmax.f32 %v1759, 0.0
        %v2104 = vmax.f32 %v1762, 0.0
        %v2105 = vmax.f32 %v1767, 0.0
        %v2106 = vmax.f32 %v1770, 0.0
        %v2107 = vmax.f32 %v1775, 0.0
        %v2108 = vmax.f32 %v1778, 0.0
        %v2109 = vmax.f32 %v1783, 0.0
        %v2110 = vmax.f32 %v1786, 0.0
        %v2111 = vmax.f32 %v1791, 0.0
        %v2112 = vmax.f32 %v1794, 0.0
        %v2113 = vmax.f32 %v1799, 0.0
        %v2114 = vmax.f32 %v1802, 0.0
        %v2115 = vmax.f32 %v1807, 0.0
        %v2116 = vmax.f32 %v1810, 0.0
        %v2117 = vmax.f32 %v1815, 0.0
        %v2118 = vmax.f32 %v1818, 0.0
        %v2119 = vmax.f32 %v1823, 0.0
        %v2120 = vmax.f32 %v1826, 0.0
        %v2121 = vmax.f32 %v1831, 0.0
        %v2122 = vmax.f32 %v1834, 0.0
        %v2123 = vmax.f32 %v1839, 0.0
        %v2124 = vmax.f32 %v1842, 0.0
        %v2125 = vmax.f32 %v1847, 0.0
        %v2126 = vmax.f32 %v1850, 0.0
        %v2127 = vmax.f32 %v1855, 0.0
        %v2128 = vmax.f32 %v1858, 0.0
        %v2129 = vmax.f32 %v1863, 0.0
        %v2130 = vmax.f32 %v1866, 0.0
        %v2131 = vmax.f32 %v1871, 0.0
        %v2132 = vmax.f32 %v1874, 0.0
        %v2133 = vmax.f32 %v1879, 0.0
        %v2134 = vmax.f32 %v1882, 0.0
        %v2135 = vmax.f32 %v1887, 0.0
        %v2136 = vmax.f32 %v1890, 0.0
        %v2137 = vmax.f32 %v1895, 0.0
        %v2138 = vmax.f32 %v1898, 0.0
        %v2139 = vmax.f32 %v1903, 0.0
        %v2140 = vmax.f32 %v1906, 0.0
        %v2141 = vmax.f32 %v1911, 0.0
        %v2142 = vmax.f32 %v1914, 0.0
        %v2143 = vmax.f32 %v1919, 0.0
        %v2144 = vmax.f32 %v1922, 0.0
        %v2145 = vmax.f32 %v1927, 0.0
        %v2146 = vmax.f32 %v1930, 0.0
        %v2147 = vmax.f32 %v1935, 0.0
        %v2148 = vmax.f32 %v1938, 0.0
        %v2149 = vmax.f32 %v1943, 0.0
        %v2150 = vmax.f32 %v1946, 0.0
        %v2151 = vmax.f32 %v1951, 0.0
        %v2152 = vmax.f32 %v1954, 0.0
        %v2153 = vmax.f32 %v1959, 0.0
        %v2154 = vmax.f32 %v1962, 0.0
        %v2155 = vmax.f32 %v1967, 0.0
        %v2156 = vmax.f32 %v1970, 0.0
        %v2157 = vmax.f32 %v1975, 0.0
        %v2158 = vmax.f32 %v1978, 0.0
        %v2159 = vmax.f32 %v1983, 0.0
        %v2160 = vmax.f32 %v1986, 0.0
        %v2161 = vmax.f32 %v1991, 0.0
        %v2162 = vmax.f32 %v1994, 0.0
        %v2163 = vmax.f32 %v1999, 0.0
        %v2164 = vmax.f32 %v2002, 0.0
        %v2165 = vmax.f32 %v2007, 0.0
        %v2166 = vmax.f32 %v2010, 0.0
        %v2167 = vmax.f32 %v2015, 0.0
        %v2168 = vmax.f32 %v2018, 0.0
        %v2169 = vmax.f32 %v2023, 0.0
        %v2170 = vmax.f32 %v2026, 0.0
        %v2171 = vmax.f32 %v2031, 0.0
        %v2172 = vmax.f32 %v2034, 0.0
        %v2173 = vmax.f32 %v2039, 0.0
        %v2174 = vmax.f32 %v2042, 0.0
        %v2175 = vmax.f32 %v2047, 0.0
        %v2176 = vmax.f32 %v2050, 0.0
        %v2177 = vmax.f32 %v2055, 0.0
        %v2178 = vmax.f32 %v2058, 0.0
        %v2179 = vmax.f32 %v2063, 0.0
        %v2180 = vmax.f32 %v2066, 0.0
        %v2181 = vld [vmem:[%s2] sm:$0xff]
        %v2182 = vld [vmem:[%s2 + $0x8] sm:$0xff]
        %v2183 = vld [vmem:[%s2 + $0x10] sm:$0xff]
        %v2184 = vld [vmem:[%s2 + $0x18] sm:$0xf]
        %v2185 = vld [vmem:[%s2 + $0x1c] sm:$0xff]
        %v2186 = vld [vmem:[%s2 + $0x24] sm:$0xff]
        %v2187 = vld [vmem:[%s2 + $0x2c] sm:$0xff]
        %v2188 = vld [vmem:[%s2 + $0x34] sm:$0xf]
        %v2189 = vld [vmem:[%s2 + $0x38] sm:$0xff]
        %v2190 = vld [vmem:[%s2 + $0x40] sm:$0xff]
        %v2191 = vld [vmem:[%s2 + $0x48] sm:$0xff]
        %v2192 = vld [vmem:[%s2 + $0x50] sm:$0xf]
        %v2193 = vld [vmem:[%s2 + $0x54] sm:$0xff]
        %v2194 = vld [vmem:[%s2 + $0x5c] sm:$0xff]
        %v2195 = vld [vmem:[%s2 + $0x64] sm:$0xff]
        %v2196 = vld [vmem:[%s2 + $0x6c] sm:$0xf]
        %v2197 = vld [vmem:[%s2 + $0x70] sm:$0xff]
        %v2198 = vld [vmem:[%s2 + $0x78] sm:$0xff]
        %v2199 = vld [vmem:[%s2 + $0x80] sm:$0xff]
        %v2200 = vld [vmem:[%s2 + $0x88] sm:$0xf]
        %v2201 = vld [vmem:[%s2 + $0x8c] sm:$0xff]
        %v2202 = vld [vmem:[%s2 + $0x94] sm:$0xff]
        %v2203 = vld [vmem:[%s2 + $0x9c] sm:$0xff]
        %v2204 = vld [vmem:[%s2 + $0xa4] sm:$0xf]
        %v2205 = vld [vmem:[%s2 + $0xa8] sm:$0xff]
        %v2206 = vld [vmem:[%s2 + $0xb0] sm:$0xff]
        %v2207 = vld [vmem:[%s2 + $0xb8] sm:$0xff]
        %v2208 = vld [vmem:[%s2 + $0xc0] sm:$0xf]
        %v2209 = vpack.c.bf16 %v2070, %v2069
        %v2210 = vpack.c.bf16 %v2072, %v2071
        %v2211 = vpack.c.bf16 %v2074, %v2073
        %v2212 = vpack.c.bf16 %v2076, %v2075
        %v2213 = vpack.c.bf16 %v2078, %v2077
        %v2214 = vpack.c.bf16 %v2080, %v2079
        %v2215 = vpack.c.bf16 %v2082, %v2081
        %v2216 = vpack.c.bf16 %v2084, %v2083
        %v2217 = vpack.c.bf16 %v2086, %v2085
        %v2218 = vpack.c.bf16 %v2088, %v2087
        %v2219 = vpack.c.bf16 %v2090, %v2089
        %v2220 = vpack.c.bf16 %v2092, %v2091
        %v2221 = vpack.c.bf16 %v2094, %v2093
        %v2222 = vpack.c.bf16 %v2096, %v2095
        %v2223 = vpack.c.bf16 %v2098, %v2097
        %v2224 = vpack.c.bf16 %v2100, %v2099
        %v2225 = vpack.c.bf16 %v2102, %v2101
        %v2226 = vpack.c.bf16 %v2104, %v2103
        %v2227 = vpack.c.bf16 %v2106, %v2105
        %v2228 = vpack.c.bf16 %v2108, %v2107
        %v2229 = vpack.c.bf16 %v2110, %v2109
        %v2230 = vpack.c.bf16 %v2112, %v2111
        %v2231 = vpack.c.bf16 %v2114, %v2113
        %v2232 = vpack.c.bf16 %v2116, %v2115
        %v2233 = vpack.c.bf16 %v2118, %v2117
        %v2234 = vpack.c.bf16 %v2120, %v2119
        %v2235 = vpack.c.bf16 %v2122, %v2121
        %v2236 = vpack.c.bf16 %v2124, %v2123
        %v2237 = vpack.c.bf16 %v2126, %v2125
        %v2238 = vpack.c.bf16 %v2128, %v2127
        %v2239 = vpack.c.bf16 %v2130, %v2129
        %v2240 = vpack.c.bf16 %v2132, %v2131
        %v2241 = vpack.c.bf16 %v2134, %v2133
        %v2242 = vpack.c.bf16 %v2136, %v2135
        %v2243 = vpack.c.bf16 %v2138, %v2137
        %v2244 = vpack.c.bf16 %v2140, %v2139
        %v2245 = vpack.c.bf16 %v2142, %v2141
        %v2246 = vpack.c.bf16 %v2144, %v2143
        %v2247 = vpack.c.bf16 %v2146, %v2145
        %v2248 = vpack.c.bf16 %v2148, %v2147
        %v2249 = vpack.c.bf16 %v2150, %v2149
        %v2250 = vpack.c.bf16 %v2152, %v2151
        %v2251 = vpack.c.bf16 %v2154, %v2153
        %v2252 = vpack.c.bf16 %v2156, %v2155
        %v2253 = vpack.c.bf16 %v2158, %v2157
        %v2254 = vpack.c.bf16 %v2160, %v2159
        %v2255 = vpack.c.bf16 %v2162, %v2161
        %v2256 = vpack.c.bf16 %v2164, %v2163
        %v2257 = vpack.c.bf16 %v2166, %v2165
        %v2258 = vpack.c.bf16 %v2168, %v2167
        %v2259 = vpack.c.bf16 %v2170, %v2169
        %v2260 = vpack.c.bf16 %v2172, %v2171
        %v2261 = vpack.c.bf16 %v2174, %v2173
        %v2262 = vpack.c.bf16 %v2176, %v2175
        %v2263 = vpack.c.bf16 %v2178, %v2177
        %v2264 = vpack.c.bf16 %v2180, %v2179
        %v2265 = vld [vmem:[%s7 + $0x380] sm:$0xff]
        %v2266 = vld [vmem:[%s7 + $0x388] sm:$0xff]
        %v2267 = vld [vmem:[%s7 + $0x390] sm:$0xff]
        %v2268 = vld [vmem:[%s7 + $0x398] sm:$0xff]
        %v2269 = vld [vmem:[%s7 + $0x3a0] sm:$0xff]
        %v2270 = vld [vmem:[%s7 + $0x3a8] sm:$0xff]
        %v2271 = vld [vmem:[%s7 + $0x3b0] sm:$0xff]
        %2273 = vset.pattern.permute.xlu0 0
        %2274 = vperm.xlu0 %2273, %v2265
        %v2275 = vpop.permute.xlu0 %2274
        %2278 = vset.pattern.permute.xlu0 0
        %2279 = vperm.xlu0 %2278, %v2266
        %v2280 = vpop.permute.xlu0 %2279
        %2283 = vset.pattern.permute.xlu0 0
        %2284 = vperm.xlu0 %2283, %v2267
        %v2285 = vpop.permute.xlu0 %2284
        %2288 = vset.pattern.permute.xlu0 0
        %2289 = vperm.xlu0 %2288, %v2268
        %v2290 = vpop.permute.xlu0 %2289
        %2293 = vset.pattern.permute.xlu0 0
        %2294 = vperm.xlu0 %2293, %v2269
        %v2295 = vpop.permute.xlu0 %2294
        %2298 = vset.pattern.permute.xlu0 0
        %2299 = vperm.xlu0 %2298, %v2270
        %v2300 = vpop.permute.xlu0 %2299
        %2303 = vset.pattern.permute.xlu0 0
        %2304 = vperm.xlu0 %2303, %v2271
        %v2305 = vpop.permute.xlu0 %2304
        %v2335 = vunpack.c.l.b16 %v2181
        %v2336 = vunpack.c.h.b16 %v2181
        %v2337 = vunpack.c.l.b16 %v2182
        %v2338 = vunpack.c.h.b16 %v2182
        %v2339 = vunpack.c.l.b16 %v2183
        %v2340 = vunpack.c.h.b16 %v2183
        %v2341 = vunpack.c.l.b16 %v2184
        %v2342 = vunpack.c.l.b16 %v2185
        %v2343 = vunpack.c.h.b16 %v2185
        %v2344 = vunpack.c.l.b16 %v2186
        %v2345 = vunpack.c.h.b16 %v2186
        %v2346 = vunpack.c.l.b16 %v2187
        %v2347 = vunpack.c.h.b16 %v2187
        %v2348 = vunpack.c.l.b16 %v2188
        %v2349 = vunpack.c.l.b16 %v2189
        %v2350 = vunpack.c.h.b16 %v2189
        %v2351 = vunpack.c.l.b16 %v2190
        %v2352 = vunpack.c.h.b16 %v2190
        %v2353 = vunpack.c.l.b16 %v2191
        %v2354 = vunpack.c.h.b16 %v2191
        %v2355 = vunpack.c.l.b16 %v2192
        %v2356 = vunpack.c.l.b16 %v2193
        %v2357 = vunpack.c.h.b16 %v2193
        %v2358 = vunpack.c.l.b16 %v2194
        %v2359 = vunpack.c.h.b16 %v2194
        %v2360 = vunpack.c.l.b16 %v2195
        %v2361 = vunpack.c.h.b16 %v2195
        %v2362 = vunpack.c.l.b16 %v2196
        %v2363 = vunpack.c.l.b16 %v2197
        %v2364 = vunpack.c.h.b16 %v2197
        %v2365 = vunpack.c.l.b16 %v2198
        %v2366 = vunpack.c.h.b16 %v2198
        %v2367 = vunpack.c.l.b16 %v2199
        %v2368 = vunpack.c.h.b16 %v2199
        %v2369 = vunpack.c.l.b16 %v2200
        %v2370 = vunpack.c.l.b16 %v2201
        %v2371 = vunpack.c.h.b16 %v2201
        %v2372 = vunpack.c.l.b16 %v2202
        %v2373 = vunpack.c.h.b16 %v2202
        %v2374 = vunpack.c.l.b16 %v2203
        %v2375 = vunpack.c.h.b16 %v2203
        %v2376 = vunpack.c.l.b16 %v2204
        %v2377 = vunpack.c.l.b16 %v2205
        %v2378 = vunpack.c.h.b16 %v2205
        %v2379 = vunpack.c.l.b16 %v2206
        %v2380 = vunpack.c.h.b16 %v2206
        %v2381 = vunpack.c.l.b16 %v2207
        %v2382 = vunpack.c.h.b16 %v2207
        %v2383 = vunpack.c.l.b16 %v2208
        %v2384 = vpack.c.b16 %v2342, %v2335
        %v2385 = vpack.c.b16 %v2343, %v2336
        %v2386 = vpack.c.b16 %v2344, %v2337
        %v2387 = vpack.c.b16 %v2345, %v2338
        %v2388 = vpack.c.b16 %v2346, %v2339
        %v2389 = vpack.c.b16 %v2347, %v2340
        %v2390 = vpack.c.b16 %v2348, %v2341
        %v2391 = vpack.c.b16 %v2356, %v2349
        %v2392 = vpack.c.b16 %v2357, %v2350
        %v2393 = vpack.c.b16 %v2358, %v2351
        %v2394 = vpack.c.b16 %v2359, %v2352
        %v2395 = vpack.c.b16 %v2360, %v2353
        %v2396 = vpack.c.b16 %v2361, %v2354
        %v2397 = vpack.c.b16 %v2362, %v2355
        %v2398 = vpack.c.b16 %v2370, %v2363
        %v2399 = vpack.c.b16 %v2371, %v2364
        %v2400 = vpack.c.b16 %v2372, %v2365
        %v2401 = vpack.c.b16 %v2373, %v2366
        %v2402 = vpack.c.b16 %v2374, %v2367
        %v2403 = vpack.c.b16 %v2375, %v2368
        %v2404 = vpack.c.b16 %v2376, %v2369
        %v2405 = vpack.c.b16 %v2377, %v2377
        %v2406 = vpack.c.b16 %v2378, %v2378
        %v2407 = vpack.c.b16 %v2379, %v2379
        %v2408 = vpack.c.b16 %v2380, %v2380
        %v2409 = vpack.c.b16 %v2381, %v2381
        %v2410 = vpack.c.b16 %v2382, %v2382
        %v2411 = vpack.c.b16 %v2383, %v2383
        %2440 = vmatprep.subr.bf16.mxu0 0
        %2441 = vmatpush1.bf16.msra.mxu0 %v2209
        %2442 = vmatprep.subr.bf16.mxu0 0
        %2443 = vmatpush1.bf16.msra.mxu0 %v2210
        %2444 = vmatprep.subr.bf16.mxu0 0
        %2445 = vmatpush1.bf16.msra.mxu0 %v2211
        %2446 = vmatprep.subr.bf16.mxu0 0
        %2447 = vmatpush1.bf16.msra.mxu0 %v2212
        %2448 = vmatprep.subr.bf16.mxu0 0
        %2449 = vmatpush1.bf16.msra.mxu0 %v2213
        %2450 = vmatprep.subr.bf16.mxu0 0
        %2451 = vmatpush1.bf16.msra.mxu0 %v2214
        %2452 = vmatprep.subr.bf16.mxu0 0
        %2453 = vmatpush1.bf16.msra.mxu0 %v2215
        %2454 = vmatprep.subr.bf16.mxu0 0
        %2455 = vmatpush1.bf16.msra.mxu0 %v2216
        %2456 = vmatprep.subr.bf16.mxu0 0
        %2457 = vmatpush1.bf16.msra.mxu0 %v2217
        %2458 = vmatprep.subr.bf16.mxu0 0
        %2459 = vmatpush1.bf16.msra.mxu0 %v2218
        %2460 = vmatprep.subr.bf16.mxu0 0
        %2461 = vmatpush1.bf16.msra.mxu0 %v2219
        %2462 = vmatprep.subr.bf16.mxu0 0
        %2463 = vmatpush1.bf16.msra.mxu0 %v2220
        %2464 = vmatprep.subr.bf16.mxu0 0
        %2465 = vmatpush1.bf16.msra.mxu0 %v2221
        %2466 = vmatprep.subr.bf16.mxu0 0
        %2467 = vmatpush1.bf16.msra.mxu0 %v2222
        %2468 = vmatprep.subr.bf16.mxu0 0
        %2469 = vmatpush1.bf16.msra.mxu0 %v2223
        %2470 = vmatprep.subr.bf16.mxu0 0
        %2471 = vmatpush1.bf16.msra.mxu0 %v2224
        %2472 = vmatprep.mubr.bf16.mxu0 %v2385
        %2473 = vmatmul.mubr.bf16.gmra.mrb[0].mxu0 %v2384
        %v2474 = vpop.f32.mrb[0].mxu0
        %v2475 = vadd.f32 %v2275, %v2474
        %v2476 = vpop.f32.mrb[0].mxu0
        %v2477 = vpop.f32.mrb[0].mxu0
        %v2478 = vadd.f32 %v2280, %v2477
        %v2479 = vpop.f32.mrb[0].mxu0
        %2480 = vmatprep.mubr.bf16.mxu0 %v2392
        %2481 = vmatmul.mubr.bf16.gmra.mrb[0].mxu0 %v2391
        %v2482 = vpop.f32.mrb[0].mxu0
        %v2483 = vadd.f32 %v2285, %v2482
        %v2484 = vpop.f32.mrb[0].mxu0
        %v2485 = vpop.f32.mrb[0].mxu0
        %v2486 = vadd.f32 %v2290, %v2485
        %v2487 = vpop.f32.mrb[0].mxu0
        %2488 = vmatprep.mubr.bf16.mxu0 %v2399
        %2489 = vmatmul.mubr.bf16.gmra.mrb[0].mxu0 %v2398
        %v2490 = vpop.f32.mrb[0].mxu0
        %v2491 = vadd.f32 %v2295, %v2490
        %v2492 = vpop.f32.mrb[0].mxu0
        %v2493 = vpop.f32.mrb[0].mxu0
        %v2494 = vadd.f32 %v2300, %v2493
        %v2495 = vpop.f32.mrb[0].mxu0
        %2496 = vmatprep.mubr.bf16.mxu0 %v2406
        %2497 = vmatmul.mubr.bf16.gmra.mrb[0].mxu0 %v2405
        %v2498 = vpop.f32.mrb[0].mxu0
        %v2499 = vadd.f32 %v2305, %v2498
        %v2500 = vpop.f32.mrb[0].mxu0
        %v2501 = vpop.f32.mrb[0].mxu0
        %v2502 = vpop.f32.mrb[0].mxu0
        %2503 = vdwg.mxu0
        %2504 = vmatprep.subr.bf16.mxu0 0
        %2505 = vmatpush1.bf16.msra.mxu0 %v2225
        %2506 = vmatprep.subr.bf16.mxu0 0
        %2507 = vmatpush1.bf16.msra.mxu0 %v2226
        %2508 = vmatprep.subr.bf16.mxu0 0
        %2509 = vmatpush1.bf16.msra.mxu0 %v2227
        %2510 = vmatprep.subr.bf16.mxu0 0
        %2511 = vmatpush1.bf16.msra.mxu0 %v2228
        %2512 = vmatprep.subr.bf16.mxu0 0
        %2513 = vmatpush1.bf16.msra.mxu0 %v2229
        %2514 = vmatprep.subr.bf16.mxu0 0
        %2515 = vmatpush1.bf16.msra.mxu0 %v2230
        %2516 = vmatprep.subr.bf16.mxu0 0
        %2517 = vmatpush1.bf16.msra.mxu0 %v2231
        %2518 = vmatprep.subr.bf16.mxu0 0
        %2519 = vmatpush1.bf16.msra.mxu0 %v2232
        %2520 = vmatprep.subr.bf16.mxu0 0
        %2521 = vmatpush1.bf16.msra.mxu0 %v2233
        %2522 = vmatprep.subr.bf16.mxu0 0
        %2523 = vmatpush1.bf16.msra.mxu0 %v2234
        %2524 = vmatprep.subr.bf16.mxu0 0
        %2525 = vmatpush1.bf16.msra.mxu0 %v2235
        %2526 = vmatprep.subr.bf16.mxu0 0
        %2527 = vmatpush1.bf16.msra.mxu0 %v2236
        %2528 = vmatprep.subr.bf16.mxu0 0
        %2529 = vmatpush1.bf16.msra.mxu0 %v2237
        %2530 = vmatprep.subr.bf16.mxu0 0
        %2531 = vmatpush1.bf16.msra.mxu0 %v2238
        %2532 = vmatprep.subr.bf16.mxu0 0
        %2533 = vmatpush1.bf16.msra.mxu0 %v2239
        %2534 = vmatprep.subr.bf16.mxu0 0
        %2535 = vmatpush1.bf16.msra.mxu0 %v2240
        %2536 = vmatprep.mubr.bf16.mxu0 %v2387
        %2537 = vmatmul.mubr.bf16.gmra.mrb[0].mxu0 %v2386
        %v2538 = vpop.f32.mrb[0].mxu0
        %v2539 = vadd.f32 %v2475, %v2538
        %v2540 = vpop.f32.mrb[0].mxu0
        %v2541 = vpop.f32.mrb[0].mxu0
        %v2542 = vadd.f32 %v2478, %v2541
        %v2543 = vpop.f32.mrb[0].mxu0
        %2544 = vmatprep.mubr.bf16.mxu0 %v2394
        %2545 = vmatmul.mubr.bf16.gmra.mrb[0].mxu0 %v2393
        %v2546 = vpop.f32.mrb[0].mxu0
        %v2547 = vadd.f32 %v2483, %v2546
        %v2548 = vpop.f32.mrb[0].mxu0
        %v2549 = vpop.f32.mrb[0].mxu0
        %v2550 = vadd.f32 %v2486, %v2549
        %v2551 = vpop.f32.mrb[0].mxu0
        %2552 = vmatprep.mubr.bf16.mxu0 %v2401
        %2553 = vmatmul.mubr.bf16.gmra.mrb[0].mxu0 %v2400
        %v2554 = vpop.f32.mrb[0].mxu0
        %v2555 = vadd.f32 %v2491, %v2554
        %v2556 = vpop.f32.mrb[0].mxu0
        %v2557 = vpop.f32.mrb[0].mxu0
        %v2558 = vadd.f32 %v2494, %v2557
        %v2559 = vpop.f32.mrb[0].mxu0
        %2560 = vmatprep.mubr.bf16.mxu0 %v2408
        %2561 = vmatmul.mubr.bf16.gmra.mrb[0].mxu0 %v2407
        %v2562 = vpop.f32.mrb[0].mxu0
        %v2563 = vadd.f32 %v2499, %v2562
        %v2564 = vpop.f32.mrb[0].mxu0
        %v2565 = vpop.f32.mrb[0].mxu0
        %v2566 = vpop.f32.mrb[0].mxu0
        %2567 = vdwg.mxu0
        %2568 = vmatprep.subr.bf16.mxu0 0
        %2569 = vmatpush1.bf16.msra.mxu0 %v2241
        %2570 = vmatprep.subr.bf16.mxu0 0
        %2571 = vmatpush1.bf16.msra.mxu0 %v2242
        %2572 = vmatprep.subr.bf16.mxu0 0
        %2573 = vmatpush1.bf16.msra.mxu0 %v2243
        %2574 = vmatprep.subr.bf16.mxu0 0
        %2575 = vmatpush1.bf16.msra.mxu0 %v2244
        %2576 = vmatprep.subr.bf16.mxu0 0
        %2577 = vmatpush1.bf16.msra.mxu0 %v2245
        %2578 = vmatprep.subr.bf16.mxu0 0
        %2579 = vmatpush1.bf16.msra.mxu0 %v2246
        %2580 = vmatprep.subr.bf16.mxu0 0
        %2581 = vmatpush1.bf16.msra.mxu0 %v2247
        %2582 = vmatprep.subr.bf16.mxu0 0
        %2583 = vmatpush1.bf16.msra.mxu0 %v2248
        %2584 = vmatprep.subr.bf16.mxu0 0
        %2585 = vmatpush1.bf16.msra.mxu0 %v2249
        %2586 = vmatprep.subr.bf16.mxu0 0
        %2587 = vmatpush1.bf16.msra.mxu0 %v2250
        %2588 = vmatprep.subr.bf16.mxu0 0
        %2589 = vmatpush1.bf16.msra.mxu0 %v2251
        %2590 = vmatprep.subr.bf16.mxu0 0
        %2591 = vmatpush1.bf16.msra.mxu0 %v2252
        %2592 = vmatprep.subr.bf16.mxu0 0
        %2593 = vmatpush1.bf16.msra.mxu0 %v2253
        %2594 = vmatprep.subr.bf16.mxu0 0
        %2595 = vmatpush1.bf16.msra.mxu0 %v2254
        %2596 = vmatprep.subr.bf16.mxu0 0
        %2597 = vmatpush1.bf16.msra.mxu0 %v2255
        %2598 = vmatprep.subr.bf16.mxu0 0
        %2599 = vmatpush1.bf16.msra.mxu0 %v2256
        %2600 = vmatprep.mubr.bf16.mxu0 %v2389
        %2601 = vmatmul.mubr.bf16.gmra.mrb[0].mxu0 %v2388
        %v2602 = vpop.f32.mrb[0].mxu0
        %v2603 = vadd.f32 %v2539, %v2602
        %v2604 = vpop.f32.mrb[0].mxu0
        %v2605 = vpop.f32.mrb[0].mxu0
        %v2606 = vadd.f32 %v2542, %v2605
        %v2607 = vpop.f32.mrb[0].mxu0
        %2608 = vmatprep.mubr.bf16.mxu0 %v2396
        %2609 = vmatmul.mubr.bf16.gmra.mrb[0].mxu0 %v2395
        %v2610 = vpop.f32.mrb[0].mxu0
        %v2611 = vadd.f32 %v2547, %v2610
        %v2612 = vpop.f32.mrb[0].mxu0
        %v2613 = vpop.f32.mrb[0].mxu0
        %v2614 = vadd.f32 %v2550, %v2613
        %v2615 = vpop.f32.mrb[0].mxu0
        %2616 = vmatprep.mubr.bf16.mxu0 %v2403
        %2617 = vmatmul.mubr.bf16.gmra.mrb[0].mxu0 %v2402
        %v2618 = vpop.f32.mrb[0].mxu0
        %v2619 = vadd.f32 %v2555, %v2618
        %v2620 = vpop.f32.mrb[0].mxu0
        %v2621 = vpop.f32.mrb[0].mxu0
        %v2622 = vadd.f32 %v2558, %v2621
        %v2623 = vpop.f32.mrb[0].mxu0
        %2624 = vmatprep.mubr.bf16.mxu0 %v2410
        %2625 = vmatmul.mubr.bf16.gmra.mrb[0].mxu0 %v2409
        %v2626 = vpop.f32.mrb[0].mxu0
        %v2627 = vadd.f32 %v2563, %v2626
        %v2628 = vpop.f32.mrb[0].mxu0
        %v2629 = vpop.f32.mrb[0].mxu0
        %v2630 = vpop.f32.mrb[0].mxu0
        %2631 = vdwg.mxu0
        %2632 = vmatprep.subr.bf16.mxu0 0
        %2633 = vmatpush1.bf16.msra.mxu0 %v2257
        %2634 = vmatprep.subr.bf16.mxu0 0
        %2635 = vmatpush1.bf16.msra.mxu0 %v2258
        %2636 = vmatprep.subr.bf16.mxu0 0
        %2637 = vmatpush1.bf16.msra.mxu0 %v2259
        %2638 = vmatprep.subr.bf16.mxu0 0
        %2639 = vmatpush1.bf16.msra.mxu0 %v2260
        %2640 = vmatprep.subr.bf16.mxu0 0
        %2641 = vmatpush1.bf16.msra.mxu0 %v2261
        %2642 = vmatprep.subr.bf16.mxu0 0
        %2643 = vmatpush1.bf16.msra.mxu0 %v2262
        %2644 = vmatprep.subr.bf16.mxu0 0
        %2645 = vmatpush1.bf16.msra.mxu0 %v2263
        %2646 = vmatprep.subr.bf16.mxu0 0
        %2647 = vmatpush1.bf16.msra.mxu0 %v2264
        %2648 = vmatprep.subr.bf16.mxu0 0
        %2649 = vmatpush1.bf16.msra.mxu0 0
        %2650 = vmatprep.subr.bf16.mxu0 0
        %2651 = vmatpush1.bf16.msra.mxu0 0
        %2652 = vmatprep.subr.bf16.mxu0 0
        %2653 = vmatpush1.bf16.msra.mxu0 0
        %2654 = vmatprep.subr.bf16.mxu0 0
        %2655 = vmatpush1.bf16.msra.mxu0 0
        %2656 = vmatprep.subr.bf16.mxu0 0
        %2657 = vmatpush1.bf16.msra.mxu0 0
        %2658 = vmatprep.subr.bf16.mxu0 0
        %2659 = vmatpush1.bf16.msra.mxu0 0
        %2660 = vmatprep.subr.bf16.mxu0 0
        %2661 = vmatpush1.bf16.msra.mxu0 0
        %2662 = vmatprep.subr.bf16.mxu0 0
        %2663 = vmatpush1.bf16.msra.mxu0 0
        %2664 = vmatprep.mubr.bf16.mxu0 0
        %2665 = vmatmul.mubr.bf16.gmra.mrb[0].mxu0 %v2390
        %v2666 = vpop.f32.mrb[0].mxu0
        %v2667 = vadd.f32 %v2603, %v2666
        %v2668 = vpop.f32.mrb[0].mxu0
        %v2669 = vpop.f32.mrb[0].mxu0
        %v2670 = vadd.f32 %v2606, %v2669
        %v2671 = vpop.f32.mrb[0].mxu0
        %2672 = vmatprep.mubr.bf16.mxu0 0
        %2673 = vmatmul.mubr.bf16.gmra.mrb[0].mxu0 %v2397
        %v2674 = vpop.f32.mrb[0].mxu0
        %v2675 = vadd.f32 %v2611, %v2674
        %v2676 = vpop.f32.mrb[0].mxu0
        %v2677 = vpop.f32.mrb[0].mxu0
        %v2678 = vadd.f32 %v2614, %v2677
        %v2679 = vpop.f32.mrb[0].mxu0
        %2680 = vmatprep.mubr.bf16.mxu0 0
        %2681 = vmatmul.mubr.bf16.gmra.mrb[0].mxu0 %v2404
        %v2682 = vpop.f32.mrb[0].mxu0
        %v2683 = vadd.f32 %v2619, %v2682
        %v2684 = vpop.f32.mrb[0].mxu0
        %v2685 = vpop.f32.mrb[0].mxu0
        %v2686 = vadd.f32 %v2622, %v2685
        %v2687 = vpop.f32.mrb[0].mxu0
        %2688 = vmatprep.mubr.bf16.mxu0 0
        %2689 = vmatmul.mubr.bf16.gmra.mrb[0].mxu0 %v2411
        %v2690 = vpop.f32.mrb[0].mxu0
        %v2691 = vadd.f32 %v2627, %v2690
        %v2692 = vpop.f32.mrb[0].mxu0
        %v2693 = vpop.f32.mrb[0].mxu0
        %v2694 = vpop.f32.mrb[0].mxu0
        %2695 = vdwg.mxu0
        %v2696 = vpack.c.bf16 %v2670, %v2667
        %v2697 = vpack.c.bf16 %v2678, %v2675
        %v2698 = vpack.c.bf16 %v2686, %v2683
        %v2699 = vpack.c.bf16 %v2691, %v2691
        %v2700 = vld [vmem:[%s3] sm:$0xf]
        %v2701 = vld [vmem:[%s3 + $0x4] sm:$0xf]
        %v2702 = vld [vmem:[%s3 + $0x8] sm:$0xf]
        %v2703 = vld [vmem:[%s3 + $0xc] sm:$0xf]
        %v2704 = vld [vmem:[%s3 + $0x10] sm:$0xf]
        %v2705 = vld [vmem:[%s3 + $0x14] sm:$0xf]
        %v2706 = vld [vmem:[%s3 + $0x18] sm:$0xf]
        %v2707 = vld [vmem:[%s3 + $0x1c] sm:$0xf]
        %v2708 = vld [vmem:[%s3 + $0x20] sm:$0xf]
        %v2709 = vld [vmem:[%s3 + $0x24] sm:$0xf]
        %v2710 = vld [vmem:[%s3 + $0x28] sm:$0xf]
        %v2711 = vld [vmem:[%s3 + $0x2c] sm:$0xf]
        %v2712 = vld [vmem:[%s3 + $0x30] sm:$0xf]
        %v2713 = vld [vmem:[%s3 + $0x34] sm:$0xf]
        %v2714 = vld [vmem:[%s3 + $0x38] sm:$0xf]
        %v2715 = vld [vmem:[%s3 + $0x3c] sm:$0xf]
        %v2716 = vld [vmem:[%s3 + $0x40] sm:$0xf]
        %v2717 = vld [vmem:[%s3 + $0x44] sm:$0xf]
        %v2718 = vld [vmem:[%s3 + $0x48] sm:$0xf]
        %v2719 = vld [vmem:[%s3 + $0x4c] sm:$0xf]
        %v2720 = vld [vmem:[%s3 + $0x50] sm:$0xf]
        %v2721 = vld [vmem:[%s3 + $0x54] sm:$0xf]
        %v2722 = vld [vmem:[%s3 + $0x58] sm:$0xf]
        %v2723 = vld [vmem:[%s3 + $0x5c] sm:$0xf]
        %v2724 = vld [vmem:[%s3 + $0x60] sm:$0xf]
        %v2725 = vld [vmem:[%s3 + $0x64] sm:$0xf]
        %v2726 = vld [vmem:[%s3 + $0x68] sm:$0xf]
        %v2727 = vld [vmem:[%s3 + $0x6c] sm:$0xf]
        %v2728 = vld [vmem:[%s3 + $0x70] sm:$0xf]
        %v2729 = vld [vmem:[%s3 + $0x74] sm:$0xf]
        %v2730 = vld [vmem:[%s3 + $0x78] sm:$0xf]
        %v2731 = vld [vmem:[%s3 + $0x7c] sm:$0xf]
        %v2732 = vld [vmem:[%s3 + $0x80] sm:$0xf]
        %v2733 = vld [vmem:[%s3 + $0x84] sm:$0xf]
        %v2734 = vld [vmem:[%s3 + $0x88] sm:$0xf]
        %v2735 = vld [vmem:[%s3 + $0x8c] sm:$0xf]
        %v2736 = vld [vmem:[%s3 + $0x90] sm:$0xf]
        %v2737 = vld [vmem:[%s3 + $0x94] sm:$0xf]
        %v2738 = vld [vmem:[%s3 + $0x98] sm:$0xf]
        %v2739 = vld [vmem:[%s3 + $0x9c] sm:$0xf]
        %v2740 = vld [vmem:[%s3 + $0xa0] sm:$0xf]
        %v2741 = vld [vmem:[%s3 + $0xa4] sm:$0xf]
        %v2742 = vld [vmem:[%s3 + $0xa8] sm:$0xf]
        %v2743 = vld [vmem:[%s3 + $0xac] sm:$0xf]
        %v2744 = vld [vmem:[%s3 + $0xb0] sm:$0xf]
        %v2745 = vld [vmem:[%s3 + $0xb4] sm:$0xf]
        %v2746 = vld [vmem:[%s3 + $0xb8] sm:$0xf]
        %v2747 = vld [vmem:[%s3 + $0xbc] sm:$0xf]
        %v2748 = vld [vmem:[%s3 + $0xc0] sm:$0xf]
        %v2749 = vld [vmem:[%s3 + $0xc4] sm:$0xf]
        %v2750 = vld [vmem:[%s3 + $0xc8] sm:$0xf]
        %v2751 = vld [vmem:[%s3 + $0xcc] sm:$0xf]
        %v2752 = vld [vmem:[%s3 + $0xd0] sm:$0xf]
        %v2753 = vld [vmem:[%s3 + $0xd4] sm:$0xf]
        %v2754 = vld [vmem:[%s3 + $0xd8] sm:$0xf]
        %v2755 = vld [vmem:[%s3 + $0xdc] sm:$0xf]
        %v2756 = vld [vmem:[%s3 + $0xe0] sm:$0xf]
        %v2757 = vld [vmem:[%s3 + $0xe4] sm:$0xf]
        %v2758 = vld [vmem:[%s3 + $0xe8] sm:$0xf]
        %v2759 = vld [vmem:[%s3 + $0xec] sm:$0xf]
        %v2760 = vld [vmem:[%s3 + $0xf0] sm:$0xf]
        %v2761 = vld [vmem:[%s3 + $0xf4] sm:$0xf]
        %v2762 = vld [vmem:[%s3 + $0xf8] sm:$0xf]
        %v2763 = vld [vmem:[%s3 + $0xfc] sm:$0xf]
        %v2764 = vld [vmem:[%s7 + $0x3b8] sm:$0xff]
        %v2765 = vld [vmem:[%s7 + $0x3c0] sm:$0xff]
        %v2766 = vld [vmem:[%s7 + $0x3c8] sm:$0xff]
        %v2767 = vld [vmem:[%s7 + $0x3d0] sm:$0xff]
        %v2768 = vld [vmem:[%s7 + $0x3d8] sm:$0xff]
        %v2769 = vld [vmem:[%s7 + $0x3e0] sm:$0xff]
        %v2770 = vld [vmem:[%s7 + $0x3e8] sm:$0xff]
        %v2771 = vld [vmem:[%s7 + $0x3f0] sm:$0xff]
        %v2772 = vld [vmem:[%s7 + $0x3f8] sm:$0xff]
        %v2773 = vld [vmem:[%s7 + $0x400] sm:$0xff]
        %v2774 = vld [vmem:[%s7 + $0x408] sm:$0xff]
        %v2775 = vld [vmem:[%s7 + $0x410] sm:$0xff]
        %v2776 = vld [vmem:[%s7 + $0x418] sm:$0xff]
        %v2777 = vld [vmem:[%s7 + $0x420] sm:$0xff]
        %v2778 = vld [vmem:[%s7 + $0x428] sm:$0xff]
        %v2779 = vld [vmem:[%s7 + $0x430] sm:$0xff]
        %v2780 = vld [vmem:[%s7 + $0x438] sm:$0xff]
        %v2781 = vld [vmem:[%s7 + $0x440] sm:$0xff]
        %v2782 = vld [vmem:[%s7 + $0x448] sm:$0xff]
        %v2783 = vld [vmem:[%s7 + $0x450] sm:$0xff]
        %v2784 = vld [vmem:[%s7 + $0x458] sm:$0xff]
        %v2785 = vld [vmem:[%s7 + $0x460] sm:$0xff]
        %v2786 = vld [vmem:[%s7 + $0x468] sm:$0xff]
        %v2787 = vld [vmem:[%s7 + $0x470] sm:$0xff]
        %v2788 = vld [vmem:[%s7 + $0x478] sm:$0xff]
        %v2789 = vld [vmem:[%s7 + $0x480] sm:$0xff]
        %v2790 = vld [vmem:[%s7 + $0x488] sm:$0xff]
        %v2791 = vld [vmem:[%s7 + $0x490] sm:$0xff]
        %v2792 = vld [vmem:[%s7 + $0x498] sm:$0xff]
        %v2793 = vld [vmem:[%s7 + $0x4a0] sm:$0xff]
        %v2794 = vld [vmem:[%s7 + $0x4a8] sm:$0xff]
        %v2795 = vld [vmem:[%s7 + $0x4b0] sm:$0xff]
        %v2796 = vld [vmem:[%s7 + $0x4b8] sm:$0xff]
        %v2797 = vld [vmem:[%s7 + $0x4c0] sm:$0xff]
        %v2798 = vld [vmem:[%s7 + $0x4c8] sm:$0xff]
        %v2799 = vld [vmem:[%s7 + $0x4d0] sm:$0xff]
        %v2800 = vld [vmem:[%s7 + $0x4d8] sm:$0xff]
        %v2801 = vld [vmem:[%s7 + $0x4e0] sm:$0xff]
        %v2802 = vld [vmem:[%s7 + $0x4e8] sm:$0xff]
        %v2803 = vld [vmem:[%s7 + $0x4f0] sm:$0xff]
        %v2804 = vld [vmem:[%s7 + $0x4f8] sm:$0xff]
        %v2805 = vld [vmem:[%s7 + $0x500] sm:$0xff]
        %v2806 = vld [vmem:[%s7 + $0x508] sm:$0xff]
        %v2807 = vld [vmem:[%s7 + $0x510] sm:$0xff]
        %v2808 = vld [vmem:[%s7 + $0x518] sm:$0xff]
        %v2809 = vld [vmem:[%s7 + $0x520] sm:$0xff]
        %v2810 = vld [vmem:[%s7 + $0x528] sm:$0xff]
        %v2811 = vld [vmem:[%s7 + $0x530] sm:$0xff]
        %v2812 = vld [vmem:[%s7 + $0x538] sm:$0xff]
        %v2813 = vld [vmem:[%s7 + $0x540] sm:$0xff]
        %v2814 = vld [vmem:[%s7 + $0x548] sm:$0xff]
        %v2815 = vld [vmem:[%s7 + $0x550] sm:$0xff]
        %v2816 = vld [vmem:[%s7 + $0x558] sm:$0xff]
        %v2817 = vld [vmem:[%s7 + $0x560] sm:$0xff]
        %v2818 = vld [vmem:[%s7 + $0x568] sm:$0xff]
        %v2819 = vld [vmem:[%s7 + $0x570] sm:$0xff]
        %v2820 = vld [vmem:[%s7 + $0x578] sm:$0xff]
        %v2821 = vld [vmem:[%s7 + $0x580] sm:$0xff]
        %v2822 = vld [vmem:[%s7 + $0x588] sm:$0xff]
        %v2823 = vld [vmem:[%s7 + $0x590] sm:$0xff]
        %v2824 = vld [vmem:[%s7 + $0x598] sm:$0xff]
        %v2825 = vld [vmem:[%s7 + $0x5a0] sm:$0xff]
        %v2826 = vld [vmem:[%s7 + $0x5a8] sm:$0xff]
        %v2827 = vld [vmem:[%s7 + $0x5b0] sm:$0xff]
        %2829 = vset.pattern.permute.xlu0 0
        %2830 = vperm.xlu0 %2829, %v2764
        %v2831 = vpop.permute.xlu0 %2830
        %2834 = vset.pattern.permute.xlu0 0
        %2835 = vperm.xlu0 %2834, %v2765
        %v2836 = vpop.permute.xlu0 %2835
        %2839 = vset.pattern.permute.xlu0 0
        %2840 = vperm.xlu0 %2839, %v2766
        %v2841 = vpop.permute.xlu0 %2840
        %2844 = vset.pattern.permute.xlu0 0
        %2845 = vperm.xlu0 %2844, %v2767
        %v2846 = vpop.permute.xlu0 %2845
        %2849 = vset.pattern.permute.xlu0 0
        %2850 = vperm.xlu0 %2849, %v2768
        %v2851 = vpop.permute.xlu0 %2850
        %2854 = vset.pattern.permute.xlu0 0
        %2855 = vperm.xlu0 %2854, %v2769
        %v2856 = vpop.permute.xlu0 %2855
        %2859 = vset.pattern.permute.xlu0 0
        %2860 = vperm.xlu0 %2859, %v2770
        %v2861 = vpop.permute.xlu0 %2860
        %2864 = vset.pattern.permute.xlu0 0
        %2865 = vperm.xlu0 %2864, %v2771
        %v2866 = vpop.permute.xlu0 %2865
        %2869 = vset.pattern.permute.xlu0 0
        %2870 = vperm.xlu0 %2869, %v2772
        %v2871 = vpop.permute.xlu0 %2870
        %2874 = vset.pattern.permute.xlu0 0
        %2875 = vperm.xlu0 %2874, %v2773
        %v2876 = vpop.permute.xlu0 %2875
        %2879 = vset.pattern.permute.xlu0 0
        %2880 = vperm.xlu0 %2879, %v2774
        %v2881 = vpop.permute.xlu0 %2880
        %2884 = vset.pattern.permute.xlu0 0
        %2885 = vperm.xlu0 %2884, %v2775
        %v2886 = vpop.permute.xlu0 %2885
        %2889 = vset.pattern.permute.xlu0 0
        %2890 = vperm.xlu0 %2889, %v2776
        %v2891 = vpop.permute.xlu0 %2890
        %2894 = vset.pattern.permute.xlu0 0
        %2895 = vperm.xlu0 %2894, %v2777
        %v2896 = vpop.permute.xlu0 %2895
        %2899 = vset.pattern.permute.xlu0 0
        %2900 = vperm.xlu0 %2899, %v2778
        %v2901 = vpop.permute.xlu0 %2900
        %2904 = vset.pattern.permute.xlu0 0
        %2905 = vperm.xlu0 %2904, %v2779
        %v2906 = vpop.permute.xlu0 %2905
        %2909 = vset.pattern.permute.xlu0 0
        %2910 = vperm.xlu0 %2909, %v2780
        %v2911 = vpop.permute.xlu0 %2910
        %2914 = vset.pattern.permute.xlu0 0
        %2915 = vperm.xlu0 %2914, %v2781
        %v2916 = vpop.permute.xlu0 %2915
        %2919 = vset.pattern.permute.xlu0 0
        %2920 = vperm.xlu0 %2919, %v2782
        %v2921 = vpop.permute.xlu0 %2920
        %2924 = vset.pattern.permute.xlu0 0
        %2925 = vperm.xlu0 %2924, %v2783
        %v2926 = vpop.permute.xlu0 %2925
        %2929 = vset.pattern.permute.xlu0 0
        %2930 = vperm.xlu0 %2929, %v2784
        %v2931 = vpop.permute.xlu0 %2930
        %2934 = vset.pattern.permute.xlu0 0
        %2935 = vperm.xlu0 %2934, %v2785
        %v2936 = vpop.permute.xlu0 %2935
        %2939 = vset.pattern.permute.xlu0 0
        %2940 = vperm.xlu0 %2939, %v2786
        %v2941 = vpop.permute.xlu0 %2940
        %2944 = vset.pattern.permute.xlu0 0
        %2945 = vperm.xlu0 %2944, %v2787
        %v2946 = vpop.permute.xlu0 %2945
        %2949 = vset.pattern.permute.xlu0 0
        %2950 = vperm.xlu0 %2949, %v2788
        %v2951 = vpop.permute.xlu0 %2950
        %2954 = vset.pattern.permute.xlu0 0
        %2955 = vperm.xlu0 %2954, %v2789
        %v2956 = vpop.permute.xlu0 %2955
        %2959 = vset.pattern.permute.xlu0 0
        %2960 = vperm.xlu0 %2959, %v2790
        %v2961 = vpop.permute.xlu0 %2960
        %2964 = vset.pattern.permute.xlu0 0
        %2965 = vperm.xlu0 %2964, %v2791
        %v2966 = vpop.permute.xlu0 %2965
        %2969 = vset.pattern.permute.xlu0 0
        %2970 = vperm.xlu0 %2969, %v2792
        %v2971 = vpop.permute.xlu0 %2970
        %2974 = vset.pattern.permute.xlu0 0
        %2975 = vperm.xlu0 %2974, %v2793
        %v2976 = vpop.permute.xlu0 %2975
        %2979 = vset.pattern.permute.xlu0 0
        %2980 = vperm.xlu0 %2979, %v2794
        %v2981 = vpop.permute.xlu0 %2980
        %2984 = vset.pattern.permute.xlu0 0
        %2985 = vperm.xlu0 %2984, %v2795
        %v2986 = vpop.permute.xlu0 %2985
        %2989 = vset.pattern.permute.xlu0 0
        %2990 = vperm.xlu0 %2989, %v2796
        %v2991 = vpop.permute.xlu0 %2990
        %2994 = vset.pattern.permute.xlu0 0
        %2995 = vperm.xlu0 %2994, %v2797
        %v2996 = vpop.permute.xlu0 %2995
        %2999 = vset.pattern.permute.xlu0 0
        %3000 = vperm.xlu0 %2999, %v2798
        %v3001 = vpop.permute.xlu0 %3000
        %3004 = vset.pattern.permute.xlu0 0
        %3005 = vperm.xlu0 %3004, %v2799
        %v3006 = vpop.permute.xlu0 %3005
        %3009 = vset.pattern.permute.xlu0 0
        %3010 = vperm.xlu0 %3009, %v2800
        %v3011 = vpop.permute.xlu0 %3010
        %3014 = vset.pattern.permute.xlu0 0
        %3015 = vperm.xlu0 %3014, %v2801
        %v3016 = vpop.permute.xlu0 %3015
        %3019 = vset.pattern.permute.xlu0 0
        %3020 = vperm.xlu0 %3019, %v2802
        %v3021 = vpop.permute.xlu0 %3020
        %3024 = vset.pattern.permute.xlu0 0
        %3025 = vperm.xlu0 %3024, %v2803
        %v3026 = vpop.permute.xlu0 %3025
        %3029 = vset.pattern.permute.xlu0 0
        %3030 = vperm.xlu0 %3029, %v2804
        %v3031 = vpop.permute.xlu0 %3030
        %3034 = vset.pattern.permute.xlu0 0
        %3035 = vperm.xlu0 %3034, %v2805
        %v3036 = vpop.permute.xlu0 %3035
        %3039 = vset.pattern.permute.xlu0 0
        %3040 = vperm.xlu0 %3039, %v2806
        %v3041 = vpop.permute.xlu0 %3040
        %3044 = vset.pattern.permute.xlu0 0
        %3045 = vperm.xlu0 %3044, %v2807
        %v3046 = vpop.permute.xlu0 %3045
        %3049 = vset.pattern.permute.xlu0 0
        %3050 = vperm.xlu0 %3049, %v2808
        %v3051 = vpop.permute.xlu0 %3050
        %3054 = vset.pattern.permute.xlu0 0
        %3055 = vperm.xlu0 %3054, %v2809
        %v3056 = vpop.permute.xlu0 %3055
        %3059 = vset.pattern.permute.xlu0 0
        %3060 = vperm.xlu0 %3059, %v2810
        %v3061 = vpop.permute.xlu0 %3060
        %3064 = vset.pattern.permute.xlu0 0
        %3065 = vperm.xlu0 %3064, %v2811
        %v3066 = vpop.permute.xlu0 %3065
        %3069 = vset.pattern.permute.xlu0 0
        %3070 = vperm.xlu0 %3069, %v2812
        %v3071 = vpop.permute.xlu0 %3070
        %3074 = vset.pattern.permute.xlu0 0
        %3075 = vperm.xlu0 %3074, %v2813
        %v3076 = vpop.permute.xlu0 %3075
        %3079 = vset.pattern.permute.xlu0 0
        %3080 = vperm.xlu0 %3079, %v2814
        %v3081 = vpop.permute.xlu0 %3080
        %3084 = vset.pattern.permute.xlu0 0
        %3085 = vperm.xlu0 %3084, %v2815
        %v3086 = vpop.permute.xlu0 %3085
        %3089 = vset.pattern.permute.xlu0 0
        %3090 = vperm.xlu0 %3089, %v2816
        %v3091 = vpop.permute.xlu0 %3090
        %3094 = vset.pattern.permute.xlu0 0
        %3095 = vperm.xlu0 %3094, %v2817
        %v3096 = vpop.permute.xlu0 %3095
        %3099 = vset.pattern.permute.xlu0 0
        %3100 = vperm.xlu0 %3099, %v2818
        %v3101 = vpop.permute.xlu0 %3100
        %3104 = vset.pattern.permute.xlu0 0
        %3105 = vperm.xlu0 %3104, %v2819
        %v3106 = vpop.permute.xlu0 %3105
        %3109 = vset.pattern.permute.xlu0 0
        %3110 = vperm.xlu0 %3109, %v2820
        %v3111 = vpop.permute.xlu0 %3110
        %3114 = vset.pattern.permute.xlu0 0
        %3115 = vperm.xlu0 %3114, %v2821
        %v3116 = vpop.permute.xlu0 %3115
        %3119 = vset.pattern.permute.xlu0 0
        %3120 = vperm.xlu0 %3119, %v2822
        %v3121 = vpop.permute.xlu0 %3120
        %3124 = vset.pattern.permute.xlu0 0
        %3125 = vperm.xlu0 %3124, %v2823
        %v3126 = vpop.permute.xlu0 %3125
        %3129 = vset.pattern.permute.xlu0 0
        %3130 = vperm.xlu0 %3129, %v2824
        %v3131 = vpop.permute.xlu0 %3130
        %3134 = vset.pattern.permute.xlu0 0
        %3135 = vperm.xlu0 %3134, %v2825
        %v3136 = vpop.permute.xlu0 %3135
        %3139 = vset.pattern.permute.xlu0 0
        %3140 = vperm.xlu0 %3139, %v2826
        %v3141 = vpop.permute.xlu0 %3140
        %3144 = vset.pattern.permute.xlu0 0
        %3145 = vperm.xlu0 %3144, %v2827
        %v3146 = vpop.permute.xlu0 %3145
        %v3212 = vunpack.c.l.b16 %v2700
        %v3213 = vunpack.c.l.b16 %v2701
        %v3214 = vunpack.c.l.b16 %v2702
        %v3215 = vunpack.c.l.b16 %v2703
        %v3216 = vunpack.c.l.b16 %v2704
        %v3217 = vunpack.c.l.b16 %v2705
        %v3218 = vunpack.c.l.b16 %v2706
        %v3219 = vunpack.c.l.b16 %v2707
        %v3220 = vunpack.c.l.b16 %v2708
        %v3221 = vunpack.c.l.b16 %v2709
        %v3222 = vunpack.c.l.b16 %v2710
        %v3223 = vunpack.c.l.b16 %v2711
        %v3224 = vunpack.c.l.b16 %v2712
        %v3225 = vunpack.c.l.b16 %v2713
        %v3226 = vunpack.c.l.b16 %v2714
        %v3227 = vunpack.c.l.b16 %v2715
        %v3228 = vunpack.c.l.b16 %v2716
        %v3229 = vunpack.c.l.b16 %v2717
        %v3230 = vunpack.c.l.b16 %v2718
        %v3231 = vunpack.c.l.b16 %v2719
        %v3232 = vunpack.c.l.b16 %v2720
        %v3233 = vunpack.c.l.b16 %v2721
        %v3234 = vunpack.c.l.b16 %v2722
        %v3235 = vunpack.c.l.b16 %v2723
        %v3236 = vunpack.c.l.b16 %v2724
        %v3237 = vunpack.c.l.b16 %v2725
        %v3238 = vunpack.c.l.b16 %v2726
        %v3239 = vunpack.c.l.b16 %v2727
        %v3240 = vunpack.c.l.b16 %v2728
        %v3241 = vunpack.c.l.b16 %v2729
        %v3242 = vunpack.c.l.b16 %v2730
        %v3243 = vunpack.c.l.b16 %v2731
        %v3244 = vunpack.c.l.b16 %v2732
        %v3245 = vunpack.c.l.b16 %v2733
        %v3246 = vunpack.c.l.b16 %v2734
        %v3247 = vunpack.c.l.b16 %v2735
        %v3248 = vunpack.c.l.b16 %v2736
        %v3249 = vunpack.c.l.b16 %v2737
        %v3250 = vunpack.c.l.b16 %v2738
        %v3251 = vunpack.c.l.b16 %v2739
        %v3252 = vunpack.c.l.b16 %v2740
        %v3253 = vunpack.c.l.b16 %v2741
        %v3254 = vunpack.c.l.b16 %v2742
        %v3255 = vunpack.c.l.b16 %v2743
        %v3256 = vunpack.c.l.b16 %v2744
        %v3257 = vunpack.c.l.b16 %v2745
        %v3258 = vunpack.c.l.b16 %v2746
        %v3259 = vunpack.c.l.b16 %v2747
        %v3260 = vunpack.c.l.b16 %v2748
        %v3261 = vunpack.c.l.b16 %v2749
        %v3262 = vunpack.c.l.b16 %v2750
        %v3263 = vunpack.c.l.b16 %v2751
        %v3264 = vunpack.c.l.b16 %v2752
        %v3265 = vunpack.c.l.b16 %v2753
        %v3266 = vunpack.c.l.b16 %v2754
        %v3267 = vunpack.c.l.b16 %v2755
        %v3268 = vunpack.c.l.b16 %v2756
        %v3269 = vunpack.c.l.b16 %v2757
        %v3270 = vunpack.c.l.b16 %v2758
        %v3271 = vunpack.c.l.b16 %v2759
        %v3272 = vunpack.c.l.b16 %v2760
        %v3273 = vunpack.c.l.b16 %v2761
        %v3274 = vunpack.c.l.b16 %v2762
        %v3275 = vunpack.c.l.b16 %v2763
        %v3276 = vpack.c.b16 %v3213, %v3212
        %v3277 = vpack.c.b16 %v3215, %v3214
        %v3278 = vpack.c.b16 %v3217, %v3216
        %v3279 = vpack.c.b16 %v3219, %v3218
        %v3280 = vpack.c.b16 %v3221, %v3220
        %v3281 = vpack.c.b16 %v3223, %v3222
        %v3282 = vpack.c.b16 %v3225, %v3224
        %v3283 = vpack.c.b16 %v3227, %v3226
        %v3284 = vpack.c.b16 %v3229, %v3228
        %v3285 = vpack.c.b16 %v3231, %v3230
        %v3286 = vpack.c.b16 %v3233, %v3232
        %v3287 = vpack.c.b16 %v3235, %v3234
        %v3288 = vpack.c.b16 %v3237, %v3236
        %v3289 = vpack.c.b16 %v3239, %v3238
        %v3290 = vpack.c.b16 %v3241, %v3240
        %v3291 = vpack.c.b16 %v3243, %v3242
        %v3292 = vpack.c.b16 %v3245, %v3244
        %v3293 = vpack.c.b16 %v3247, %v3246
        %v3294 = vpack.c.b16 %v3249, %v3248
        %v3295 = vpack.c.b16 %v3251, %v3250
        %v3296 = vpack.c.b16 %v3253, %v3252
        %v3297 = vpack.c.b16 %v3255, %v3254
        %v3298 = vpack.c.b16 %v3257, %v3256
        %v3299 = vpack.c.b16 %v3259, %v3258
        %v3300 = vpack.c.b16 %v3261, %v3260
        %v3301 = vpack.c.b16 %v3263, %v3262
        %v3302 = vpack.c.b16 %v3265, %v3264
        %v3303 = vpack.c.b16 %v3267, %v3266
        %v3304 = vpack.c.b16 %v3269, %v3268
        %v3305 = vpack.c.b16 %v3271, %v3270
        %v3306 = vpack.c.b16 %v3273, %v3272
        %v3307 = vpack.c.b16 %v3275, %v3274
        %vm3308 = vcmask 457728
        %v3310 = vsel %vm3308, %v3276, 0
        %v3313 = vsel %vm3308, %v3277, 0
        %v3316 = vsel %vm3308, %v3278, 0
        %v3319 = vsel %vm3308, %v3279, 0
        %v3322 = vsel %vm3308, %v3280, 0
        %v3325 = vsel %vm3308, %v3281, 0
        %v3328 = vsel %vm3308, %v3282, 0
        %v3331 = vsel %vm3308, %v3283, 0
        %v3334 = vsel %vm3308, %v3284, 0
        %v3337 = vsel %vm3308, %v3285, 0
        %v3340 = vsel %vm3308, %v3286, 0
        %v3343 = vsel %vm3308, %v3287, 0
        %v3346 = vsel %vm3308, %v3288, 0
        %v3349 = vsel %vm3308, %v3289, 0
        %v3352 = vsel %vm3308, %v3290, 0
        %v3355 = vsel %vm3308, %v3291, 0
        %v3358 = vsel %vm3308, %v3292, 0
        %v3361 = vsel %vm3308, %v3293, 0
        %v3364 = vsel %vm3308, %v3294, 0
        %v3367 = vsel %vm3308, %v3295, 0
        %v3370 = vsel %vm3308, %v3296, 0
        %v3373 = vsel %vm3308, %v3297, 0
        %v3376 = vsel %vm3308, %v3298, 0
        %v3379 = vsel %vm3308, %v3299, 0
        %v3382 = vsel %vm3308, %v3300, 0
        %v3385 = vsel %vm3308, %v3301, 0
        %v3388 = vsel %vm3308, %v3302, 0
        %v3391 = vsel %vm3308, %v3303, 0
        %v3394 = vsel %vm3308, %v3304, 0
        %v3397 = vsel %vm3308, %v3305, 0
        %v3400 = vsel %vm3308, %v3306, 0
        %v3403 = vsel %vm3308, %v3307, 0
        %vm3405 = vcmask 1043456
        %v3407 = vsel %vm3405, %v2699, 0
        %3409 = vmatprep.subr.bf16.mxu0 0
        %3410 = vmatpush1.bf16.msra.mxu0 %v2696
        %3411 = vmatprep.subr.bf16.mxu0 0
        %3412 = vmatpush1.bf16.msra.mxu0 %v2697
        %3413 = vmatprep.subr.bf16.mxu0 0
        %3414 = vmatpush1.bf16.msra.mxu0 %v2698
        %3415 = vmatprep.subr.bf16.mxu0 0
        %3416 = vmatpush1.bf16.msra.mxu0 %v3407
        %3417 = vmatprep.subr.bf16.mxu0 0
        %3418 = vmatpush1.bf16.msra.mxu0 0
        %3419 = vmatprep.subr.bf16.mxu0 0
        %3420 = vmatpush1.bf16.msra.mxu0 0
        %3421 = vmatprep.subr.bf16.mxu0 0
        %3422 = vmatpush1.bf16.msra.mxu0 0
        %3423 = vmatprep.subr.bf16.mxu0 0
        %3424 = vmatpush1.bf16.msra.mxu0 0
        %3425 = vmatprep.subr.bf16.mxu0 0
        %3426 = vmatpush1.bf16.msra.mxu0 0
        %3427 = vmatprep.subr.bf16.mxu0 0
        %3428 = vmatpush1.bf16.msra.mxu0 0
        %3429 = vmatprep.subr.bf16.mxu0 0
        %3430 = vmatpush1.bf16.msra.mxu0 0
        %3431 = vmatprep.subr.bf16.mxu0 0
        %3432 = vmatpush1.bf16.msra.mxu0 0
        %3433 = vmatprep.subr.bf16.mxu0 0
        %3434 = vmatpush1.bf16.msra.mxu0 0
        %3435 = vmatprep.subr.bf16.mxu0 0
        %3436 = vmatpush1.bf16.msra.mxu0 0
        %3437 = vmatprep.subr.bf16.mxu0 0
        %3438 = vmatpush1.bf16.msra.mxu0 0
        %3439 = vmatprep.subr.bf16.mxu0 0
        %3440 = vmatpush1.bf16.msra.mxu0 0
        %3441 = vmatprep.mubr.bf16.mxu0 0
        %3442 = vmatmul.mubr.bf16.gmra.mrb[0].mxu0 %v3310
        %v3443 = vpop.f32.mrb[0].mxu0
        %v3444 = vadd.f32 %v2831, %v3443
        %v3445 = vpop.f32.mrb[0].mxu0
        %v3446 = vpop.f32.mrb[0].mxu0
        %v3447 = vadd.f32 %v2836, %v3446
        %v3448 = vpop.f32.mrb[0].mxu0
        %3449 = vmatprep.mubr.bf16.mxu0 0
        %3450 = vmatmul.mubr.bf16.gmra.mrb[0].mxu0 %v3313
        %v3451 = vpop.f32.mrb[0].mxu0
        %v3452 = vadd.f32 %v2841, %v3451
        %v3453 = vpop.f32.mrb[0].mxu0
        %v3454 = vpop.f32.mrb[0].mxu0
        %v3455 = vadd.f32 %v2846, %v3454
        %v3456 = vpop.f32.mrb[0].mxu0
        %3457 = vmatprep.mubr.bf16.mxu0 0
        %3458 = vmatmul.mubr.bf16.gmra.mrb[0].mxu0 %v3316
        %v3459 = vpop.f32.mrb[0].mxu0
        %v3460 = vadd.f32 %v2851, %v3459
        %v3461 = vpop.f32.mrb[0].mxu0
        %v3462 = vpop.f32.mrb[0].mxu0
        %v3463 = vadd.f32 %v2856, %v3462
        %v3464 = vpop.f32.mrb[0].mxu0
        %3465 = vmatprep.mubr.bf16.mxu0 0
        %3466 = vmatmul.mubr.bf16.gmra.mrb[0].mxu0 %v3319
        %v3467 = vpop.f32.mrb[0].mxu0
        %v3468 = vadd.f32 %v2861, %v3467
        %v3469 = vpop.f32.mrb[0].mxu0
        %v3470 = vpop.f32.mrb[0].mxu0
        %v3471 = vadd.f32 %v2866, %v3470
        %v3472 = vpop.f32.mrb[0].mxu0
        %3473 = vmatprep.mubr.bf16.mxu0 0
        %3474 = vmatmul.mubr.bf16.gmra.mrb[0].mxu0 %v3322
        %v3475 = vpop.f32.mrb[0].mxu0
        %v3476 = vadd.f32 %v2871, %v3475
        %v3477 = vpop.f32.mrb[0].mxu0
        %v3478 = vpop.f32.mrb[0].mxu0
        %v3479 = vadd.f32 %v2876, %v3478
        %v3480 = vpop.f32.mrb[0].mxu0
        %3481 = vmatprep.mubr.bf16.mxu0 0
        %3482 = vmatmul.mubr.bf16.gmra.mrb[0].mxu0 %v3325
        %v3483 = vpop.f32.mrb[0].mxu0
        %v3484 = vadd.f32 %v2881, %v3483
        %v3485 = vpop.f32.mrb[0].mxu0
        %v3486 = vpop.f32.mrb[0].mxu0
        %v3487 = vadd.f32 %v2886, %v3486
        %v3488 = vpop.f32.mrb[0].mxu0
        %3489 = vmatprep.mubr.bf16.mxu0 0
        %3490 = vmatmul.mubr.bf16.gmra.mrb[0].mxu0 %v3328
        %v3491 = vpop.f32.mrb[0].mxu0
        %v3492 = vadd.f32 %v2891, %v3491
        %v3493 = vpop.f32.mrb[0].mxu0
        %v3494 = vpop.f32.mrb[0].mxu0
        %v3495 = vadd.f32 %v2896, %v3494
        %v3496 = vpop.f32.mrb[0].mxu0
        %3497 = vmatprep.mubr.bf16.mxu0 0
        %3498 = vmatmul.mubr.bf16.gmra.mrb[0].mxu0 %v3331
        %v3499 = vpop.f32.mrb[0].mxu0
        %v3500 = vadd.f32 %v2901, %v3499
        %v3501 = vpop.f32.mrb[0].mxu0
        %v3502 = vpop.f32.mrb[0].mxu0
        %v3503 = vadd.f32 %v2906, %v3502
        %v3504 = vpop.f32.mrb[0].mxu0
        %3505 = vmatprep.mubr.bf16.mxu0 0
        %3506 = vmatmul.mubr.bf16.gmra.mrb[0].mxu0 %v3334
        %v3507 = vpop.f32.mrb[0].mxu0
        %v3508 = vadd.f32 %v2911, %v3507
        %v3509 = vpop.f32.mrb[0].mxu0
        %v3510 = vpop.f32.mrb[0].mxu0
        %v3511 = vadd.f32 %v2916, %v3510
        %v3512 = vpop.f32.mrb[0].mxu0
        %3513 = vmatprep.mubr.bf16.mxu0 0
        %3514 = vmatmul.mubr.bf16.gmra.mrb[0].mxu0 %v3337
        %v3515 = vpop.f32.mrb[0].mxu0
        %v3516 = vadd.f32 %v2921, %v3515
        %v3517 = vpop.f32.mrb[0].mxu0
        %v3518 = vpop.f32.mrb[0].mxu0
        %v3519 = vadd.f32 %v2926, %v3518
        %v3520 = vpop.f32.mrb[0].mxu0
        %3521 = vmatprep.mubr.bf16.mxu0 0
        %3522 = vmatmul.mubr.bf16.gmra.mrb[0].mxu0 %v3340
        %v3523 = vpop.f32.mrb[0].mxu0
        %v3524 = vadd.f32 %v2931, %v3523
        %v3525 = vpop.f32.mrb[0].mxu0
        %v3526 = vpop.f32.mrb[0].mxu0
        %v3527 = vadd.f32 %v2936, %v3526
        %v3528 = vpop.f32.mrb[0].mxu0
        %3529 = vmatprep.mubr.bf16.mxu0 0
        %3530 = vmatmul.mubr.bf16.gmra.mrb[0].mxu0 %v3343
        %v3531 = vpop.f32.mrb[0].mxu0
        %v3532 = vadd.f32 %v2941, %v3531
        %v3533 = vpop.f32.mrb[0].mxu0
        %v3534 = vpop.f32.mrb[0].mxu0
        %v3535 = vadd.f32 %v2946, %v3534
        %v3536 = vpop.f32.mrb[0].mxu0
        %3537 = vmatprep.mubr.bf16.mxu0 0
        %3538 = vmatmul.mubr.bf16.gmra.mrb[0].mxu0 %v3346
        %v3539 = vpop.f32.mrb[0].mxu0
        %v3540 = vadd.f32 %v2951, %v3539
        %v3541 = vpop.f32.mrb[0].mxu0
        %v3542 = vpop.f32.mrb[0].mxu0
        %v3543 = vadd.f32 %v2956, %v3542
        %v3544 = vpop.f32.mrb[0].mxu0
        %3545 = vmatprep.mubr.bf16.mxu0 0
        %3546 = vmatmul.mubr.bf16.gmra.mrb[0].mxu0 %v3349
        %v3547 = vpop.f32.mrb[0].mxu0
        %v3548 = vadd.f32 %v2961, %v3547
        %v3549 = vpop.f32.mrb[0].mxu0
        %v3550 = vpop.f32.mrb[0].mxu0
        %v3551 = vadd.f32 %v2966, %v3550
        %v3552 = vpop.f32.mrb[0].mxu0
        %3553 = vmatprep.mubr.bf16.mxu0 0
        %3554 = vmatmul.mubr.bf16.gmra.mrb[0].mxu0 %v3352
        %v3555 = vpop.f32.mrb[0].mxu0
        %v3556 = vadd.f32 %v2971, %v3555
        %v3557 = vpop.f32.mrb[0].mxu0
        %v3558 = vpop.f32.mrb[0].mxu0
        %v3559 = vadd.f32 %v2976, %v3558
        %v3560 = vpop.f32.mrb[0].mxu0
        %3561 = vmatprep.mubr.bf16.mxu0 0
        %3562 = vmatmul.mubr.bf16.gmra.mrb[0].mxu0 %v3355
        %v3563 = vpop.f32.mrb[0].mxu0
        %v3564 = vadd.f32 %v2981, %v3563
        %v3565 = vpop.f32.mrb[0].mxu0
        %v3566 = vpop.f32.mrb[0].mxu0
        %v3567 = vadd.f32 %v2986, %v3566
        %v3568 = vpop.f32.mrb[0].mxu0
        %3569 = vmatprep.mubr.bf16.mxu0 0
        %3570 = vmatmul.mubr.bf16.gmra.mrb[0].mxu0 %v3358
        %v3571 = vpop.f32.mrb[0].mxu0
        %v3572 = vadd.f32 %v2991, %v3571
        %v3573 = vpop.f32.mrb[0].mxu0
        %v3574 = vpop.f32.mrb[0].mxu0
        %v3575 = vadd.f32 %v2996, %v3574
        %v3576 = vpop.f32.mrb[0].mxu0
        %3577 = vmatprep.mubr.bf16.mxu0 0
        %3578 = vmatmul.mubr.bf16.gmra.mrb[0].mxu0 %v3361
        %v3579 = vpop.f32.mrb[0].mxu0
        %v3580 = vadd.f32 %v3001, %v3579
        %v3581 = vpop.f32.mrb[0].mxu0
        %v3582 = vpop.f32.mrb[0].mxu0
        %v3583 = vadd.f32 %v3006, %v3582
        %v3584 = vpop.f32.mrb[0].mxu0
        %3585 = vmatprep.mubr.bf16.mxu0 0
        %3586 = vmatmul.mubr.bf16.gmra.mrb[0].mxu0 %v3364
        %v3587 = vpop.f32.mrb[0].mxu0
        %v3588 = vadd.f32 %v3011, %v3587
        %v3589 = vpop.f32.mrb[0].mxu0
        %v3590 = vpop.f32.mrb[0].mxu0
        %v3591 = vadd.f32 %v3016, %v3590
        %v3592 = vpop.f32.mrb[0].mxu0
        %3593 = vmatprep.mubr.bf16.mxu0 0
        %3594 = vmatmul.mubr.bf16.gmra.mrb[0].mxu0 %v3367
        %v3595 = vpop.f32.mrb[0].mxu0
        %v3596 = vadd.f32 %v3021, %v3595
        %v3597 = vpop.f32.mrb[0].mxu0
        %v3598 = vpop.f32.mrb[0].mxu0
        %v3599 = vadd.f32 %v3026, %v3598
        %v3600 = vpop.f32.mrb[0].mxu0
        %3601 = vmatprep.mubr.bf16.mxu0 0
        %3602 = vmatmul.mubr.bf16.gmra.mrb[0].mxu0 %v3370
        %v3603 = vpop.f32.mrb[0].mxu0
        %v3604 = vadd.f32 %v3031, %v3603
        %v3605 = vpop.f32.mrb[0].mxu0
        %v3606 = vpop.f32.mrb[0].mxu0
        %v3607 = vadd.f32 %v3036, %v3606
        %v3608 = vpop.f32.mrb[0].mxu0
        %3609 = vmatprep.mubr.bf16.mxu0 0
        %3610 = vmatmul.mubr.bf16.gmra.mrb[0].mxu0 %v3373
        %v3611 = vpop.f32.mrb[0].mxu0
        %v3612 = vadd.f32 %v3041, %v3611
        %v3613 = vpop.f32.mrb[0].mxu0
        %v3614 = vpop.f32.mrb[0].mxu0
        %v3615 = vadd.f32 %v3046, %v3614
        %v3616 = vpop.f32.mrb[0].mxu0
        %3617 = vmatprep.mubr.bf16.mxu0 0
        %3618 = vmatmul.mubr.bf16.gmra.mrb[0].mxu0 %v3376
        %v3619 = vpop.f32.mrb[0].mxu0
        %v3620 = vadd.f32 %v3051, %v3619
        %v3621 = vpop.f32.mrb[0].mxu0
        %v3622 = vpop.f32.mrb[0].mxu0
        %v3623 = vadd.f32 %v3056, %v3622
        %v3624 = vpop.f32.mrb[0].mxu0
        %3625 = vmatprep.mubr.bf16.mxu0 0
        %3626 = vmatmul.mubr.bf16.gmra.mrb[0].mxu0 %v3379
        %v3627 = vpop.f32.mrb[0].mxu0
        %v3628 = vadd.f32 %v3061, %v3627
        %v3629 = vpop.f32.mrb[0].mxu0
        %v3630 = vpop.f32.mrb[0].mxu0
        %v3631 = vadd.f32 %v3066, %v3630
        %v3632 = vpop.f32.mrb[0].mxu0
        %3633 = vmatprep.mubr.bf16.mxu0 0
        %3634 = vmatmul.mubr.bf16.gmra.mrb[0].mxu0 %v3382
        %v3635 = vpop.f32.mrb[0].mxu0
        %v3636 = vadd.f32 %v3071, %v3635
        %v3637 = vpop.f32.mrb[0].mxu0
        %v3638 = vpop.f32.mrb[0].mxu0
        %v3639 = vadd.f32 %v3076, %v3638
        %v3640 = vpop.f32.mrb[0].mxu0
        %3641 = vmatprep.mubr.bf16.mxu0 0
        %3642 = vmatmul.mubr.bf16.gmra.mrb[0].mxu0 %v3385
        %v3643 = vpop.f32.mrb[0].mxu0
        %v3644 = vadd.f32 %v3081, %v3643
        %v3645 = vpop.f32.mrb[0].mxu0
        %v3646 = vpop.f32.mrb[0].mxu0
        %v3647 = vadd.f32 %v3086, %v3646
        %v3648 = vpop.f32.mrb[0].mxu0
        %3649 = vmatprep.mubr.bf16.mxu0 0
        %3650 = vmatmul.mubr.bf16.gmra.mrb[0].mxu0 %v3388
        %v3651 = vpop.f32.mrb[0].mxu0
        %v3652 = vadd.f32 %v3091, %v3651
        %v3653 = vpop.f32.mrb[0].mxu0
        %v3654 = vpop.f32.mrb[0].mxu0
        %v3655 = vadd.f32 %v3096, %v3654
        %v3656 = vpop.f32.mrb[0].mxu0
        %3657 = vmatprep.mubr.bf16.mxu0 0
        %3658 = vmatmul.mubr.bf16.gmra.mrb[0].mxu0 %v3391
        %v3659 = vpop.f32.mrb[0].mxu0
        %v3660 = vadd.f32 %v3101, %v3659
        %v3661 = vpop.f32.mrb[0].mxu0
        %v3662 = vpop.f32.mrb[0].mxu0
        %v3663 = vadd.f32 %v3106, %v3662
        %v3664 = vpop.f32.mrb[0].mxu0
        %3665 = vmatprep.mubr.bf16.mxu0 0
        %3666 = vmatmul.mubr.bf16.gmra.mrb[0].mxu0 %v3394
        %v3667 = vpop.f32.mrb[0].mxu0
        %v3668 = vadd.f32 %v3111, %v3667
        %v3669 = vpop.f32.mrb[0].mxu0
        %v3670 = vpop.f32.mrb[0].mxu0
        %v3671 = vadd.f32 %v3116, %v3670
        %v3672 = vpop.f32.mrb[0].mxu0
        %3673 = vmatprep.mubr.bf16.mxu0 0
        %3674 = vmatmul.mubr.bf16.gmra.mrb[0].mxu0 %v3397
        %v3675 = vpop.f32.mrb[0].mxu0
        %v3676 = vadd.f32 %v3121, %v3675
        %v3677 = vpop.f32.mrb[0].mxu0
        %v3678 = vpop.f32.mrb[0].mxu0
        %v3679 = vadd.f32 %v3126, %v3678
        %v3680 = vpop.f32.mrb[0].mxu0
        %3681 = vmatprep.mubr.bf16.mxu0 0
        %3682 = vmatmul.mubr.bf16.gmra.mrb[0].mxu0 %v3400
        %v3683 = vpop.f32.mrb[0].mxu0
        %v3684 = vadd.f32 %v3131, %v3683
        %v3685 = vpop.f32.mrb[0].mxu0
        %v3686 = vpop.f32.mrb[0].mxu0
        %v3687 = vadd.f32 %v3136, %v3686
        %v3688 = vpop.f32.mrb[0].mxu0
        %3689 = vmatprep.mubr.bf16.mxu0 0
        %3690 = vmatmul.mubr.bf16.gmra.mrb[0].mxu0 %v3403
        %v3691 = vpop.f32.mrb[0].mxu0
        %v3692 = vadd.f32 %v3141, %v3691
        %v3693 = vpop.f32.mrb[0].mxu0
        %v3694 = vpop.f32.mrb[0].mxu0
        %v3695 = vadd.f32 %v3146, %v3694
        %v3696 = vpop.f32.mrb[0].mxu0
        %3697 = vdwg.mxu0
        %v3698 = vmax.f32 %v3444, 0.0
        %v3699 = vmax.f32 %v3447, 0.0
        %v3700 = vmax.f32 %v3452, 0.0
        %v3701 = vmax.f32 %v3455, 0.0
        %v3702 = vmax.f32 %v3460, 0.0
        %v3703 = vmax.f32 %v3463, 0.0
        %v3704 = vmax.f32 %v3468, 0.0
        %v3705 = vmax.f32 %v3471, 0.0
        %v3706 = vmax.f32 %v3476, 0.0
        %v3707 = vmax.f32 %v3479, 0.0
        %v3708 = vmax.f32 %v3484, 0.0
        %v3709 = vmax.f32 %v3487, 0.0
        %v3710 = vmax.f32 %v3492, 0.0
        %v3711 = vmax.f32 %v3495, 0.0
        %v3712 = vmax.f32 %v3500, 0.0
        %v3713 = vmax.f32 %v3503, 0.0
        %v3714 = vmax.f32 %v3508, 0.0
        %v3715 = vmax.f32 %v3511, 0.0
        %v3716 = vmax.f32 %v3516, 0.0
        %v3717 = vmax.f32 %v3519, 0.0
        %v3718 = vmax.f32 %v3524, 0.0
        %v3719 = vmax.f32 %v3527, 0.0
        %v3720 = vmax.f32 %v3532, 0.0
        %v3721 = vmax.f32 %v3535, 0.0
        %v3722 = vmax.f32 %v3540, 0.0
        %v3723 = vmax.f32 %v3543, 0.0
        %v3724 = vmax.f32 %v3548, 0.0
        %v3725 = vmax.f32 %v3551, 0.0
        %v3726 = vmax.f32 %v3556, 0.0
        %v3727 = vmax.f32 %v3559, 0.0
        %v3728 = vmax.f32 %v3564, 0.0
        %v3729 = vmax.f32 %v3567, 0.0
        %v3730 = vmax.f32 %v3572, 0.0
        %v3731 = vmax.f32 %v3575, 0.0
        %v3732 = vmax.f32 %v3580, 0.0
        %v3733 = vmax.f32 %v3583, 0.0
        %v3734 = vmax.f32 %v3588, 0.0
        %v3735 = vmax.f32 %v3591, 0.0
        %v3736 = vmax.f32 %v3596, 0.0
        %v3737 = vmax.f32 %v3599, 0.0
        %v3738 = vmax.f32 %v3604, 0.0
        %v3739 = vmax.f32 %v3607, 0.0
        %v3740 = vmax.f32 %v3612, 0.0
        %v3741 = vmax.f32 %v3615, 0.0
        %v3742 = vmax.f32 %v3620, 0.0
        %v3743 = vmax.f32 %v3623, 0.0
        %v3744 = vmax.f32 %v3628, 0.0
        %v3745 = vmax.f32 %v3631, 0.0
        %v3746 = vmax.f32 %v3636, 0.0
        %v3747 = vmax.f32 %v3639, 0.0
        %v3748 = vmax.f32 %v3644, 0.0
        %v3749 = vmax.f32 %v3647, 0.0
        %v3750 = vmax.f32 %v3652, 0.0
        %v3751 = vmax.f32 %v3655, 0.0
        %v3752 = vmax.f32 %v3660, 0.0
        %v3753 = vmax.f32 %v3663, 0.0
        %v3754 = vmax.f32 %v3668, 0.0
        %v3755 = vmax.f32 %v3671, 0.0
        %v3756 = vmax.f32 %v3676, 0.0
        %v3757 = vmax.f32 %v3679, 0.0
        %v3758 = vmax.f32 %v3684, 0.0
        %v3759 = vmax.f32 %v3687, 0.0
        %v3760 = vmax.f32 %v3692, 0.0
        %v3761 = vmax.f32 %v3695, 0.0
        %v3762 = vld [vmem:[%s4] sm:$0xff]
        %v3763 = vld [vmem:[%s4 + $0x8] sm:$0xff]
        %v3764 = vld [vmem:[%s4 + $0x10] sm:$0xff]
        %v3765 = vld [vmem:[%s4 + $0x18] sm:$0xff]
        %v3766 = vld [vmem:[%s4 + $0x20] sm:$0xff]
        %v3767 = vld [vmem:[%s4 + $0x28] sm:$0xff]
        %v3768 = vld [vmem:[%s4 + $0x30] sm:$0xff]
        %v3769 = vld [vmem:[%s4 + $0x38] sm:$0xff]
        %v3770 = vpack.c.bf16 %v3699, %v3698
        %v3771 = vpack.c.bf16 %v3701, %v3700
        %v3772 = vpack.c.bf16 %v3703, %v3702
        %v3773 = vpack.c.bf16 %v3705, %v3704
        %v3774 = vpack.c.bf16 %v3707, %v3706
        %v3775 = vpack.c.bf16 %v3709, %v3708
        %v3776 = vpack.c.bf16 %v3711, %v3710
        %v3777 = vpack.c.bf16 %v3713, %v3712
        %v3778 = vpack.c.bf16 %v3715, %v3714
        %v3779 = vpack.c.bf16 %v3717, %v3716
        %v3780 = vpack.c.bf16 %v3719, %v3718
        %v3781 = vpack.c.bf16 %v3721, %v3720
        %v3782 = vpack.c.bf16 %v3723, %v3722
        %v3783 = vpack.c.bf16 %v3725, %v3724
        %v3784 = vpack.c.bf16 %v3727, %v3726
        %v3785 = vpack.c.bf16 %v3729, %v3728
        %v3786 = vpack.c.bf16 %v3731, %v3730
        %v3787 = vpack.c.bf16 %v3733, %v3732
        %v3788 = vpack.c.bf16 %v3735, %v3734
        %v3789 = vpack.c.bf16 %v3737, %v3736
        %v3790 = vpack.c.bf16 %v3739, %v3738
        %v3791 = vpack.c.bf16 %v3741, %v3740
        %v3792 = vpack.c.bf16 %v3743, %v3742
        %v3793 = vpack.c.bf16 %v3745, %v3744
        %v3794 = vpack.c.bf16 %v3747, %v3746
        %v3795 = vpack.c.bf16 %v3749, %v3748
        %v3796 = vpack.c.bf16 %v3751, %v3750
        %v3797 = vpack.c.bf16 %v3753, %v3752
        %v3798 = vpack.c.bf16 %v3755, %v3754
        %v3799 = vpack.c.bf16 %v3757, %v3756
        %v3800 = vpack.c.bf16 %v3759, %v3758
        %v3801 = vpack.c.bf16 %v3761, %v3760
        %v3802 = vld [vmem:[%s7 + $0x5b8] sm:$0xff]
        %v3803 = vld [vmem:[%s7 + $0x5c0] sm:$0xff]
        %v3804 = vld [vmem:[%s7 + $0x5c8] sm:$0xff]
        %v3805 = vld [vmem:[%s7 + $0x5d0] sm:$0xff]
        %3807 = vset.pattern.permute.xlu0 0
        %3808 = vperm.xlu0 %3807, %v3802
        %v3809 = vpop.permute.xlu0 %3808
        %3812 = vset.pattern.permute.xlu0 0
        %3813 = vperm.xlu0 %3812, %v3803
        %v3814 = vpop.permute.xlu0 %3813
        %3817 = vset.pattern.permute.xlu0 0
        %3818 = vperm.xlu0 %3817, %v3804
        %v3819 = vpop.permute.xlu0 %3818
        %3822 = vset.pattern.permute.xlu0 0
        %3823 = vperm.xlu0 %3822, %v3805
        %v3824 = vpop.permute.xlu0 %3823
        %v3834 = vunpack.c.l.b16 %v3762
        %v3835 = vunpack.c.h.b16 %v3762
        %v3836 = vunpack.c.l.b16 %v3763
        %v3837 = vunpack.c.h.b16 %v3763
        %v3838 = vunpack.c.l.b16 %v3764
        %v3839 = vunpack.c.h.b16 %v3764
        %v3840 = vunpack.c.l.b16 %v3765
        %v3841 = vunpack.c.h.b16 %v3765
        %v3842 = vunpack.c.l.b16 %v3766
        %v3843 = vunpack.c.h.b16 %v3766
        %v3844 = vunpack.c.l.b16 %v3767
        %v3845 = vunpack.c.h.b16 %v3767
        %v3846 = vunpack.c.l.b16 %v3768
        %v3847 = vunpack.c.h.b16 %v3768
        %v3848 = vunpack.c.l.b16 %v3769
        %v3849 = vunpack.c.h.b16 %v3769
        %v3850 = vpack.c.b16 %v3838, %v3834
        %v3851 = vpack.c.b16 %v3839, %v3835
        %v3852 = vpack.c.b16 %v3840, %v3836
        %v3853 = vpack.c.b16 %v3841, %v3837
        %v3854 = vpack.c.b16 %v3846, %v3842
        %v3855 = vpack.c.b16 %v3847, %v3843
        %v3856 = vpack.c.b16 %v3848, %v3844
        %v3857 = vpack.c.b16 %v3849, %v3845
        %3866 = vmatprep.subr.bf16.mxu0 0
        %3867 = vmatpush1.bf16.msra.mxu0 %v3770
        %3868 = vmatprep.subr.bf16.mxu0 0
        %3869 = vmatpush1.bf16.msra.mxu0 %v3771
        %3870 = vmatprep.subr.bf16.mxu0 0
        %3871 = vmatpush1.bf16.msra.mxu0 %v3772
        %3872 = vmatprep.subr.bf16.mxu0 0
        %3873 = vmatpush1.bf16.msra.mxu0 %v3773
        %3874 = vmatprep.subr.bf16.mxu0 0
        %3875 = vmatpush1.bf16.msra.mxu0 %v3774
        %3876 = vmatprep.subr.bf16.mxu0 0
        %3877 = vmatpush1.bf16.msra.mxu0 %v3775
        %3878 = vmatprep.subr.bf16.mxu0 0
        %3879 = vmatpush1.bf16.msra.mxu0 %v3776
        %3880 = vmatprep.subr.bf16.mxu0 0
        %3881 = vmatpush1.bf16.msra.mxu0 %v3777
        %3882 = vmatprep.subr.bf16.mxu0 0
        %3883 = vmatpush1.bf16.msra.mxu0 %v3778
        %3884 = vmatprep.subr.bf16.mxu0 0
        %3885 = vmatpush1.bf16.msra.mxu0 %v3779
        %3886 = vmatprep.subr.bf16.mxu0 0
        %3887 = vmatpush1.bf16.msra.mxu0 %v3780
        %3888 = vmatprep.subr.bf16.mxu0 0
        %3889 = vmatpush1.bf16.msra.mxu0 %v3781
        %3890 = vmatprep.subr.bf16.mxu0 0
        %3891 = vmatpush1.bf16.msra.mxu0 %v3782
        %3892 = vmatprep.subr.bf16.mxu0 0
        %3893 = vmatpush1.bf16.msra.mxu0 %v3783
        %3894 = vmatprep.subr.bf16.mxu0 0
        %3895 = vmatpush1.bf16.msra.mxu0 %v3784
        %3896 = vmatprep.subr.bf16.mxu0 0
        %3897 = vmatpush1.bf16.msra.mxu0 %v3785
        %3898 = vmatprep.mubr.bf16.mxu0 %v3851
        %3899 = vmatmul.mubr.bf16.gmra.mrb[0].mxu0 %v3850
        %v3900 = vpop.f32.mrb[0].mxu0
        %v3901 = vadd.f32 %v3809, %v3900
        %v3902 = vpop.f32.mrb[0].mxu0
        %v3903 = vpop.f32.mrb[0].mxu0
        %v3904 = vadd.f32 %v3814, %v3903
        %v3905 = vpop.f32.mrb[0].mxu0
        %3906 = vmatprep.mubr.bf16.mxu0 %v3855
        %3907 = vmatmul.mubr.bf16.gmra.mrb[0].mxu0 %v3854
        %v3908 = vpop.f32.mrb[0].mxu0
        %v3909 = vadd.f32 %v3819, %v3908
        %v3910 = vpop.f32.mrb[0].mxu0
        %v3911 = vpop.f32.mrb[0].mxu0
        %v3912 = vadd.f32 %v3824, %v3911
        %v3913 = vpop.f32.mrb[0].mxu0
        %3914 = vdwg.mxu0
        %3915 = vmatprep.subr.bf16.mxu0 0
        %3916 = vmatpush1.bf16.msra.mxu0 %v3786
        %3917 = vmatprep.subr.bf16.mxu0 0
        %3918 = vmatpush1.bf16.msra.mxu0 %v3787
        %3919 = vmatprep.subr.bf16.mxu0 0
        %3920 = vmatpush1.bf16.msra.mxu0 %v3788
        %3921 = vmatprep.subr.bf16.mxu0 0
        %3922 = vmatpush1.bf16.msra.mxu0 %v3789
        %3923 = vmatprep.subr.bf16.mxu0 0
        %3924 = vmatpush1.bf16.msra.mxu0 %v3790
        %3925 = vmatprep.subr.bf16.mxu0 0
        %3926 = vmatpush1.bf16.msra.mxu0 %v3791
        %3927 = vmatprep.subr.bf16.mxu0 0
        %3928 = vmatpush1.bf16.msra.mxu0 %v3792
        %3929 = vmatprep.subr.bf16.mxu0 0
        %3930 = vmatpush1.bf16.msra.mxu0 %v3793
        %3931 = vmatprep.subr.bf16.mxu0 0
        %3932 = vmatpush1.bf16.msra.mxu0 %v3794
        %3933 = vmatprep.subr.bf16.mxu0 0
        %3934 = vmatpush1.bf16.msra.mxu0 %v3795
        %3935 = vmatprep.subr.bf16.mxu0 0
        %3936 = vmatpush1.bf16.msra.mxu0 %v3796
        %3937 = vmatprep.subr.bf16.mxu0 0
        %3938 = vmatpush1.bf16.msra.mxu0 %v3797
        %3939 = vmatprep.subr.bf16.mxu0 0
        %3940 = vmatpush1.bf16.msra.mxu0 %v3798
        %3941 = vmatprep.subr.bf16.mxu0 0
        %3942 = vmatpush1.bf16.msra.mxu0 %v3799
        %3943 = vmatprep.subr.bf16.mxu0 0
        %3944 = vmatpush1.bf16.msra.mxu0 %v3800
        %3945 = vmatprep.subr.bf16.mxu0 0
        %3946 = vmatpush1.bf16.msra.mxu0 %v3801
        %3947 = vmatprep.mubr.bf16.mxu0 %v3853
        %3948 = vmatmul.mubr.bf16.gmra.mrb[0].mxu0 %v3852
        %v3949 = vpop.f32.mrb[0].mxu0
        %v3950 = vadd.f32 %v3901, %v3949
        %v3951 = vpop.f32.mrb[0].mxu0
        %v3952 = vpop.f32.mrb[0].mxu0
        %v3953 = vadd.f32 %v3904, %v3952
        %v3954 = vpop.f32.mrb[0].mxu0
        %3955 = vmatprep.mubr.bf16.mxu0 %v3857
        %3956 = vmatmul.mubr.bf16.gmra.mrb[0].mxu0 %v3856
        %v3957 = vpop.f32.mrb[0].mxu0
        %v3958 = vadd.f32 %v3909, %v3957
        %v3959 = vpop.f32.mrb[0].mxu0
        %v3960 = vpop.f32.mrb[0].mxu0
        %v3961 = vadd.f32 %v3912, %v3960
        %v3962 = vpop.f32.mrb[0].mxu0
        %3963 = vdwg.mxu0
        %v3964 = vld [vmem:[%s5] sm:$0xf]
        %v3965 = vld [vmem:[%s5 + $0x4] sm:$0xf]
        %v3966 = vld [vmem:[%s5 + $0x8] sm:$0xf]
        %v3967 = vld [vmem:[%s5 + $0xc] sm:$0xf]
        %v3968 = vld [vmem:[%s7 + $0x5d8] sm:$0xff]
        %v3969 = vld [vmem:[%s7 + $0x5e0] sm:$0xff]
        %v3970 = vld [vmem:[%s7 + $0x5e8] sm:$0xff]
        %v3971 = vld [vmem:[%s7 + $0x5f0] sm:$0xff]
        %3973 = vset.pattern.permute.xlu0 0
        %3974 = vperm.xlu0 %3973, %v3968
        %v3975 = vpop.permute.xlu0 %3974
        %3978 = vset.pattern.permute.xlu0 0
        %3979 = vperm.xlu0 %3978, %v3969
        %v3980 = vpop.permute.xlu0 %3979
        %3983 = vset.pattern.permute.xlu0 0
        %3984 = vperm.xlu0 %3983, %v3970
        %v3985 = vpop.permute.xlu0 %3984
        %3988 = vset.pattern.permute.xlu0 0
        %3989 = vperm.xlu0 %3988, %v3971
        %v3990 = vpop.permute.xlu0 %3989
        %v3996 = vunpack.c.l.b16 %v3964
        %v3997 = vunpack.c.l.b16 %v3965
        %v3998 = vunpack.c.l.b16 %v3966
        %v3999 = vunpack.c.l.b16 %v3967
        %v4000 = vpack.c.b16 %v3997, %v3996
        %v4001 = vpack.c.b16 %v3999, %v3998
        %v4003 = vsel %vm3308, %v4000, 0
        %v4006 = vsel %vm3308, %v4001, 0
        %4008 = vmatprep.subr.bf16.mxu0 0
        %4009 = vmatpush1.bf16.msra.mxu0 %v2696
        %4010 = vmatprep.subr.bf16.mxu0 0
        %4011 = vmatpush1.bf16.msra.mxu0 %v2697
        %4012 = vmatprep.subr.bf16.mxu0 0
        %4013 = vmatpush1.bf16.msra.mxu0 %v2698
        %4014 = vmatprep.subr.bf16.mxu0 0
        %4015 = vmatpush1.bf16.msra.mxu0 %v3407
        %4016 = vmatprep.subr.bf16.mxu0 0
        %4017 = vmatpush1.bf16.msra.mxu0 0
        %4018 = vmatprep.subr.bf16.mxu0 0
        %4019 = vmatpush1.bf16.msra.mxu0 0
        %4020 = vmatprep.subr.bf16.mxu0 0
        %4021 = vmatpush1.bf16.msra.mxu0 0
        %4022 = vmatprep.subr.bf16.mxu0 0
        %4023 = vmatpush1.bf16.msra.mxu0 0
        %4024 = vmatprep.subr.bf16.mxu0 0
        %4025 = vmatpush1.bf16.msra.mxu0 0
        %4026 = vmatprep.subr.bf16.mxu0 0
        %4027 = vmatpush1.bf16.msra.mxu0 0
        %4028 = vmatprep.subr.bf16.mxu0 0
        %4029 = vmatpush1.bf16.msra.mxu0 0
        %4030 = vmatprep.subr.bf16.mxu0 0
        %4031 = vmatpush1.bf16.msra.mxu0 0
        %4032 = vmatprep.subr.bf16.mxu0 0
        %4033 = vmatpush1.bf16.msra.mxu0 0
        %4034 = vmatprep.subr.bf16.mxu0 0
        %4035 = vmatpush1.bf16.msra.mxu0 0
        %4036 = vmatprep.subr.bf16.mxu0 0
        %4037 = vmatpush1.bf16.msra.mxu0 0
        %4038 = vmatprep.subr.bf16.mxu0 0
        %4039 = vmatpush1.bf16.msra.mxu0 0
        %4040 = vmatprep.mubr.bf16.mxu0 0
        %4041 = vmatmul.mubr.bf16.gmra.mrb[0].mxu0 %v4003
        %v4042 = vpop.f32.mrb[0].mxu0
        %v4043 = vadd.f32 %v3975, %v4042
        %v4044 = vpop.f32.mrb[0].mxu0
        %v4045 = vpop.f32.mrb[0].mxu0
        %v4046 = vadd.f32 %v3980, %v4045
        %v4047 = vpop.f32.mrb[0].mxu0
        %4048 = vmatprep.mubr.bf16.mxu0 0
        %4049 = vmatmul.mubr.bf16.gmra.mrb[0].mxu0 %v4006
        %v4050 = vpop.f32.mrb[0].mxu0
        %v4051 = vadd.f32 %v3985, %v4050
        %v4052 = vpop.f32.mrb[0].mxu0
        %v4053 = vpop.f32.mrb[0].mxu0
        %v4054 = vadd.f32 %v3990, %v4053
        %v4055 = vpop.f32.mrb[0].mxu0
        %4056 = vdwg.mxu0
        %v4057 = vmax.f32 %v4043, 0.0
        %v4058 = vmax.f32 %v4046, 0.0
        %v4059 = vmax.f32 %v4051, 0.0
        %v4060 = vmax.f32 %v4054, 0.0
        %v4061 = vld [vmem:[%s6] sm:$0x3]
        %v4062 = vpack.c.bf16 %v4058, %v4057
        %v4063 = vpack.c.bf16 %v4060, %v4059
        %v4064 = vld [vmem:[%s7 + $0x5f8] sm:$0x7]
        %4066 = vset.pattern.permute.xlu0 0
        %4067 = vperm.xlu0 %4066, %v4064
        %v4068 = vpop.permute.xlu0 %4067
        %vm4070 = vcmask 261120
        %v4072 = vsel %vm4070, %v4061, 0
        %4074 = vmatprep.subr.bf16.mxu0 0
        %4075 = vmatpush1.bf16.msra.mxu0 %v4062
        %4076 = vmatprep.subr.bf16.mxu0 0
        %4077 = vmatpush1.bf16.msra.mxu0 %v4063
        %4078 = vmatprep.subr.bf16.mxu0 0
        %4079 = vmatpush1.bf16.msra.mxu0 0
        %4080 = vmatprep.subr.bf16.mxu0 0
        %4081 = vmatpush1.bf16.msra.mxu0 0
        %4082 = vmatprep.subr.bf16.mxu0 0
        %4083 = vmatpush1.bf16.msra.mxu0 0
        %4084 = vmatprep.subr.bf16.mxu0 0
        %4085 = vmatpush1.bf16.msra.mxu0 0
        %4086 = vmatprep.subr.bf16.mxu0 0
        %4087 = vmatpush1.bf16.msra.mxu0 0
        %4088 = vmatprep.subr.bf16.mxu0 0
        %4089 = vmatpush1.bf16.msra.mxu0 0
        %4090 = vmatprep.subr.bf16.mxu0 0
        %4091 = vmatpush1.bf16.msra.mxu0 0
        %4092 = vmatprep.subr.bf16.mxu0 0
        %4093 = vmatpush1.bf16.msra.mxu0 0
        %4094 = vmatprep.subr.bf16.mxu0 0
        %4095 = vmatpush1.bf16.msra.mxu0 0
        %4096 = vmatprep.subr.bf16.mxu0 0
        %4097 = vmatpush1.bf16.msra.mxu0 0
        %4098 = vmatprep.subr.bf16.mxu0 0
        %4099 = vmatpush1.bf16.msra.mxu0 0
        %4100 = vmatprep.subr.bf16.mxu0 0
        %4101 = vmatpush1.bf16.msra.mxu0 0
        %4102 = vmatprep.subr.bf16.mxu0 0
        %4103 = vmatpush1.bf16.msra.mxu0 0
        %4104 = vmatprep.subr.bf16.mxu0 0
        %4105 = vmatpush1.bf16.msra.mxu0 0
        %4106 = vmatprep.mubr.bf16.mxu0 0
        %4107 = vmatmul.mubr.bf16.gmra.mrb[0].mxu0 %v4072
        %v4108 = vpop.f32.mrb[0].mxu0
        %v4109 = vadd.f32 %v4068, %v4108
        %v4110 = vpop.f32.mrb[0].mxu0
        %v4111 = vpop.f32.mrb[0].mxu0
        %v4112 = vpop.f32.mrb[0].mxu0
        %4113 = vdwg.mxu0
        %4114 = vst [vmem:[%s299] sm:$0xff] %v3950
        %4115 = vst [vmem:[%s299 + $0x8] sm:$0xff] %v3953
        %4116 = vst [vmem:[%s299 + $0x10] sm:$0xff] %v3958
        %4117 = vst [vmem:[%s299 + $0x18] sm:$0xff] %v3961
        %4118 = vst [vmem:[%s299 + $0x20] sm:$0x7] %v4109
        %s4119 = sand.u32 %s203, 1
        %s4120 = scalar_lea.sflag [#allocation3], %s4119
        %s4121 = sand.u32 %s203, 1
        %s4122 = smul.addr %s4121, 40
        %s4123 = scalar_lea.vmem [#allocation2], %s4122
        // Predicated region
        $region53: #{tpu_custom_call.1} parent=51 // pred_check
          %p4124 = pneg %p213
        $region54: #{tpu_custom_call.1} parent=51 // pred_check_branch
          %4126 = sbr.rel (%p4124) target = $region56
        $region55: #{tpu_custom_call.1} parent=51 // pred_region
          %s4128 = ssub.s32 640, 640
          %4129 = vsyncadd %s4120, %s4128
          %s4130 = smul.addr %s22, 128
          %s4131 = scalar_lea.hbm %s8, %s4130
          %s4132 = sshll.u32 %s4123, 4
          %s4133 = int_to_ptr.vmem [resolvable:$true] %s4132
          %4138 = dma.vmem_to_hbm [thread:$0]  %s4133, 640, %s4131, %s4120, 128, 256, 8
        $region56: #{tpu_custom_call.1} parent=51 // pred_fallthru
          _
      $region52: #{tpu_custom_call.1} parent=5 // pred_fallthru
        _
      %p4139 = scmp.le.s32.totalorder 2, %s17
      // Predicated region
      $region57: #{tpu_custom_call.1} parent=5 // pred_check
        %p4140 = pneg %p4139
      $region58: #{tpu_custom_call.1} parent=5 // pred_check_branch
        %4142 = sbr.rel (%p4140) target = $region60
      $region59: #{tpu_custom_call.1} parent=5 // pred_region
        %s4143 = ssub.s32 %s17, 2
        // Predicated region
        $region61: #{tpu_custom_call.1} parent=59 // pred_check
          %p4144 = pneg %p219
        $region62: #{tpu_custom_call.1} parent=59 // pred_check_branch
          %4146 = sbr.rel (%p4144) target = $region64
        $region63: #{tpu_custom_call.1} parent=59 // pred_region
          %s4147 = sand.u32 %s204, 1
          %s4148 = scalar_lea.sflag [#allocation3], %s4147
          %s4149 = sand.u32 %s204, 1
          %s4150 = smul.addr %s4149, 40
          %s4151 = scalar_lea.vmem [#allocation2], %s4150
          %4152 = dma.done %s4148, 640
        $region64: #{tpu_custom_call.1} parent=59 // pred_fallthru
          _
      $region60: #{tpu_custom_call.1} parent=5 // pred_fallthru
        _
    $region6: #{tpu_custom_call.1} parent=1 // loop_footer
      %s21 = sadd.s32 1, %s17
    $region7: #{tpu_custom_call.1} parent=1 // loop_footer_branch
      %16 = sbr.rel target = $region3
    $region8: #{tpu_custom_call.1} parent=1 // loop_exit
      _
    %4153 = vsyncpa [#allocation3], 1
    %s4154 = scalar_lea.sflag [#allocation3], 1
    %4155 = vsyncpa %s4154, 1

</llo_original>
